<compile_context>
chip_gen: v6e
topology: v6e:2x2x1
jax: 0.10.0
libtpu: 0.0.40
codegen_flags: <defaults>
</compile_context>

<pallas_src>
import jax
import jax.numpy as jnp
from jax.experimental import pallas as pl
from jax.experimental.pallas import tpu as pltpu

# ---------------------------------------------------------------------------
# Geometry.  The 16*5*5 flatten in the PyTorch module forces 32x32 inputs.
# ---------------------------------------------------------------------------
KS = 5                 # conv kernel size
H0, W0 = 32, 32        # input spatial size
C1, C2 = 6, 16         # conv1 / conv2 output channels
H1P, W1P = 40, 32      # conv1 rows/cols computed per image (valid region 28x28)
                       #   H1P is a mult. of 8 and >= 33 so pool1 keeps >=32 rows
H_IN = H1P + KS - 1    # 44 : input rows after zero-padding H
W_IN = W1P + KS - 1    # 36 : input cols after zero-padding W
H2P = 24               # conv2 rows computed (valid h2 = r/2 at even rows 0..18)
P1W, W2P = 14, 10      # pool1 width (compact) and conv2 output width
LOUT = 256             # conv output lane width: lane = (w%2)*128 + (w//2)*C + co
K2 = 128               # conv2 contraction width (pool1 lanes 6*u + ci, valid 0..83)
FCK = KS * 128         # fc1 contraction width (5 pooled rows x 128 lanes)
NPAD = 128             # FC lane padding -> lane-dense matmuls & output store
TB = 8                 # images per grid step


# ---------------------------------------------------------------------------
# Fused forward kernel: conv1 -> pool -> conv2 -> pool -> fc1 -> fc2 -> fc3
# ---------------------------------------------------------------------------
def _cnn_kernel(x_ref, t1_ref, b1_ref, t2_ref, b2_ref, w3_ref, b3_ref,
                w4_ref, b4_ref, w5_ref, b5_ref, o_ref, fcin_ref):
    f32, bf16 = jnp.float32, jnp.bfloat16
    lin = x_ref.shape[2]                      # W_IN * cin

    # ---- conv1: 5 banded-Toeplitz MXU matmuls (one per kernel row).  Each
    # LHS row (b, h) is a full padded input row (lane = w*cin + ci); t1[i]
    # maps it to every output column at once, so the 5x5xcin reduction is a
    # K = W_IN*cin contraction instead of 25 K=cin dots. ----
    def lhs1(i):
        return x_ref[:, i:i + H1P, :].reshape(TB * H1P, lin).astype(bf16)

    acc1 = jnp.dot(lhs1(0), t1_ref[0], preferred_element_type=f32)
    for i in range(1, KS):
        acc1 = acc1 + jnp.dot(lhs1(i), t1_ref[i], preferred_element_type=f32)
    act1 = jnp.maximum(acc1 + b1_ref[...], 0.0).reshape(TB, H1P, LOUT)
    # act1 lane = (w1%2)*128 + (w1//2)*6 + co  (valid w1 in 0..27)

    # ---- maxpool 2x2 #1.  The W pair (2u, 2u+1) sits in the two 128-lane
    # halves (parity layout) -> the W-max is a tile-aligned 128-lane max.
    # H stays interleaved: pooled row p lives at physical row 2p. ----
    q1 = jnp.maximum(
        jnp.maximum(act1[:, 0:H1P - 1, 0:K2], act1[:, 0:H1P - 1, K2:LOUT]),
        jnp.maximum(act1[:, 1:H1P, 0:K2], act1[:, 1:H1P, K2:LOUT]))
    # q1: (TB, 39, 128); pool1[p, u, ci] = q1[:, 2p, 6u + ci]

    # ---- conv2: same banded-Toeplitz trick on the H-interleaved pool1. ----
    def lhs2(i):
        return q1[:, 2 * i:2 * i + H2P, :].reshape(TB * H2P, K2).astype(bf16)

    acc2 = jnp.dot(lhs2(0), t2_ref[0], preferred_element_type=f32)
    for i in range(1, KS):
        acc2 = acc2 + jnp.dot(lhs2(i), t2_ref[i], preferred_element_type=f32)
    act2 = jnp.maximum(acc2 + b2_ref[...], 0.0).reshape(TB, H2P, LOUT)
    # act2: valid h2 at even rows 2*h2, lane = (w2%2)*128 + (w2//2)*16 + co

    # ---- maxpool 2x2 #2 + flatten: W-max across the two lane halves, H-max
    # across rows (4p, 4p+2); the 5 pooled rows are packed into a (TB, 640)
    # VMEM scratch at 128-aligned lane offsets so fc1 becomes ONE matmul. ----
    hm2 = jnp.maximum(act2[:, :, 0:128], act2[:, :, 128:LOUT])   # (TB, 24, 128)
    for p in range(KS):
        fcin_ref[:, 128 * p:128 * (p + 1)] = jnp.maximum(
            hm2[:, 4 * p, :], hm2[:, 4 * p + 2, :])

    # ---- fc1 -> fc2 -> fc3, all lane-padded to 128 (lane-dense store). ----
    h1 = jnp.maximum(
        jnp.dot(fcin_ref[...].astype(bf16), w3_ref[...],
                preferred_element_type=f32) + b3_ref[...], 0.0)
    h2 = jnp.maximum(
        jnp.dot(h1.astype(bf16), w4_ref[...],
                preferred_element_type=f32) + b4_ref[...], 0.0)
    o_ref[...] = (jnp.dot(h2.astype(bf16), w5_ref[...],
                          preferred_element_type=f32) + b5_ref[...])


# ---------------------------------------------------------------------------
# Host-side weight transforms (run once per call, O(weights)).
# ---------------------------------------------------------------------------
def _conv_toeplitz(w_oihw, in_w, out_w):
    """Banded matrix T of shape (KS, in_w*cin, 256) such that for kernel row i
       (row @ T[i])[(wo%2)*128 + (wo//2)*cout + co]
           = sum_{j,ci} row[(wo+j)*cin + ci] * w[co, ci, i, j]."""
    cout, cin = w_oihw.shape[0], w_oihw.shape[1]
    w_hwio = jnp.transpose(w_oihw, (2, 3, 1, 0)).astype(jnp.float32)
    iw = jnp.arange(in_w)[None, :, None]
    ow = jnp.arange(out_w)[None, None, :]
    js = jnp.arange(KS)[:, None, None]
    band = (iw == ow + js).astype(jnp.float32)                # (KS, in_w, out_w)
    t = jnp.einsum("jvw,ijco->ivcwo", band, w_hwio)           # (KS,in_w,cin,out_w,cout)
    t = t.reshape(KS, in_w * cin, out_w // 2, 2, cout)        # wo = 2*q + parity
    t = jnp.transpose(t, (0, 1, 3, 2, 4))                     # (KS, v, parity, q, co)
    half = (out_w // 2) * cout
    t = t.reshape(KS, in_w * cin, 2, half)
    t = jnp.pad(t, ((0, 0), (0, 0), (0, 0), (0, 128 - half)))
    return t.reshape(KS, in_w * cin, LOUT)


def _bias_lanes(b, out_w):
    """Broadcast a per-channel conv bias onto the parity-split lane layout."""
    half = jnp.pad(jnp.tile(b.astype(jnp.float32), out_w // 2),
                   (0, 128 - (out_w // 2) * b.shape[0]))
    return jnp.concatenate([half, half]).reshape(1, LOUT)


def _full_spec(shape):
    zero = (0,) * len(shape)
    return pl.BlockSpec(shape, lambda b: zero)


@jax.jit
def cnn_cifar_forward(x, p):
    """x: (N, C_in, 32, 32) float32, NCHW (PyTorch layout)."""
    n, cin, h_in, w_in = x.shape
    if (h_in, w_in) != (H0, W0):
        raise ValueError("CNNCifar requires 32x32 inputs (16*5*5 flatten).")
    f1 = p["fc1_b"].shape[0]          # 120
    f2 = p["fc2_b"].shape[0]          # 84
    num_out = p["fc3_b"].shape[0]
    assert f1 <= NPAD and f2 <= NPAD and num_out <= NPAD

    # Input prep: NCHW -> (N, H, W*cin), zero-padded to 44 x 36 and to a batch
    # multiple of TB.  Cheap (one fused pad/transpose of the input).
    npad = -(-n // TB) * TB
    xt = jnp.transpose(x, (0, 2, 3, 1)).astype(jnp.float32)
    xt = jnp.pad(xt, ((0, npad - n), (0, H_IN - H0), (0, W_IN - W0), (0, 0)))
    xt = xt.reshape(npad, H_IN, W_IN * cin)

    # Conv weights -> banded Toeplitz matrices (parity-split output lanes).
    t1 = _conv_toeplitz(p["conv1_w"], W_IN, W1P).astype(jnp.bfloat16)
    t2 = _conv_toeplitz(p["conv2_w"], P1W, W2P)
    t2 = jnp.pad(t2, ((0, 0), (0, K2 - t2.shape[1]), (0, 0))).astype(jnp.bfloat16)
    b1 = _bias_lanes(p["conv1_b"], W1P)
    b2 = _bias_lanes(p["conv2_b"], W2P)

    # fc1: PyTorch flatten order is (co, p2, u2); regroup rows to match the
    # kernel's packing (pooled-row chunk p2, lane u2*16 + co), zero-pad to 640.
    w3 = p["fc1_w"].reshape(C2, KS, KS, f1).transpose(1, 2, 0, 3)   # (p2,u2,co,f)
    w3 = w3.reshape(KS, KS * C2, f1)
    w3 = jnp.pad(w3, ((0, 0), (0, 128 - KS * C2), (0, NPAD - f1)))
    w3 = w3.reshape(FCK, NPAD).astype(jnp.bfloat16)
    b3 = jnp.pad(p["fc1_b"], (0, NPAD - f1)).reshape(1, NPAD).astype(jnp.float32)
    w4 = jnp.pad(p["fc2_w"], ((0, NPAD - f1), (0, NPAD - f2))).astype(jnp.bfloat16)
    b4 = jnp.pad(p["fc2_b"], (0, NPAD - f2)).reshape(1, NPAD).astype(jnp.float32)
    w5 = jnp.pad(p["fc3_w"],
                 ((0, NPAD - f2), (0, NPAD - num_out))).astype(jnp.bfloat16)
    b5 = jnp.pad(p["fc3_b"], (0, NPAD - num_out)).reshape(1, NPAD).astype(jnp.float32)

    flops = 2 * npad * (KS * H1P * W_IN * cin * LOUT + KS * H2P * K2 * LOUT
                        + FCK * NPAD + 2 * NPAD * NPAD)
    bytes_accessed = (4 * npad * (H_IN * W_IN * cin + NPAD)
                      + 2 * (t1.size + t2.size + w3.size + w4.size + w5.size)
                      + 4 * (b1.size + b2.size + b3.size + b4.size + b5.size))

    out = pl.pallas_call(
        _cnn_kernel,
        out_shape=jax.ShapeDtypeStruct((npad, NPAD), jnp.float32),
        grid=(npad // TB,),
        in_specs=[
            pl.BlockSpec((TB, H_IN, W_IN * cin), lambda b: (b, 0, 0)),
            _full_spec(t1.shape), _full_spec(b1.shape),
            _full_spec(t2.shape), _full_spec(b2.shape),
            _full_spec(w3.shape), _full_spec(b3.shape),
            _full_spec(w4.shape), _full_spec(b4.shape),
            _full_spec(w5.shape), _full_spec(b5.shape),
        ],
        out_specs=pl.BlockSpec((TB, NPAD), lambda b: (b, 0)),
        scratch_shapes=[pltpu.VMEM((TB, FCK), jnp.float32)],
        compiler_params=pltpu.CompilerParams(
            dimension_semantics=("parallel",)),
        cost_estimate=pl.CostEstimate(
            flops=flops, transcendentals=0, bytes_accessed=bytes_accessed),
    )(xt, t1, b1, t2, b2, w3, b3, w4, b4, w5, b5)

    return out[:n, :num_out]


# ---------------------------------------------------------------------------
# Pure-JAX reference (correctness check only) and parameter init.
# ---------------------------------------------------------------------------
def reference_forward(x, p):
    hp = jax.lax.Precision.HIGHEST

    def conv(x, w, b):
        y = jax.lax.conv_general_dilated(
            x, w, window_strides=(1, 1), padding="VALID",
            dimension_numbers=("NCHW", "OIHW", "NCHW"), precision=hp)
        return y + b[None, :, None, None]

    def pool(x):
        return jax.lax.reduce_window(
            x, -jnp.inf, jax.lax.max, (1, 1, 2, 2), (1, 1, 2, 2), "VALID")

    x = pool(jax.nn.relu(conv(x, p["conv1_w"], p["conv1_b"])))
    x = pool(jax.nn.relu(conv(x, p["conv2_w"], p["conv2_b"])))
    x = x.reshape(x.shape[0], -1)
    x = jax.nn.relu(jnp.dot(x, p["fc1_w"], precision=hp) + p["fc1_b"])
    x = jax.nn.relu(jnp.dot(x, p["fc2_w"], precision=hp) + p["fc2_b"])
    x = jnp.dot(x, p["fc3_w"], precision=hp) + p["fc3_b"]
    return x


def init_params(key, input_channels, output_channels):
    ks = jax.random.split(key, 10)
    n = lambda k, shape, s: jax.random.normal(k, shape, jnp.float32) * s
    return {
        "conv1_w": n(ks[0], (6, input_channels, 5, 5), 0.1),
        "conv1_b": n(ks[1], (6,), 0.1),
        "conv2_w": n(ks[2], (16, 6, 5, 5), 0.1),
        "conv2_b": n(ks[3], (16,), 0.1),
        "fc1_w": n(ks[4], (16 * 5 * 5, 120), 0.05),
        "fc1_b": n(ks[5], (120,), 0.05),
        "fc2_w": n(ks[6], (120, 84), 0.05),
        "fc2_b": n(ks[7], (84,), 0.05),
        "fc3_w": n(ks[8], (84, output_channels), 0.05),
        "fc3_b": n(ks[9], (84 * 0 + output_channels,), 0.05),
    }


if __name__ == "__main__":
    # 32x32 inputs are forced by the 16*5*5 flatten.  batch=16 with TB=8 gives
    # a 2-step batch grid (exercises v7x megacore sharding + batch padding).
    batch, input_channels, output_channels = 16, 3, 10

    key = jax.random.PRNGKey(0)
    k_x, k_p = jax.random.split(key)
    x = jax.random.normal(k_x, (batch, input_channels, 32, 32), jnp.float32)
    params = init_params(k_p, input_channels, output_channels)

    out = jax.block_until_ready(cnn_cifar_forward(x, params))
    assert out.shape == (batch, output_channels), out.shape

    ref = jax.block_until_ready(reference_forward(x, params))
    max_err = float(jnp.max(jnp.abs(out - ref)))
    # bf16 matmul operands with f32 accumulation through 5 chained layers vs a
    # float32 HIGHEST-precision reference -> relaxed tolerance (err ~1e-2).
    assert jnp.allclose(out, ref, atol=5e-2, rtol=5e-2), max_err

    print("KERNEL_OK")
</pallas_src>

<mosaic_0001>
module attributes {stable_mosaic.version = 11 : i64} {
  func.func @_cnn_kernel(%arg0: i32, %arg1: memref<8x44x108xf32, #tpu.memory_space<vmem>>, %arg2: memref<5x108x256xbf16, #tpu.memory_space<vmem>>, %arg3: memref<1x256xf32, #tpu.memory_space<vmem>>, %arg4: memref<5x128x256xbf16, #tpu.memory_space<vmem>>, %arg5: memref<1x256xf32, #tpu.memory_space<vmem>>, %arg6: memref<640x128xbf16, #tpu.memory_space<vmem>>, %arg7: memref<1x128xf32, #tpu.memory_space<vmem>>, %arg8: memref<128x128xbf16, #tpu.memory_space<vmem>>, %arg9: memref<1x128xf32, #tpu.memory_space<vmem>>, %arg10: memref<128x128xbf16, #tpu.memory_space<vmem>>, %arg11: memref<1x128xf32, #tpu.memory_space<vmem>>, %arg12: memref<8x128xf32, #tpu.memory_space<vmem>>, %arg13: memref<8x640xf32, #tpu.memory_space<vmem>>) attributes {dimension_semantics = [#tpu.dimension_semantics<parallel>], iteration_bounds = array<i64: 2>, scalar_prefetch = 0 : i64, scratch_operands = 1 : i64, tpu.core_type = #tpu.core_type<tc>, window_params = [{transform_indices = @transform_0, window_bounds = array<i64: 8, 44, 108>}, {pipeline_mode = #tpu.pipeline_mode<synchronous>, transform_indices = @transform_1, window_bounds = array<i64: 5, 108, 256>}, {pipeline_mode = #tpu.pipeline_mode<synchronous>, transform_indices = @transform_2, window_bounds = array<i64: 1, 256>}, {pipeline_mode = #tpu.pipeline_mode<synchronous>, transform_indices = @transform_3, window_bounds = array<i64: 5, 128, 256>}, {pipeline_mode = #tpu.pipeline_mode<synchronous>, transform_indices = @transform_4, window_bounds = array<i64: 1, 256>}, {pipeline_mode = #tpu.pipeline_mode<synchronous>, transform_indices = @transform_5, window_bounds = array<i64: 640, 128>}, {pipeline_mode = #tpu.pipeline_mode<synchronous>, transform_indices = @transform_6, window_bounds = array<i64: 1, 128>}, {pipeline_mode = #tpu.pipeline_mode<synchronous>, transform_indices = @transform_7, window_bounds = array<i64: 128, 128>}, {pipeline_mode = #tpu.pipeline_mode<synchronous>, transform_indices = @transform_8, window_bounds = array<i64: 1, 128>}, {pipeline_mode = #tpu.pipeline_mode<synchronous>, transform_indices = @transform_9, window_bounds = array<i64: 128, 128>}, {pipeline_mode = #tpu.pipeline_mode<synchronous>, transform_indices = @transform_10, window_bounds = array<i64: 1, 128>}, {transform_indices = @transform_11, window_bounds = array<i64: 8, 128>}]} {
    %c0 = arith.constant 0 : index
    %c0_0 = arith.constant 0 : index
    %c0_1 = arith.constant 0 : index
    %0 = vector.load %arg1[%c0, %c0_0, %c0_1] : memref<8x44x108xf32, #tpu.memory_space<vmem>>, vector<8x40x108xf32>
    %1 = vector.shape_cast %0 : vector<8x40x108xf32> to vector<320x108xf32>
    %2 = arith.truncf %1 : vector<320x108xf32> to vector<320x108xbf16>
    %c0_2 = arith.constant 0 : index
    %c0_3 = arith.constant 0 : index
    %c0_4 = arith.constant 0 : index
    %3 = vector.load %arg2[%c0_2, %c0_3, %c0_4] : memref<5x108x256xbf16, #tpu.memory_space<vmem>>, vector<1x108x256xbf16>
    %4 = vector.shape_cast %3 : vector<1x108x256xbf16> to vector<108x256xbf16>
    %cst = arith.constant dense<0.000000e+00> : vector<320x256xf32>
    %5 = tpu.matmul %2, %4, %cst {dimension_numbers = #tpu.dot_dimension_numbers<[1], [0], [0], [1], [0, 0, 1, 1], [], []>} : vector<320x108xbf16>, vector<108x256xbf16>, vector<320x256xf32> -> vector<320x256xf32>
    %c0_5 = arith.constant 0 : index
    %c1 = arith.constant 1 : index
    %c0_6 = arith.constant 0 : index
    %6 = vector.load %arg1[%c0_5, %c1, %c0_6] : memref<8x44x108xf32, #tpu.memory_space<vmem>>, vector<8x40x108xf32>
    %7 = vector.shape_cast %6 : vector<8x40x108xf32> to vector<320x108xf32>
    %8 = arith.truncf %7 : vector<320x108xf32> to vector<320x108xbf16>
    %c1_7 = arith.constant 1 : index
    %c0_8 = arith.constant 0 : index
    %c0_9 = arith.constant 0 : index
    %9 = vector.load %arg2[%c1_7, %c0_8, %c0_9] : memref<5x108x256xbf16, #tpu.memory_space<vmem>>, vector<1x108x256xbf16>
    %10 = vector.shape_cast %9 : vector<1x108x256xbf16> to vector<108x256xbf16>
    %cst_10 = arith.constant dense<0.000000e+00> : vector<320x256xf32>
    %11 = tpu.matmul %8, %10, %cst_10 {dimension_numbers = #tpu.dot_dimension_numbers<[1], [0], [0], [1], [0, 0, 1, 1], [], []>} : vector<320x108xbf16>, vector<108x256xbf16>, vector<320x256xf32> -> vector<320x256xf32>
    %12 = arith.addf %5, %11 : vector<320x256xf32>
    %c0_11 = arith.constant 0 : index
    %c2 = arith.constant 2 : index
    %c0_12 = arith.constant 0 : index
    %13 = vector.load %arg1[%c0_11, %c2, %c0_12] : memref<8x44x108xf32, #tpu.memory_space<vmem>>, vector<8x40x108xf32>
    %14 = vector.shape_cast %13 : vector<8x40x108xf32> to vector<320x108xf32>
    %15 = arith.truncf %14 : vector<320x108xf32> to vector<320x108xbf16>
    %c2_13 = arith.constant 2 : index
    %c0_14 = arith.constant 0 : index
    %c0_15 = arith.constant 0 : index
    %16 = vector.load %arg2[%c2_13, %c0_14, %c0_15] : memref<5x108x256xbf16, #tpu.memory_space<vmem>>, vector<1x108x256xbf16>
    %17 = vector.shape_cast %16 : vector<1x108x256xbf16> to vector<108x256xbf16>
    %cst_16 = arith.constant dense<0.000000e+00> : vector<320x256xf32>
    %18 = tpu.matmul %15, %17, %cst_16 {dimension_numbers = #tpu.dot_dimension_numbers<[1], [0], [0], [1], [0, 0, 1, 1], [], []>} : vector<320x108xbf16>, vector<108x256xbf16>, vector<320x256xf32> -> vector<320x256xf32>
    %19 = arith.addf %12, %18 : vector<320x256xf32>
    %c0_17 = arith.constant 0 : index
    %c3 = arith.constant 3 : index
    %c0_18 = arith.constant 0 : index
    %20 = vector.load %arg1[%c0_17, %c3, %c0_18] : memref<8x44x108xf32, #tpu.memory_space<vmem>>, vector<8x40x108xf32>
    %21 = vector.shape_cast %20 : vector<8x40x108xf32> to vector<320x108xf32>
    %22 = arith.truncf %21 : vector<320x108xf32> to vector<320x108xbf16>
    %c3_19 = arith.constant 3 : index
    %c0_20 = arith.constant 0 : index
    %c0_21 = arith.constant 0 : index
    %23 = vector.load %arg2[%c3_19, %c0_20, %c0_21] : memref<5x108x256xbf16, #tpu.memory_space<vmem>>, vector<1x108x256xbf16>
    %24 = vector.shape_cast %23 : vector<1x108x256xbf16> to vector<108x256xbf16>
    %cst_22 = arith.constant dense<0.000000e+00> : vector<320x256xf32>
    %25 = tpu.matmul %22, %24, %cst_22 {dimension_numbers = #tpu.dot_dimension_numbers<[1], [0], [0], [1], [0, 0, 1, 1], [], []>} : vector<320x108xbf16>, vector<108x256xbf16>, vector<320x256xf32> -> vector<320x256xf32>
    %26 = arith.addf %19, %25 : vector<320x256xf32>
    %c0_23 = arith.constant 0 : index
    %c4 = arith.constant 4 : index
    %c0_24 = arith.constant 0 : index
    %27 = vector.load %arg1[%c0_23, %c4, %c0_24] : memref<8x44x108xf32, #tpu.memory_space<vmem>>, vector<8x40x108xf32>
    %28 = vector.shape_cast %27 : vector<8x40x108xf32> to vector<320x108xf32>
    %29 = arith.truncf %28 : vector<320x108xf32> to vector<320x108xbf16>
    %c4_25 = arith.constant 4 : index
    %c0_26 = arith.constant 0 : index
    %c0_27 = arith.constant 0 : index
    %30 = vector.load %arg2[%c4_25, %c0_26, %c0_27] : memref<5x108x256xbf16, #tpu.memory_space<vmem>>, vector<1x108x256xbf16>
    %31 = vector.shape_cast %30 : vector<1x108x256xbf16> to vector<108x256xbf16>
    %cst_28 = arith.constant dense<0.000000e+00> : vector<320x256xf32>
    %32 = tpu.matmul %29, %31, %cst_28 {dimension_numbers = #tpu.dot_dimension_numbers<[1], [0], [0], [1], [0, 0, 1, 1], [], []>} : vector<320x108xbf16>, vector<108x256xbf16>, vector<320x256xf32> -> vector<320x256xf32>
    %33 = arith.addf %26, %32 : vector<320x256xf32>
    %c0_29 = arith.constant 0 : index
    %c0_30 = arith.constant 0 : index
    %34 = vector.load %arg3[%c0_29, %c0_30] : memref<1x256xf32, #tpu.memory_space<vmem>>, vector<1x256xf32>
    %35 = vector.broadcast %34 : vector<1x256xf32> to vector<320x256xf32>
    %36 = arith.addf %33, %35 : vector<320x256xf32>
    %cst_31 = arith.constant 0.000000e+00 : f32
    %37 = vector.broadcast %cst_31 : f32 to vector<320x256xf32>
    %38 = arith.maximumf %36, %37 : vector<320x256xf32>
    %39 = vector.shape_cast %38 : vector<320x256xf32> to vector<8x40x256xf32>
    %40 = vector.extract_strided_slice %39 {offsets = [0, 0, 0], sizes = [8, 39, 128], strides = [1, 1, 1]} : vector<8x40x256xf32> to vector<8x39x128xf32>
    %41 = vector.extract_strided_slice %39 {offsets = [0, 0, 128], sizes = [8, 39, 128], strides = [1, 1, 1]} : vector<8x40x256xf32> to vector<8x39x128xf32>
    %42 = arith.maximumf %40, %41 : vector<8x39x128xf32>
    %43 = vector.extract_strided_slice %39 {offsets = [0, 1, 0], sizes = [8, 39, 128], strides = [1, 1, 1]} : vector<8x40x256xf32> to vector<8x39x128xf32>
    %44 = vector.extract_strided_slice %39 {offsets = [0, 1, 128], sizes = [8, 39, 128], strides = [1, 1, 1]} : vector<8x40x256xf32> to vector<8x39x128xf32>
    %45 = arith.maximumf %43, %44 : vector<8x39x128xf32>
    %46 = arith.maximumf %42, %45 : vector<8x39x128xf32>
    %47 = vector.extract_strided_slice %46 {offsets = [0, 0, 0], sizes = [8, 24, 128], strides = [1, 1, 1]} : vector<8x39x128xf32> to vector<8x24x128xf32>
    %48 = vector.shape_cast %47 : vector<8x24x128xf32> to vector<192x128xf32>
    %49 = arith.truncf %48 : vector<192x128xf32> to vector<192x128xbf16>
    %c0_32 = arith.constant 0 : index
    %c0_33 = arith.constant 0 : index
    %c0_34 = arith.constant 0 : index
    %50 = vector.load %arg4[%c0_32, %c0_33, %c0_34] : memref<5x128x256xbf16, #tpu.memory_space<vmem>>, vector<1x128x256xbf16>
    %51 = vector.shape_cast %50 : vector<1x128x256xbf16> to vector<128x256xbf16>
    %cst_35 = arith.constant dense<0.000000e+00> : vector<192x256xf32>
    %52 = tpu.matmul %49, %51, %cst_35 {dimension_numbers = #tpu.dot_dimension_numbers<[1], [0], [0], [1], [0, 0, 1, 1], [], []>} : vector<192x128xbf16>, vector<128x256xbf16>, vector<192x256xf32> -> vector<192x256xf32>
    %53 = vector.extract_strided_slice %46 {offsets = [0, 2, 0], sizes = [8, 24, 128], strides = [1, 1, 1]} : vector<8x39x128xf32> to vector<8x24x128xf32>
    %54 = vector.shape_cast %53 : vector<8x24x128xf32> to vector<192x128xf32>
    %55 = arith.truncf %54 : vector<192x128xf32> to vector<192x128xbf16>
    %c1_36 = arith.constant 1 : index
    %c0_37 = arith.constant 0 : index
    %c0_38 = arith.constant 0 : index
    %56 = vector.load %arg4[%c1_36, %c0_37, %c0_38] : memref<5x128x256xbf16, #tpu.memory_space<vmem>>, vector<1x128x256xbf16>
    %57 = vector.shape_cast %56 : vector<1x128x256xbf16> to vector<128x256xbf16>
    %cst_39 = arith.constant dense<0.000000e+00> : vector<192x256xf32>
    %58 = tpu.matmul %55, %57, %cst_39 {dimension_numbers = #tpu.dot_dimension_numbers<[1], [0], [0], [1], [0, 0, 1, 1], [], []>} : vector<192x128xbf16>, vector<128x256xbf16>, vector<192x256xf32> -> vector<192x256xf32>
    %59 = arith.addf %52, %58 : vector<192x256xf32>
    %60 = vector.extract_strided_slice %46 {offsets = [0, 4, 0], sizes = [8, 24, 128], strides = [1, 1, 1]} : vector<8x39x128xf32> to vector<8x24x128xf32>
    %61 = vector.shape_cast %60 : vector<8x24x128xf32> to vector<192x128xf32>
    %62 = arith.truncf %61 : vector<192x128xf32> to vector<192x128xbf16>
    %c2_40 = arith.constant 2 : index
    %c0_41 = arith.constant 0 : index
    %c0_42 = arith.constant 0 : index
    %63 = vector.load %arg4[%c2_40, %c0_41, %c0_42] : memref<5x128x256xbf16, #tpu.memory_space<vmem>>, vector<1x128x256xbf16>
    %64 = vector.shape_cast %63 : vector<1x128x256xbf16> to vector<128x256xbf16>
    %cst_43 = arith.constant dense<0.000000e+00> : vector<192x256xf32>
    %65 = tpu.matmul %62, %64, %cst_43 {dimension_numbers = #tpu.dot_dimension_numbers<[1], [0], [0], [1], [0, 0, 1, 1], [], []>} : vector<192x128xbf16>, vector<128x256xbf16>, vector<192x256xf32> -> vector<192x256xf32>
    %66 = arith.addf %59, %65 : vector<192x256xf32>
    %67 = vector.extract_strided_slice %46 {offsets = [0, 6, 0], sizes = [8, 24, 128], strides = [1, 1, 1]} : vector<8x39x128xf32> to vector<8x24x128xf32>
    %68 = vector.shape_cast %67 : vector<8x24x128xf32> to vector<192x128xf32>
    %69 = arith.truncf %68 : vector<192x128xf32> to vector<192x128xbf16>
    %c3_44 = arith.constant 3 : index
    %c0_45 = arith.constant 0 : index
    %c0_46 = arith.constant 0 : index
    %70 = vector.load %arg4[%c3_44, %c0_45, %c0_46] : memref<5x128x256xbf16, #tpu.memory_space<vmem>>, vector<1x128x256xbf16>
    %71 = vector.shape_cast %70 : vector<1x128x256xbf16> to vector<128x256xbf16>
    %cst_47 = arith.constant dense<0.000000e+00> : vector<192x256xf32>
    %72 = tpu.matmul %69, %71, %cst_47 {dimension_numbers = #tpu.dot_dimension_numbers<[1], [0], [0], [1], [0, 0, 1, 1], [], []>} : vector<192x128xbf16>, vector<128x256xbf16>, vector<192x256xf32> -> vector<192x256xf32>
    %73 = arith.addf %66, %72 : vector<192x256xf32>
    %74 = vector.extract_strided_slice %46 {offsets = [0, 8, 0], sizes = [8, 24, 128], strides = [1, 1, 1]} : vector<8x39x128xf32> to vector<8x24x128xf32>
    %75 = vector.shape_cast %74 : vector<8x24x128xf32> to vector<192x128xf32>
    %76 = arith.truncf %75 : vector<192x128xf32> to vector<192x128xbf16>
    %c4_48 = arith.constant 4 : index
    %c0_49 = arith.constant 0 : index
    %c0_50 = arith.constant 0 : index
    %77 = vector.load %arg4[%c4_48, %c0_49, %c0_50] : memref<5x128x256xbf16, #tpu.memory_space<vmem>>, vector<1x128x256xbf16>
    %78 = vector.shape_cast %77 : vector<1x128x256xbf16> to vector<128x256xbf16>
    %cst_51 = arith.constant dense<0.000000e+00> : vector<192x256xf32>
    %79 = tpu.matmul %76, %78, %cst_51 {dimension_numbers = #tpu.dot_dimension_numbers<[1], [0], [0], [1], [0, 0, 1, 1], [], []>} : vector<192x128xbf16>, vector<128x256xbf16>, vector<192x256xf32> -> vector<192x256xf32>
    %80 = arith.addf %73, %79 : vector<192x256xf32>
    %c0_52 = arith.constant 0 : index
    %c0_53 = arith.constant 0 : index
    %81 = vector.load %arg5[%c0_52, %c0_53] : memref<1x256xf32, #tpu.memory_space<vmem>>, vector<1x256xf32>
    %82 = vector.broadcast %81 : vector<1x256xf32> to vector<192x256xf32>
    %83 = arith.addf %80, %82 : vector<192x256xf32>
    %cst_54 = arith.constant 0.000000e+00 : f32
    %84 = vector.broadcast %cst_54 : f32 to vector<192x256xf32>
    %85 = arith.maximumf %83, %84 : vector<192x256xf32>
    %86 = vector.shape_cast %85 : vector<192x256xf32> to vector<8x24x256xf32>
    %87 = vector.extract_strided_slice %86 {offsets = [0, 0, 0], sizes = [8, 24, 128], strides = [1, 1, 1]} : vector<8x24x256xf32> to vector<8x24x128xf32>
    %88 = vector.extract_strided_slice %86 {offsets = [0, 0, 128], sizes = [8, 24, 128], strides = [1, 1, 1]} : vector<8x24x256xf32> to vector<8x24x128xf32>
    %89 = arith.maximumf %87, %88 : vector<8x24x128xf32>
    %90 = vector.extract_strided_slice %89 {offsets = [0, 0, 0], sizes = [8, 1, 128], strides = [1, 1, 1]} : vector<8x24x128xf32> to vector<8x1x128xf32>
    %91 = vector.shape_cast %90 : vector<8x1x128xf32> to vector<8x128xf32>
    %92 = vector.extract_strided_slice %89 {offsets = [0, 2, 0], sizes = [8, 1, 128], strides = [1, 1, 1]} : vector<8x24x128xf32> to vector<8x1x128xf32>
    %93 = vector.shape_cast %92 : vector<8x1x128xf32> to vector<8x128xf32>
    %94 = arith.maximumf %91, %93 : vector<8x128xf32>
    %c0_55 = arith.constant 0 : index
    %c0_56 = arith.constant 0 : index
    %95 = vector.load %arg13[%c0_55, %c0_56] : memref<8x640xf32, #tpu.memory_space<vmem>>, vector<8x128xf32>
    tpu.vector_store %arg13[%c0_55, %c0_56], %94 {strides = array<i32>} : memref<8x640xf32, #tpu.memory_space<vmem>>, vector<8x128xf32>,
    %96 = vector.extract_strided_slice %89 {offsets = [0, 4, 0], sizes = [8, 1, 128], strides = [1, 1, 1]} : vector<8x24x128xf32> to vector<8x1x128xf32>
    %97 = vector.shape_cast %96 : vector<8x1x128xf32> to vector<8x128xf32>
    %98 = vector.extract_strided_slice %89 {offsets = [0, 6, 0], sizes = [8, 1, 128], strides = [1, 1, 1]} : vector<8x24x128xf32> to vector<8x1x128xf32>
    %99 = vector.shape_cast %98 : vector<8x1x128xf32> to vector<8x128xf32>
    %100 = arith.maximumf %97, %99 : vector<8x128xf32>
    %c0_57 = arith.constant 0 : index
    %c128 = arith.constant 128 : index
    %101 = vector.load %arg13[%c0_57, %c128] : memref<8x640xf32, #tpu.memory_space<vmem>>, vector<8x128xf32>
    tpu.vector_store %arg13[%c0_57, %c128], %100 {strides = array<i32>} : memref<8x640xf32, #tpu.memory_space<vmem>>, vector<8x128xf32>,
    %102 = vector.extract_strided_slice %89 {offsets = [0, 8, 0], sizes = [8, 1, 128], strides = [1, 1, 1]} : vector<8x24x128xf32> to vector<8x1x128xf32>
    %103 = vector.shape_cast %102 : vector<8x1x128xf32> to vector<8x128xf32>
    %104 = vector.extract_strided_slice %89 {offsets = [0, 10, 0], sizes = [8, 1, 128], strides = [1, 1, 1]} : vector<8x24x128xf32> to vector<8x1x128xf32>
    %105 = vector.shape_cast %104 : vector<8x1x128xf32> to vector<8x128xf32>
    %106 = arith.maximumf %103, %105 : vector<8x128xf32>
    %c0_58 = arith.constant 0 : index
    %c256 = arith.constant 256 : index
    %107 = vector.load %arg13[%c0_58, %c256] : memref<8x640xf32, #tpu.memory_space<vmem>>, vector<8x128xf32>
    tpu.vector_store %arg13[%c0_58, %c256], %106 {strides = array<i32>} : memref<8x640xf32, #tpu.memory_space<vmem>>, vector<8x128xf32>,
    %108 = vector.extract_strided_slice %89 {offsets = [0, 12, 0], sizes = [8, 1, 128], strides = [1, 1, 1]} : vector<8x24x128xf32> to vector<8x1x128xf32>
    %109 = vector.shape_cast %108 : vector<8x1x128xf32> to vector<8x128xf32>
    %110 = vector.extract_strided_slice %89 {offsets = [0, 14, 0], sizes = [8, 1, 128], strides = [1, 1, 1]} : vector<8x24x128xf32> to vector<8x1x128xf32>
    %111 = vector.shape_cast %110 : vector<8x1x128xf32> to vector<8x128xf32>
    %112 = arith.maximumf %109, %111 : vector<8x128xf32>
    %c0_59 = arith.constant 0 : index
    %c384 = arith.constant 384 : index
    %113 = vector.load %arg13[%c0_59, %c384] : memref<8x640xf32, #tpu.memory_space<vmem>>, vector<8x128xf32>
    tpu.vector_store %arg13[%c0_59, %c384], %112 {strides = array<i32>} : memref<8x640xf32, #tpu.memory_space<vmem>>, vector<8x128xf32>,
    %114 = vector.extract_strided_slice %89 {offsets = [0, 16, 0], sizes = [8, 1, 128], strides = [1, 1, 1]} : vector<8x24x128xf32> to vector<8x1x128xf32>
    %115 = vector.shape_cast %114 : vector<8x1x128xf32> to vector<8x128xf32>
    %116 = vector.extract_strided_slice %89 {offsets = [0, 18, 0], sizes = [8, 1, 128], strides = [1, 1, 1]} : vector<8x24x128xf32> to vector<8x1x128xf32>
    %117 = vector.shape_cast %116 : vector<8x1x128xf32> to vector<8x128xf32>
    %118 = arith.maximumf %115, %117 : vector<8x128xf32>
    %c0_60 = arith.constant 0 : index
    %c512 = arith.constant 512 : index
    %119 = vector.load %arg13[%c0_60, %c512] : memref<8x640xf32, #tpu.memory_space<vmem>>, vector<8x128xf32>
    tpu.vector_store %arg13[%c0_60, %c512], %118 {strides = array<i32>} : memref<8x640xf32, #tpu.memory_space<vmem>>, vector<8x128xf32>,
    %c0_61 = arith.constant 0 : index
    %c0_62 = arith.constant 0 : index
    %120 = vector.load %arg13[%c0_61, %c0_62] : memref<8x640xf32, #tpu.memory_space<vmem>>, vector<8x640xf32>
    %121 = arith.truncf %120 : vector<8x640xf32> to vector<8x640xbf16>
    %c0_63 = arith.constant 0 : index
    %c0_64 = arith.constant 0 : index
    %122 = vector.load %arg6[%c0_63, %c0_64] : memref<640x128xbf16, #tpu.memory_space<vmem>>, vector<640x128xbf16>
    %cst_65 = arith.constant dense<0.000000e+00> : vector<8x128xf32>
    %123 = tpu.matmul %121, %122, %cst_65 {dimension_numbers = #tpu.dot_dimension_numbers<[1], [0], [0], [1], [0, 0, 1, 1], [], []>} : vector<8x640xbf16>, vector<640x128xbf16>, vector<8x128xf32> -> vector<8x128xf32>
    %c0_66 = arith.constant 0 : index
    %c0_67 = arith.constant 0 : index
    %124 = vector.load %arg7[%c0_66, %c0_67] : memref<1x128xf32, #tpu.memory_space<vmem>>, vector<1x128xf32>
    %125 = vector.broadcast %124 : vector<1x128xf32> to vector<8x128xf32>
    %126 = arith.addf %123, %125 : vector<8x128xf32>
    %cst_68 = arith.constant 0.000000e+00 : f32
    %127 = vector.broadcast %cst_68 : f32 to vector<8x128xf32>
    %128 = arith.maximumf %126, %127 : vector<8x128xf32>
    %129 = arith.truncf %128 : vector<8x128xf32> to vector<8x128xbf16>
    %c0_69 = arith.constant 0 : index
    %c0_70 = arith.constant 0 : index
    %130 = vector.load %arg8[%c0_69, %c0_70] : memref<128x128xbf16, #tpu.memory_space<vmem>>, vector<128x128xbf16>
    %cst_71 = arith.constant dense<0.000000e+00> : vector<8x128xf32>
    %131 = tpu.matmul %129, %130, %cst_71 {dimension_numbers = #tpu.dot_dimension_numbers<[1], [0], [0], [1], [0, 0, 1, 1], [], []>} : vector<8x128xbf16>, vector<128x128xbf16>, vector<8x128xf32> -> vector<8x128xf32>
    %c0_72 = arith.constant 0 : index
    %c0_73 = arith.constant 0 : index
    %132 = vector.load %arg9[%c0_72, %c0_73] : memref<1x128xf32, #tpu.memory_space<vmem>>, vector<1x128xf32>
    %133 = vector.broadcast %132 : vector<1x128xf32> to vector<8x128xf32>
    %134 = arith.addf %131, %133 : vector<8x128xf32>
    %cst_74 = arith.constant 0.000000e+00 : f32
    %135 = vector.broadcast %cst_74 : f32 to vector<8x128xf32>
    %136 = arith.maximumf %134, %135 : vector<8x128xf32>
    %137 = arith.truncf %136 : vector<8x128xf32> to vector<8x128xbf16>
    %c0_75 = arith.constant 0 : index
    %c0_76 = arith.constant 0 : index
    %138 = vector.load %arg10[%c0_75, %c0_76] : memref<128x128xbf16, #tpu.memory_space<vmem>>, vector<128x128xbf16>
    %cst_77 = arith.constant dense<0.000000e+00> : vector<8x128xf32>
    %139 = tpu.matmul %137, %138, %cst_77 {dimension_numbers = #tpu.dot_dimension_numbers<[1], [0], [0], [1], [0, 0, 1, 1], [], []>} : vector<8x128xbf16>, vector<128x128xbf16>, vector<8x128xf32> -> vector<8x128xf32>
    %c0_78 = arith.constant 0 : index
    %c0_79 = arith.constant 0 : index
    %140 = vector.load %arg11[%c0_78, %c0_79] : memref<1x128xf32, #tpu.memory_space<vmem>>, vector<1x128xf32>
    %141 = vector.broadcast %140 : vector<1x128xf32> to vector<8x128xf32>
    %142 = arith.addf %139, %141 : vector<8x128xf32>
    %c0_80 = arith.constant 0 : index
    %c0_81 = arith.constant 0 : index
    %143 = vector.load %arg12[%c0_80, %c0_81] : memref<8x128xf32, #tpu.memory_space<vmem>>, vector<8x128xf32>
    tpu.vector_store %arg12[%c0_80, %c0_81], %142 {strides = array<i32>} : memref<8x128xf32, #tpu.memory_space<vmem>>, vector<8x128xf32>,
    return
  }
  func.func @transform_0(%arg0: i32) -> (i32, i32, i32) {
    %c0_i32 = arith.constant 0 : i32
    %c0_i32_0 = arith.constant 0 : i32
    %c0_i32_1 = arith.constant 0 : i32
    return %arg0, %c0_i32, %c0_i32_0 : i32, i32, i32
  }
  func.func @transform_1(%arg0: i32) -> (i32, i32, i32) {
    %c0_i32 = arith.constant 0 : i32
    %c0_i32_0 = arith.constant 0 : i32
    %c0_i32_1 = arith.constant 0 : i32
    %c0_i32_2 = arith.constant 0 : i32
    return %c0_i32, %c0_i32_0, %c0_i32_1 : i32, i32, i32
  }
  func.func @transform_2(%arg0: i32) -> (i32, i32) {
    %c0_i32 = arith.constant 0 : i32
    %c0_i32_0 = arith.constant 0 : i32
    %c0_i32_1 = arith.constant 0 : i32
    return %c0_i32, %c0_i32_0 : i32, i32
  }
  func.func @transform_3(%arg0: i32) -> (i32, i32, i32) {
    %c0_i32 = arith.constant 0 : i32
    %c0_i32_0 = arith.constant 0 : i32
    %c0_i32_1 = arith.constant 0 : i32
    %c0_i32_2 = arith.constant 0 : i32
    return %c0_i32, %c0_i32_0, %c0_i32_1 : i32, i32, i32
  }
  func.func @transform_4(%arg0: i32) -> (i32, i32) {
    %c0_i32 = arith.constant 0 : i32
    %c0_i32_0 = arith.constant 0 : i32
    %c0_i32_1 = arith.constant 0 : i32
    return %c0_i32, %c0_i32_0 : i32, i32
  }
  func.func @transform_5(%arg0: i32) -> (i32, i32) {
    %c0_i32 = arith.constant 0 : i32
    %c0_i32_0 = arith.constant 0 : i32
    %c0_i32_1 = arith.constant 0 : i32
    return %c0_i32, %c0_i32_0 : i32, i32
  }
  func.func @transform_6(%arg0: i32) -> (i32, i32) {
    %c0_i32 = arith.constant 0 : i32
    %c0_i32_0 = arith.constant 0 : i32
    %c0_i32_1 = arith.constant 0 : i32
    return %c0_i32, %c0_i32_0 : i32, i32
  }
  func.func @transform_7(%arg0: i32) -> (i32, i32) {
    %c0_i32 = arith.constant 0 : i32
    %c0_i32_0 = arith.constant 0 : i32
    %c0_i32_1 = arith.constant 0 : i32
    return %c0_i32, %c0_i32_0 : i32, i32
  }
  func.func @transform_8(%arg0: i32) -> (i32, i32) {
    %c0_i32 = arith.constant 0 : i32
    %c0_i32_0 = arith.constant 0 : i32
    %c0_i32_1 = arith.constant 0 : i32
    return %c0_i32, %c0_i32_0 : i32, i32
  }
  func.func @transform_9(%arg0: i32) -> (i32, i32) {
    %c0_i32 = arith.constant 0 : i32
    %c0_i32_0 = arith.constant 0 : i32
    %c0_i32_1 = arith.constant 0 : i32
    return %c0_i32, %c0_i32_0 : i32, i32
  }
  func.func @transform_10(%arg0: i32) -> (i32, i32) {
    %c0_i32 = arith.constant 0 : i32
    %c0_i32_0 = arith.constant 0 : i32
    %c0_i32_1 = arith.constant 0 : i32
    return %c0_i32, %c0_i32_0 : i32, i32
  }
  func.func @transform_11(%arg0: i32) -> (i32, i32) {
    %c0_i32 = arith.constant 0 : i32
    %c0_i32_0 = arith.constant 0 : i32
    return %arg0, %c0_i32 : i32, i32
  }
}

</mosaic_0001>

<llo_original>
// kernel: tile.13
$region0: #{tile.13}
  #allocation0 [shape = 's32[1]{0}', space=sflag, size = 0x4, scoped, tag = 'scoped memory for tile.13']
  %s0 = inlined_call_operand.vmem [shape: f32[6], index: 0, kind: input, shape index: {}]
  %s1 = inlined_call_operand.vmem [shape: f32[16,6], index: 1, kind: output, shape index: {}]
  // Predicated region
  $region2: #{tile.13} parent=0 // pred_check
    _
  $region3: #{tile.13} parent=0 // pred_check_branch
    %3 = sbr.rel (0) target = $region5
  $region4: #{tile.13} parent=0 // pred_region
    _
  $region5: #{tile.13} parent=0 // pred_fallthru
    _
  %v4 = vld [vmem:[%s0] ss:$0 sm:$0xff]
  %5 = vst [vmem:[%s1] sm:$0xff] %v4
  %s6 = scalar_lea.vmem %s1, 8
  %7 = vst [vmem:[%s6] sm:$0xff] %v4

// kernel: tile.14
$region0: #{tile.14}
  %s0 = inlined_call_operand.vmem [shape: f32[16,6], index: 0, kind: input, shape index: {}]
  %s1 = inlined_call_operand.vmem [shape: f32[96], index: 1, kind: output, shape index: {}]
  $region1: #{tile.14} parent=0
    #allocation0 [shape = 'u8[4096]{0}', space=vmem, size = 0x1000, scoped, tag = 'scoped mem for output reshape']
    %v2 = vld [vmem:[%s0] sm:$0x1]
    %vm3 = vcmask 48128
    %4 = vst.msk [vmem:[#allocation0] sm:$0x1] %vm3, %v2
    %s5 = scalar_lea.vmem %s0, 15
    %v6 = vld [vmem:[%s5] sm:$0x1]
    %7 = vrot.lane.b32.xlu0 %v6, 90
    %v8 = vpop.permute.xlu0 %7
    %vm9 = vcmask 786128
    %10 = vst.msk [vmem:[#allocation0] sm:$0x1] %vm9, %v8
    %s11 = scalar_lea.vmem %s0, 14
    %v12 = vld [vmem:[%s11] sm:$0x1]
    %13 = vrot.lane.b32.xlu0 %v12, 84
    %v14 = vpop.permute.xlu0 %13
    %vm15 = vcmask 736928
    %16 = vst.msk [vmem:[#allocation0] sm:$0x1] %vm15, %v14
    %s17 = scalar_lea.vmem %s0, 13
    %v18 = vld [vmem:[%s17] sm:$0x1]
    %19 = vrot.lane.b32.xlu0 %v18, 78
    %v20 = vpop.permute.xlu0 %19
    %vm21 = vcmask 687728
    %22 = vst.msk [vmem:[#allocation0] sm:$0x1] %vm21, %v20
    %s23 = scalar_lea.vmem %s0, 12
    %v24 = vld [vmem:[%s23] sm:$0x1]
    %25 = vrot.lane.b32.xlu0 %v24, 72
    %v26 = vpop.permute.xlu0 %25
    %vm27 = vcmask 638528
    %28 = vst.msk [vmem:[#allocation0] sm:$0x1] %vm27, %v26
    %s29 = scalar_lea.vmem %s0, 11
    %v30 = vld [vmem:[%s29] sm:$0x1]
    %31 = vrot.lane.b32.xlu0 %v30, 66
    %v32 = vpop.permute.xlu0 %31
    %vm33 = vcmask 589328
    %34 = vst.msk [vmem:[#allocation0] sm:$0x1] %vm33, %v32
    %s35 = scalar_lea.vmem %s0, 10
    %v36 = vld [vmem:[%s35] sm:$0x1]
    %37 = vrot.lane.b32.xlu0 %v36, 60
    %v38 = vpop.permute.xlu0 %37
    %vm39 = vcmask 540128
    %40 = vst.msk [vmem:[#allocation0] sm:$0x1] %vm39, %v38
    %s41 = scalar_lea.vmem %s0, 9
    %v42 = vld [vmem:[%s41] sm:$0x1]
    %43 = vrot.lane.b32.xlu0 %v42, 54
    %v44 = vpop.permute.xlu0 %43
    %vm45 = vcmask 490928
    %46 = vst.msk [vmem:[#allocation0] sm:$0x1] %vm45, %v44
    %s47 = scalar_lea.vmem %s0, 8
    %v48 = vld [vmem:[%s47] sm:$0x1]
    %49 = vrot.lane.b32.xlu0 %v48, 48
    %v50 = vpop.permute.xlu0 %49
    %vm51 = vcmask 441728
    %52 = vst.msk [vmem:[#allocation0] sm:$0x1] %vm51, %v50
    %s53 = scalar_lea.vmem %s0, 7
    %v54 = vld [vmem:[%s53] sm:$0x1]
    %55 = vrot.lane.b32.xlu0 %v54, 42
    %v56 = vpop.permute.xlu0 %55
    %vm57 = vcmask 392528
    %58 = vst.msk [vmem:[#allocation0] sm:$0x1] %vm57, %v56
    %s59 = scalar_lea.vmem %s0, 6
    %v60 = vld [vmem:[%s59] sm:$0x1]
    %61 = vrot.lane.b32.xlu0 %v60, 36
    %v62 = vpop.permute.xlu0 %61
    %vm63 = vcmask 343328
    %64 = vst.msk [vmem:[#allocation0] sm:$0x1] %vm63, %v62
    %s65 = scalar_lea.vmem %s0, 5
    %v66 = vld [vmem:[%s65] sm:$0x1]
    %67 = vrot.lane.b32.xlu0 %v66, 30
    %v68 = vpop.permute.xlu0 %67
    %vm69 = vcmask 294128
    %70 = vst.msk [vmem:[#allocation0] sm:$0x1] %vm69, %v68
    %s71 = scalar_lea.vmem %s0, 4
    %v72 = vld [vmem:[%s71] sm:$0x1]
    %73 = vrot.lane.b32.xlu0 %v72, 24
    %v74 = vpop.permute.xlu0 %73
    %vm75 = vcmask 244928
    %76 = vst.msk [vmem:[#allocation0] sm:$0x1] %vm75, %v74
    %s77 = scalar_lea.vmem %s0, 3
    %v78 = vld [vmem:[%s77] sm:$0x1]
    %79 = vrot.lane.b32.xlu0 %v78, 18
    %v80 = vpop.permute.xlu0 %79
    %vm81 = vcmask 195728
    %82 = vst.msk [vmem:[#allocation0] sm:$0x1] %vm81, %v80
    %s83 = scalar_lea.vmem %s0, 2
    %v84 = vld [vmem:[%s83] sm:$0x1]
    %85 = vrot.lane.b32.xlu0 %v84, 12
    %v86 = vpop.permute.xlu0 %85
    %vm87 = vcmask 146528
    %88 = vst.msk [vmem:[#allocation0] sm:$0x1] %vm87, %v86
    %s89 = scalar_lea.vmem %s0, 1
    %v90 = vld [vmem:[%s89] sm:$0x1]
    %91 = vrot.lane.b32.xlu0 %v90, 6
    %v92 = vpop.permute.xlu0 %91
    %vm93 = vcmask 97328
    %94 = vst.msk [vmem:[#allocation0] sm:$0x1] %vm93, %v92
    %s96 = sshll.u32 1, 1
    %s97 = ssub.s32 %s96, 1
    %v99 = vld [vmem:[#allocation0] sm:%s97]
    %s100 = sshll.u32 1, 1
    %s101 = ssub.s32 %s100, 1
    %102 = vst [vmem:[%s1] sm:%s101] %v99

// kernel: tile.18
$region0: #{tile.18}
  #allocation0 [shape = 's32[1]{0}', space=sflag, size = 0x4, scoped, tag = 'scoped memory for tile.18']
  %s0 = inlined_call_operand.vmem [shape: f32[16], index: 0, kind: input, shape index: {}]
  %s1 = inlined_call_operand.vmem [shape: f32[5,16], index: 1, kind: output, shape index: {}]
  // Predicated region
  $region2: #{tile.18} parent=0 // pred_check
    _
  $region3: #{tile.18} parent=0 // pred_check_branch
    %3 = sbr.rel (0) target = $region5
  $region4: #{tile.18} parent=0 // pred_region
    _
  $region5: #{tile.18} parent=0 // pred_fallthru
    _
  %v4 = vld [vmem:[%s0] ss:$0 sm:$0xff]
  %5 = vst [vmem:[%s1] sm:$0xff] %v4

// kernel: tile.19
$region0: #{tile.19}
  %s0 = inlined_call_operand.vmem [shape: f32[5,16], index: 0, kind: input, shape index: {}]
  %s1 = inlined_call_operand.vmem [shape: f32[80], index: 1, kind: output, shape index: {}]
  $region1: #{tile.19} parent=0
    #allocation0 [shape = 'u8[4096]{0}', space=vmem, size = 0x1000, scoped, tag = 'scoped mem for output reshape']
    %v2 = vld [vmem:[%s0] sm:$0x1]
    %vm3 = vcmask 130048
    %4 = vst.msk [vmem:[#allocation0] sm:$0x1] %vm3, %v2
    %s5 = scalar_lea.vmem %s0, 4
    %v6 = vld [vmem:[%s5] sm:$0x1]
    %7 = vrot.lane.b32.xlu0 %v6, 64
    %v8 = vpop.permute.xlu0 %7
    %vm9 = vcmask 654848
    %10 = vst.msk [vmem:[#allocation0] sm:$0x1] %vm9, %v8
    %s11 = scalar_lea.vmem %s0, 3
    %v12 = vld [vmem:[%s11] sm:$0x1]
    %13 = vrot.lane.b32.xlu0 %v12, 48
    %v14 = vpop.permute.xlu0 %13
    %vm15 = vcmask 523648
    %16 = vst.msk [vmem:[#allocation0] sm:$0x1] %vm15, %v14
    %s17 = scalar_lea.vmem %s0, 2
    %v18 = vld [vmem:[%s17] sm:$0x1]
    %19 = vrot.lane.b32.xlu0 %v18, 32
    %v20 = vpop.permute.xlu0 %19
    %vm21 = vcmask 392448
    %22 = vst.msk [vmem:[#allocation0] sm:$0x1] %vm21, %v20
    %s23 = scalar_lea.vmem %s0, 1
    %v24 = vld [vmem:[%s23] sm:$0x1]
    %25 = vrot.lane.b32.xlu0 %v24, 16
    %v26 = vpop.permute.xlu0 %25
    %vm27 = vcmask 261248
    %28 = vst.msk [vmem:[#allocation0] sm:$0x1] %vm27, %v26
    %s30 = sshll.u32 1, 1
    %s31 = ssub.s32 %s30, 1
    %v33 = vld [vmem:[#allocation0] sm:%s31]
    %s34 = sshll.u32 1, 1
    %s35 = ssub.s32 %s34, 1
    %36 = vst [vmem:[%s1] sm:%s35] %v33

// kernel: cnn_cifar_forward.1
$region0: #{cnn_cifar_forward.1}
  #allocation0 [shape = 'u32[]', space=smem, size = 0x4, offset = 0x4, fixed_abs, tag = 'smem constant byte address 0x4 - core index']
  #allocation1 [shape = 'u32[144,128]{1,0:T(1,128)}', space=vmem, size = 0x12000, scoped, tag = 'internal scratch']
  #allocation2 [shape = 'f32[8,640]{1,0:T(8,128)}', space=vmem, size = 0x5000, scoped, tag = 'scratch operand']
  %s0 = inlined_call_operand.vmem [shape: f32[16,44,108], index: 0, kind: input, shape index: {}]
  %s1 = inlined_call_operand.vmem [shape: bf16[5,108,256], index: 1, kind: input, shape index: {}]
  %s2 = inlined_call_operand.vmem [shape: f32[1,256], index: 2, kind: input, shape index: {}]
  %s3 = inlined_call_operand.vmem [shape: bf16[5,128,256], index: 3, kind: input, shape index: {}]
  %s4 = inlined_call_operand.vmem [shape: f32[1,256], index: 4, kind: input, shape index: {}]
  %s5 = inlined_call_operand.vmem [shape: bf16[640,128], index: 5, kind: input, shape index: {}]
  %s6 = inlined_call_operand.vmem [shape: f32[1,128], index: 6, kind: input, shape index: {}]
  %s7 = inlined_call_operand.vmem [shape: bf16[128,128], index: 7, kind: input, shape index: {}]
  %s8 = inlined_call_operand.vmem [shape: f32[1,128], index: 8, kind: input, shape index: {}]
  %s9 = inlined_call_operand.vmem [shape: bf16[128,128], index: 9, kind: input, shape index: {}]
  %s10 = inlined_call_operand.vmem [shape: f32[1,128], index: 10, kind: input, shape index: {}]
  %s11 = inlined_call_operand.hbm [shape: f32[16,128], index: 11, kind: output, shape index: {}]
  %s12 = sld [smem:[#allocation0]]
  $region77: #{cnn_cifar_forward.1} parent=0
    _
  %s14 = ssub.s32 1, %s12
  %s15 = scalar_select 0, %s14, %s12
  $region1: #{cnn_cifar_forward.1} parent=0
    #allocation3 [shape = 'u8[8192]{0}', space=vmem, size = 0x2000, scoped, tag = 'output window, operand 0']
    #allocation4 [shape = 's32[2]{0}', space=sflag, size = 0x8, scoped, tag = 'scoped memory for cnn_cifar_forward.1']
    %16 = vsyncpa [#allocation4], 0
    %s17 = scalar_lea.sflag [#allocation4], 1
    %18 = vsyncpa %s17, 0
    loop: start=0, step=1, limit=4
    $region2: #{cnn_cifar_forward.1} parent=1 // loop_pre_header
      _
    $region3: #{cnn_cifar_forward.1} parent=1 // loop_header
      %s20 = sphi 0, %s24
      %p21 = scmp.ge.s32.totalorder %s20, 4
      %s30 = sphi 0, %s32
      %s33 = sphi 0, %s30
      %s34 = sphi 0, %s33
      %s50 = sphi 0, %s34
      %s54 = sphi 0, %s54
      %s56 = sphi 0, %s54
      %s57 = sphi 0, %s56
      %s71 = sphi 0, %s57
      %s75 = sphi 0, %s75
      %s77 = sphi 0, %s75
      %s78 = sphi 0, %s77
      %s92 = sphi 0, %s78
      %s96 = sphi 0, %s96
      %s98 = sphi 0, %s96
      %s99 = sphi 0, %s98
      %s113 = sphi 0, %s99
      %s117 = sphi 0, %s117
      %s119 = sphi 0, %s117
      %s120 = sphi 0, %s119
      %s134 = sphi 0, %s120
      %s138 = sphi 0, %s138
      %s140 = sphi 0, %s138
      %s141 = sphi 0, %s140
      %s155 = sphi 0, %s141
      %s159 = sphi 0, %s159
      %s161 = sphi 0, %s159
      %s162 = sphi 0, %s161
      %s176 = sphi 0, %s162
      %s180 = sphi 0, %s180
      %s182 = sphi 0, %s180
      %s183 = sphi 0, %s182
      %s197 = sphi 0, %s183
      %s201 = sphi 0, %s201
      %s203 = sphi 0, %s201
      %s204 = sphi 0, %s203
      %s218 = sphi 0, %s204
      %s222 = sphi 0, %s222
      %s224 = sphi 0, %s222
      %s225 = sphi 0, %s224
      %s239 = sphi 0, %s225
      %s243 = sphi 0, %s243
      %s245 = sphi 0, %s243
      %s246 = sphi 0, %s245
      %s260 = sphi 0, %s246
      %s266 = sphi 0, %s268
      %s269 = sphi 0, %s266
      %s270 = sphi 0, %s269
      %s286 = sphi 0, %s270
    $region4: #{cnn_cifar_forward.1} parent=1 // loop_header_branch
      %23 = sbr.rel (%p21) target = $region8
    $region5: #{cnn_cifar_forward.1} parent=1 // loop_body
      %s25 = ssub.s32 %s20, 1
      %s26 = ssub.s32 %s20, 2
      %s27 = sadd.s32 %s20, 1
      %s28 = ssub.s32 %s20, %s27
      %p29 = scmp.eq.s32.totalorder %s28, 0
      %s31 = sadd.s32 %s30, 1
      %s32 = scalar_select %p29, %s30, %s31
      %p35 = pneg %p29
      %p36 = scmp.eq.s32.totalorder %s20, 1
      %p37 = por %p35, %p36
      %p38 = scmp.ne.s32.totalorder %s30, %s33
      %p39 = scmp.eq.s32.totalorder %s20, 0
      %p40 = por %p38, %p39
      %p41 = scmp.ne.s32.totalorder %s30, %s33
      %p42 = scmp.eq.s32.totalorder %s25, 1
      %p43 = por %p41, %p42
      %p44 = scmp.ne.s32.totalorder %s33, %s34
      %p45 = scmp.eq.s32.totalorder %s25, 0
      %p46 = por %p44, %p45
      %p47 = scmp.ne.s32.totalorder %s33, %s34
      %p48 = scmp.eq.s32.totalorder %s26, 1
      %p49 = por %p47, %p48
      %p51 = scmp.ne.s32.totalorder %s34, %s50
      %p52 = scmp.eq.s32.totalorder %s26, 0
      %p53 = por %p51, %p52
      %s55 = sadd.s32 %s54, 1
      %p58 = scmp.eq.s32.totalorder %s20, 1
      %p59 = scmp.ne.s32.totalorder %s54, %s56
      %p60 = scmp.eq.s32.totalorder %s20, 0
      %p61 = por %p59, %p60
      %p62 = scmp.ne.s32.totalorder %s54, %s56
      %p63 = scmp.eq.s32.totalorder %s25, 1
      %p64 = por %p62, %p63
      %p65 = scmp.ne.s32.totalorder %s56, %s57
      %p66 = scmp.eq.s32.totalorder %s25, 0
      %p67 = por %p65, %p66
      %p68 = scmp.ne.s32.totalorder %s56, %s57
      %p69 = scmp.eq.s32.totalorder %s26, 1
      %p70 = por %p68, %p69
      %p72 = scmp.ne.s32.totalorder %s57, %s71
      %p73 = scmp.eq.s32.totalorder %s26, 0
      %p74 = por %p72, %p73
      %s76 = sadd.s32 %s75, 1
      %p79 = scmp.eq.s32.totalorder %s20, 1
      %p80 = scmp.ne.s32.totalorder %s75, %s77
      %p81 = scmp.eq.s32.totalorder %s20, 0
      %p82 = por %p80, %p81
      %p83 = scmp.ne.s32.totalorder %s75, %s77
      %p84 = scmp.eq.s32.totalorder %s25, 1
      %p85 = por %p83, %p84
      %p86 = scmp.ne.s32.totalorder %s77, %s78
      %p87 = scmp.eq.s32.totalorder %s25, 0
      %p88 = por %p86, %p87
      %p89 = scmp.ne.s32.totalorder %s77, %s78
      %p90 = scmp.eq.s32.totalorder %s26, 1
      %p91 = por %p89, %p90
      %p93 = scmp.ne.s32.totalorder %s78, %s92
      %p94 = scmp.eq.s32.totalorder %s26, 0
      %p95 = por %p93, %p94
      %s97 = sadd.s32 %s96, 1
      %p100 = scmp.eq.s32.totalorder %s20, 1
      %p101 = scmp.ne.s32.totalorder %s96, %s98
      %p102 = scmp.eq.s32.totalorder %s20, 0
      %p103 = por %p101, %p102
      %p104 = scmp.ne.s32.totalorder %s96, %s98
      %p105 = scmp.eq.s32.totalorder %s25, 1
      %p106 = por %p104, %p105
      %p107 = scmp.ne.s32.totalorder %s98, %s99
      %p108 = scmp.eq.s32.totalorder %s25, 0
      %p109 = por %p107, %p108
      %p110 = scmp.ne.s32.totalorder %s98, %s99
      %p111 = scmp.eq.s32.totalorder %s26, 1
      %p112 = por %p110, %p111
      %p114 = scmp.ne.s32.totalorder %s99, %s113
      %p115 = scmp.eq.s32.totalorder %s26, 0
      %p116 = por %p114, %p115
      %s118 = sadd.s32 %s117, 1
      %p121 = scmp.eq.s32.totalorder %s20, 1
      %p122 = scmp.ne.s32.totalorder %s117, %s119
      %p123 = scmp.eq.s32.totalorder %s20, 0
      %p124 = por %p122, %p123
      %p125 = scmp.ne.s32.totalorder %s117, %s119
      %p126 = scmp.eq.s32.totalorder %s25, 1
      %p127 = por %p125, %p126
      %p128 = scmp.ne.s32.totalorder %s119, %s120
      %p129 = scmp.eq.s32.totalorder %s25, 0
      %p130 = por %p128, %p129
      %p131 = scmp.ne.s32.totalorder %s119, %s120
      %p132 = scmp.eq.s32.totalorder %s26, 1
      %p133 = por %p131, %p132
      %p135 = scmp.ne.s32.totalorder %s120, %s134
      %p136 = scmp.eq.s32.totalorder %s26, 0
      %p137 = por %p135, %p136
      %s139 = sadd.s32 %s138, 1
      %p142 = scmp.eq.s32.totalorder %s20, 1
      %p143 = scmp.ne.s32.totalorder %s138, %s140
      %p144 = scmp.eq.s32.totalorder %s20, 0
      %p145 = por %p143, %p144
      %p146 = scmp.ne.s32.totalorder %s138, %s140
      %p147 = scmp.eq.s32.totalorder %s25, 1
      %p148 = por %p146, %p147
      %p149 = scmp.ne.s32.totalorder %s140, %s141
      %p150 = scmp.eq.s32.totalorder %s25, 0
      %p151 = por %p149, %p150
      %p152 = scmp.ne.s32.totalorder %s140, %s141
      %p153 = scmp.eq.s32.totalorder %s26, 1
      %p154 = por %p152, %p153
      %p156 = scmp.ne.s32.totalorder %s141, %s155
      %p157 = scmp.eq.s32.totalorder %s26, 0
      %p158 = por %p156, %p157
      %s160 = sadd.s32 %s159, 1
      %p163 = scmp.eq.s32.totalorder %s20, 1
      %p164 = scmp.ne.s32.totalorder %s159, %s161
      %p165 = scmp.eq.s32.totalorder %s20, 0
      %p166 = por %p164, %p165
      %p167 = scmp.ne.s32.totalorder %s159, %s161
      %p168 = scmp.eq.s32.totalorder %s25, 1
      %p169 = por %p167, %p168
      %p170 = scmp.ne.s32.totalorder %s161, %s162
      %p171 = scmp.eq.s32.totalorder %s25, 0
      %p172 = por %p170, %p171
      %p173 = scmp.ne.s32.totalorder %s161, %s162
      %p174 = scmp.eq.s32.totalorder %s26, 1
      %p175 = por %p173, %p174
      %p177 = scmp.ne.s32.totalorder %s162, %s176
      %p178 = scmp.eq.s32.totalorder %s26, 0
      %p179 = por %p177, %p178
      %s181 = sadd.s32 %s180, 1
      %p184 = scmp.eq.s32.totalorder %s20, 1
      %p185 = scmp.ne.s32.totalorder %s180, %s182
      %p186 = scmp.eq.s32.totalorder %s20, 0
      %p187 = por %p185, %p186
      %p188 = scmp.ne.s32.totalorder %s180, %s182
      %p189 = scmp.eq.s32.totalorder %s25, 1
      %p190 = por %p188, %p189
      %p191 = scmp.ne.s32.totalorder %s182, %s183
      %p192 = scmp.eq.s32.totalorder %s25, 0
      %p193 = por %p191, %p192
      %p194 = scmp.ne.s32.totalorder %s182, %s183
      %p195 = scmp.eq.s32.totalorder %s26, 1
      %p196 = por %p194, %p195
      %p198 = scmp.ne.s32.totalorder %s183, %s197
      %p199 = scmp.eq.s32.totalorder %s26, 0
      %p200 = por %p198, %p199
      %s202 = sadd.s32 %s201, 1
      %p205 = scmp.eq.s32.totalorder %s20, 1
      %p206 = scmp.ne.s32.totalorder %s201, %s203
      %p207 = scmp.eq.s32.totalorder %s20, 0
      %p208 = por %p206, %p207
      %p209 = scmp.ne.s32.totalorder %s201, %s203
      %p210 = scmp.eq.s32.totalorder %s25, 1
      %p211 = por %p209, %p210
      %p212 = scmp.ne.s32.totalorder %s203, %s204
      %p213 = scmp.eq.s32.totalorder %s25, 0
      %p214 = por %p212, %p213
      %p215 = scmp.ne.s32.totalorder %s203, %s204
      %p216 = scmp.eq.s32.totalorder %s26, 1
      %p217 = por %p215, %p216
      %p219 = scmp.ne.s32.totalorder %s204, %s218
      %p220 = scmp.eq.s32.totalorder %s26, 0
      %p221 = por %p219, %p220
      %s223 = sadd.s32 %s222, 1
      %p226 = scmp.eq.s32.totalorder %s20, 1
      %p227 = scmp.ne.s32.totalorder %s222, %s224
      %p228 = scmp.eq.s32.totalorder %s20, 0
      %p229 = por %p227, %p228
      %p230 = scmp.ne.s32.totalorder %s222, %s224
      %p231 = scmp.eq.s32.totalorder %s25, 1
      %p232 = por %p230, %p231
      %p233 = scmp.ne.s32.totalorder %s224, %s225
      %p234 = scmp.eq.s32.totalorder %s25, 0
      %p235 = por %p233, %p234
      %p236 = scmp.ne.s32.totalorder %s224, %s225
      %p237 = scmp.eq.s32.totalorder %s26, 1
      %p238 = por %p236, %p237
      %p240 = scmp.ne.s32.totalorder %s225, %s239
      %p241 = scmp.eq.s32.totalorder %s26, 0
      %p242 = por %p240, %p241
      %s244 = sadd.s32 %s243, 1
      %p247 = scmp.eq.s32.totalorder %s20, 1
      %p248 = scmp.ne.s32.totalorder %s243, %s245
      %p249 = scmp.eq.s32.totalorder %s20, 0
      %p250 = por %p248, %p249
      %p251 = scmp.ne.s32.totalorder %s243, %s245
      %p252 = scmp.eq.s32.totalorder %s25, 1
      %p253 = por %p251, %p252
      %p254 = scmp.ne.s32.totalorder %s245, %s246
      %p255 = scmp.eq.s32.totalorder %s25, 0
      %p256 = por %p254, %p255
      %p257 = scmp.ne.s32.totalorder %s245, %s246
      %p258 = scmp.eq.s32.totalorder %s26, 1
      %p259 = por %p257, %p258
      %p261 = scmp.ne.s32.totalorder %s246, %s260
      %p262 = scmp.eq.s32.totalorder %s26, 0
      %p263 = por %p261, %p262
      %s264 = ssub.s32 %s20, %s27
      %p265 = scmp.eq.s32.totalorder %s264, 0
      %s267 = sadd.s32 %s266, 1
      %s268 = scalar_select %p265, %s266, %s267
      %p271 = pneg %p265
      %p272 = scmp.eq.s32.totalorder %s20, 1
      %p273 = por %p271, %p272
      %p274 = scmp.ne.s32.totalorder %s266, %s269
      %p275 = scmp.eq.s32.totalorder %s20, 0
      %p276 = por %p274, %p275
      %p277 = scmp.ne.s32.totalorder %s266, %s269
      %p278 = scmp.eq.s32.totalorder %s25, 1
      %p279 = por %p277, %p278
      %p280 = scmp.ne.s32.totalorder %s269, %s270
      %p281 = scmp.eq.s32.totalorder %s25, 0
      %p282 = por %p280, %p281
      %p283 = scmp.ne.s32.totalorder %s269, %s270
      %p284 = scmp.eq.s32.totalorder %s26, 1
      %p285 = por %p283, %p284
      %p287 = scmp.ne.s32.totalorder %s270, %s286
      %p288 = scmp.eq.s32.totalorder %s26, 0
      %p289 = por %p287, %p288
      %p290 = scmp.le.s32.totalorder 1, %s20
      %p291 = scmp.lt.s32.totalorder %s20, 3
      %p292 = pnand %p290, %p291
      %p293 = pneg %p292
      // Predicated region
      $region9: #{cnn_cifar_forward.1} parent=5 // pred_check
        _
      $region10: #{cnn_cifar_forward.1} parent=5 // pred_check_branch
        %295 = sbr.rel (%p292) target = $region12
      $region11: #{cnn_cifar_forward.1} parent=5 // pred_region
        %s296 = ssub.s32 %s20, 1
        // Predicated region
        $region13: #{cnn_cifar_forward.1} parent=11 // pred_check
          %p297 = pneg %p67
        $region14: #{cnn_cifar_forward.1} parent=11 // pred_check_branch
          %299 = sbr.rel (%p297) target = $region16
        $region15: #{cnn_cifar_forward.1} parent=11 // pred_region
          _
        $region16: #{cnn_cifar_forward.1} parent=11 // pred_fallthru
          _
        // Predicated region
        $region17: #{cnn_cifar_forward.1} parent=11 // pred_check
          %p300 = pneg %p88
        $region18: #{cnn_cifar_forward.1} parent=11 // pred_check_branch
          %302 = sbr.rel (%p300) target = $region20
        $region19: #{cnn_cifar_forward.1} parent=11 // pred_region
          _
        $region20: #{cnn_cifar_forward.1} parent=11 // pred_fallthru
          _
        // Predicated region
        $region21: #{cnn_cifar_forward.1} parent=11 // pred_check
          %p303 = pneg %p109
        $region22: #{cnn_cifar_forward.1} parent=11 // pred_check_branch
          %305 = sbr.rel (%p303) target = $region24
        $region23: #{cnn_cifar_forward.1} parent=11 // pred_region
          _
        $region24: #{cnn_cifar_forward.1} parent=11 // pred_fallthru
          _
        // Predicated region
        $region25: #{cnn_cifar_forward.1} parent=11 // pred_check
          %p306 = pneg %p130
        $region26: #{cnn_cifar_forward.1} parent=11 // pred_check_branch
          %308 = sbr.rel (%p306) target = $region28
        $region27: #{cnn_cifar_forward.1} parent=11 // pred_region
          _
        $region28: #{cnn_cifar_forward.1} parent=11 // pred_fallthru
          _
        // Predicated region
        $region29: #{cnn_cifar_forward.1} parent=11 // pred_check
          %p309 = pneg %p151
        $region30: #{cnn_cifar_forward.1} parent=11 // pred_check_branch
          %311 = sbr.rel (%p309) target = $region32
        $region31: #{cnn_cifar_forward.1} parent=11 // pred_region
          _
        $region32: #{cnn_cifar_forward.1} parent=11 // pred_fallthru
          _
        // Predicated region
        $region33: #{cnn_cifar_forward.1} parent=11 // pred_check
          %p312 = pneg %p172
        $region34: #{cnn_cifar_forward.1} parent=11 // pred_check_branch
          %314 = sbr.rel (%p312) target = $region36
        $region35: #{cnn_cifar_forward.1} parent=11 // pred_region
          _
        $region36: #{cnn_cifar_forward.1} parent=11 // pred_fallthru
          _
        // Predicated region
        $region37: #{cnn_cifar_forward.1} parent=11 // pred_check
          %p315 = pneg %p193
        $region38: #{cnn_cifar_forward.1} parent=11 // pred_check_branch
          %317 = sbr.rel (%p315) target = $region40
        $region39: #{cnn_cifar_forward.1} parent=11 // pred_region
          _
        $region40: #{cnn_cifar_forward.1} parent=11 // pred_fallthru
          _
        // Predicated region
        $region41: #{cnn_cifar_forward.1} parent=11 // pred_check
          %p318 = pneg %p214
        $region42: #{cnn_cifar_forward.1} parent=11 // pred_check_branch
          %320 = sbr.rel (%p318) target = $region44
        $region43: #{cnn_cifar_forward.1} parent=11 // pred_region
          _
        $region44: #{cnn_cifar_forward.1} parent=11 // pred_fallthru
          _
        // Predicated region
        $region45: #{cnn_cifar_forward.1} parent=11 // pred_check
          %p321 = pneg %p235
        $region46: #{cnn_cifar_forward.1} parent=11 // pred_check_branch
          %323 = sbr.rel (%p321) target = $region48
        $region47: #{cnn_cifar_forward.1} parent=11 // pred_region
          _
        $region48: #{cnn_cifar_forward.1} parent=11 // pred_fallthru
          _
        // Predicated region
        $region49: #{cnn_cifar_forward.1} parent=11 // pred_check
          %p324 = pneg %p256
        $region50: #{cnn_cifar_forward.1} parent=11 // pred_check_branch
          %326 = sbr.rel (%p324) target = $region52
        $region51: #{cnn_cifar_forward.1} parent=11 // pred_region
          _
        $region52: #{cnn_cifar_forward.1} parent=11 // pred_fallthru
          _
      $region12: #{cnn_cifar_forward.1} parent=5 // pred_fallthru
        _
      %p327 = scmp.lt.s32.totalorder %s20, 2
      // Predicated region
      $region53: #{cnn_cifar_forward.1} parent=5 // pred_check
        %p328 = pneg %p327
      $region54: #{cnn_cifar_forward.1} parent=5 // pred_check_branch
        %330 = sbr.rel (%p328) target = $region56
      $region55: #{cnn_cifar_forward.1} parent=5 // pred_region
        // Predicated region
        $region57: #{cnn_cifar_forward.1} parent=55 // pred_check
          %p331 = pneg %p40
        $region58: #{cnn_cifar_forward.1} parent=55 // pred_check_branch
          %333 = sbr.rel (%p331) target = $region60
        $region59: #{cnn_cifar_forward.1} parent=55 // pred_region
          %s334 = smul.u32 8, %s20
          %p335 = scmp.lt.s32.totalorder %s334, 15
          %s336 = scalar_select %p335, %s334, 15
          %s337 = smul.addr %s336, 6
          %s338 = smul.addr %s337, 8
          %s339 = scalar_lea.vmem %s0, %s338
          %s340 = smul.u32 8, %s20
        $region60: #{cnn_cifar_forward.1} parent=55 // pred_fallthru
          _
      $region56: #{cnn_cifar_forward.1} parent=5 // pred_fallthru
        _
      %p341 = scmp.le.s32.totalorder 1, %s20
      %p342 = scmp.lt.s32.totalorder %s20, 3
      %p343 = pnand %p341, %p342
      %p344 = pneg %p343
      // Predicated region
      $region61: #{cnn_cifar_forward.1} parent=5 // pred_check
        _
      $region62: #{cnn_cifar_forward.1} parent=5 // pred_check_branch
        %346 = sbr.rel (%p343) target = $region64
      $region63: #{cnn_cifar_forward.1} parent=5 // pred_region
        %s347 = ssub.s32 %s20, 1
        %s348 = smul.u32 8, %s25
        %p349 = scmp.lt.s32.totalorder %s348, 15
        %s350 = scalar_select %p349, %s348, 15
        %s351 = smul.addr %s350, 6
        %s352 = smul.addr %s351, 8
        %s353 = scalar_lea.vmem %s0, %s352
        %p354 = pneg %p46
        %p355 = pneg %p43
        %p356 = pneg %p67
        %p357 = pneg %p64
        %p358 = pneg %p88
        %p359 = pneg %p85
        %p360 = pneg %p109
        %p361 = pneg %p106
        %p362 = pneg %p130
        %p363 = pneg %p127
        %p364 = pneg %p151
        %p365 = pneg %p148
        %p366 = pneg %p172
        %p367 = pneg %p169
        %p368 = pneg %p193
        %p369 = pneg %p190
        %p370 = pneg %p214
        %p371 = pneg %p211
        %p372 = pneg %p235
        %p373 = pneg %p232
        %p374 = pneg %p256
        %p375 = pneg %p253
        %p376 = pneg %p282
        %p377 = pneg %p279
        %s378 = sand.u32 %s269, 1
        %s379 = scalar_lea.sflag [#allocation4], %s378
        %s380 = sand.u32 %s269, 1
        %s381 = smul.addr %s380, 8
        %s382 = scalar_lea.vmem [#allocation3], %s381
        %s383 = smul.u32 8, %s25
        %p384 = scmp.lt.s32.totalorder %s383, 15
        %s385 = scalar_select %p384, %s383, 15
        %s386 = smul.addr %s385, 6
        %s387 = smul.addr %s386, 8
        %s388 = scalar_lea.vmem %s0, %s387
        %s389 = smul.u32 8, %s25
        %v391 = vld [vmem:[%s388] sm:$0xff]
        %v392 = vld [vmem:[%s388 + $0x8] sm:$0xff]
        %v393 = vld [vmem:[%s388 + $0x10] sm:$0xff]
        %v394 = vld [vmem:[%s388 + $0x18] sm:$0xff]
        %v395 = vld [vmem:[%s388 + $0x20] sm:$0xff]
        %v396 = vld [vmem:[%s388 + $0x30] sm:$0xff]
        %v397 = vld [vmem:[%s388 + $0x38] sm:$0xff]
        %v398 = vld [vmem:[%s388 + $0x40] sm:$0xff]
        %v399 = vld [vmem:[%s388 + $0x48] sm:$0xff]
        %v400 = vld [vmem:[%s388 + $0x50] sm:$0xff]
        %v401 = vld [vmem:[%s388 + $0x60] sm:$0xff]
        %v402 = vld [vmem:[%s388 + $0x68] sm:$0xff]
        %v403 = vld [vmem:[%s388 + $0x70] sm:$0xff]
        %v404 = vld [vmem:[%s388 + $0x78] sm:$0xff]
        %v405 = vld [vmem:[%s388 + $0x80] sm:$0xff]
        %v406 = vld [vmem:[%s388 + $0x90] sm:$0xff]
        %v407 = vld [vmem:[%s388 + $0x98] sm:$0xff]
        %v408 = vld [vmem:[%s388 + $0xa0] sm:$0xff]
        %v409 = vld [vmem:[%s388 + $0xa8] sm:$0xff]
        %v410 = vld [vmem:[%s388 + $0xb0] sm:$0xff]
        %v411 = vld [vmem:[%s388 + $0xc0] sm:$0xff]
        %v412 = vld [vmem:[%s388 + $0xc8] sm:$0xff]
        %v413 = vld [vmem:[%s388 + $0xd0] sm:$0xff]
        %v414 = vld [vmem:[%s388 + $0xd8] sm:$0xff]
        %v415 = vld [vmem:[%s388 + $0xe0] sm:$0xff]
        %v416 = vld [vmem:[%s388 + $0xf0] sm:$0xff]
        %v417 = vld [vmem:[%s388 + $0xf8] sm:$0xff]
        %v418 = vld [vmem:[%s388 + $0x100] sm:$0xff]
        %v419 = vld [vmem:[%s388 + $0x108] sm:$0xff]
        %v420 = vld [vmem:[%s388 + $0x110] sm:$0xff]
        %v421 = vld [vmem:[%s388 + $0x120] sm:$0xff]
        %v422 = vld [vmem:[%s388 + $0x128] sm:$0xff]
        %v423 = vld [vmem:[%s388 + $0x130] sm:$0xff]
        %v424 = vld [vmem:[%s388 + $0x138] sm:$0xff]
        %v425 = vld [vmem:[%s388 + $0x140] sm:$0xff]
        %v426 = vld [vmem:[%s388 + $0x150] sm:$0xff]
        %v427 = vld [vmem:[%s388 + $0x158] sm:$0xff]
        %v428 = vld [vmem:[%s388 + $0x160] sm:$0xff]
        %v429 = vld [vmem:[%s388 + $0x168] sm:$0xff]
        %v430 = vld [vmem:[%s388 + $0x170] sm:$0xff]
        %v431 = vpack.c.bf16 %v392, %v391
        %v432 = vpack.c.bf16 %v394, %v393
        %v433 = vpack.c.bf16 %v396, %v395
        %v434 = vpack.c.bf16 %v398, %v397
        %v435 = vpack.c.bf16 %v400, %v399
        %v436 = vpack.c.bf16 %v402, %v401
        %v437 = vpack.c.bf16 %v404, %v403
        %v438 = vpack.c.bf16 %v406, %v405
        %v439 = vpack.c.bf16 %v408, %v407
        %v440 = vpack.c.bf16 %v410, %v409
        %v441 = vpack.c.bf16 %v412, %v411
        %v442 = vpack.c.bf16 %v414, %v413
        %v443 = vpack.c.bf16 %v416, %v415
        %v444 = vpack.c.bf16 %v418, %v417
        %v445 = vpack.c.bf16 %v420, %v419
        %v446 = vpack.c.bf16 %v422, %v421
        %v447 = vpack.c.bf16 %v424, %v423
        %v448 = vpack.c.bf16 %v426, %v425
        %v449 = vpack.c.bf16 %v428, %v427
        %v450 = vpack.c.bf16 %v430, %v429
        %v451 = vld [vmem:[%s1] sm:$0xff]
        %v452 = vld [vmem:[%s1 + $0x8] sm:$0xff]
        %v453 = vld [vmem:[%s1 + $0x10] sm:$0xff]
        %v454 = vld [vmem:[%s1 + $0x18] sm:$0xff]
        %v455 = vld [vmem:[%s1 + $0x20] sm:$0xff]
        %v456 = vld [vmem:[%s1 + $0x28] sm:$0xff]
        %v457 = vld [vmem:[%s1 + $0x30] sm:$0xff]
        %v458 = vld [vmem:[%s1 + $0x38] sm:$0xff]
        %v459 = vld [vmem:[%s1 + $0x40] sm:$0xff]
        %v460 = vld [vmem:[%s1 + $0x48] sm:$0xff]
        %v461 = vld [vmem:[%s1 + $0x50] sm:$0xff]
        %v462 = vld [vmem:[%s1 + $0x58] sm:$0xff]
        %v463 = vld [vmem:[%s1 + $0x60] sm:$0xff]
        %v464 = vld [vmem:[%s1 + $0x68] sm:$0x33]
        %v465 = vld [vmem:[%s388 + $0x1] sm:$0xff]
        %v466 = vld [vmem:[%s388 + $0x9] sm:$0xff]
        %v467 = vld [vmem:[%s388 + $0x11] sm:$0xff]
        %v468 = vld [vmem:[%s388 + $0x19] sm:$0xff]
        %v469 = vld [vmem:[%s388 + $0x21] sm:$0xff]
        %v470 = vld [vmem:[%s388 + $0x31] sm:$0xff]
        %v471 = vld [vmem:[%s388 + $0x39] sm:$0xff]
        %v472 = vld [vmem:[%s388 + $0x41] sm:$0xff]
        %v473 = vld [vmem:[%s388 + $0x49] sm:$0xff]
        %v474 = vld [vmem:[%s388 + $0x51] sm:$0xff]
        %v475 = vld [vmem:[%s388 + $0x61] sm:$0xff]
        %v476 = vld [vmem:[%s388 + $0x69] sm:$0xff]
        %v477 = vld [vmem:[%s388 + $0x71] sm:$0xff]
        %v478 = vld [vmem:[%s388 + $0x79] sm:$0xff]
        %v479 = vld [vmem:[%s388 + $0x81] sm:$0xff]
        %v480 = vld [vmem:[%s388 + $0x91] sm:$0xff]
        %v481 = vld [vmem:[%s388 + $0x99] sm:$0xff]
        %v482 = vld [vmem:[%s388 + $0xa1] sm:$0xff]
        %v483 = vld [vmem:[%s388 + $0xa9] sm:$0xff]
        %v484 = vld [vmem:[%s388 + $0xb1] sm:$0xff]
        %v485 = vld [vmem:[%s388 + $0xc1] sm:$0xff]
        %v486 = vld [vmem:[%s388 + $0xc9] sm:$0xff]
        %v487 = vld [vmem:[%s388 + $0xd1] sm:$0xff]
        %v488 = vld [vmem:[%s388 + $0xd9] sm:$0xff]
        %v489 = vld [vmem:[%s388 + $0xe1] sm:$0xff]
        %v490 = vld [vmem:[%s388 + $0xf1] sm:$0xff]
        %v491 = vld [vmem:[%s388 + $0xf9] sm:$0xff]
        %v492 = vld [vmem:[%s388 + $0x101] sm:$0xff]
        %v493 = vld [vmem:[%s388 + $0x109] sm:$0xff]
        %v494 = vld [vmem:[%s388 + $0x111] sm:$0xff]
        %v495 = vld [vmem:[%s388 + $0x121] sm:$0xff]
        %v496 = vld [vmem:[%s388 + $0x129] sm:$0xff]
        %v497 = vld [vmem:[%s388 + $0x131] sm:$0xff]
        %v498 = vld [vmem:[%s388 + $0x139] sm:$0xff]
        %v499 = vld [vmem:[%s388 + $0x141] sm:$0xff]
        %v500 = vld [vmem:[%s388 + $0x151] sm:$0xff]
        %v501 = vld [vmem:[%s388 + $0x159] sm:$0xff]
        %v502 = vld [vmem:[%s388 + $0x161] sm:$0xff]
        %v503 = vld [vmem:[%s388 + $0x169] sm:$0xff]
        %v504 = vld [vmem:[%s388 + $0x171] sm:$0xff]
        %v505 = vpack.c.bf16 %v466, %v465
        %v506 = vpack.c.bf16 %v468, %v467
        %v507 = vpack.c.bf16 %v470, %v469
        %v508 = vpack.c.bf16 %v472, %v471
        %v509 = vpack.c.bf16 %v474, %v473
        %v510 = vpack.c.bf16 %v476, %v475
        %v511 = vpack.c.bf16 %v478, %v477
        %v512 = vpack.c.bf16 %v480, %v479
        %v513 = vpack.c.bf16 %v482, %v481
        %v514 = vpack.c.bf16 %v484, %v483
        %v515 = vpack.c.bf16 %v486, %v485
        %v516 = vpack.c.bf16 %v488, %v487
        %v517 = vpack.c.bf16 %v490, %v489
        %v518 = vpack.c.bf16 %v492, %v491
        %v519 = vpack.c.bf16 %v494, %v493
        %v520 = vpack.c.bf16 %v496, %v495
        %v521 = vpack.c.bf16 %v498, %v497
        %v522 = vpack.c.bf16 %v500, %v499
        %v523 = vpack.c.bf16 %v502, %v501
        %v524 = vpack.c.bf16 %v504, %v503
        %s525 = scalar_lea.vmem %s1, 112
        %v526 = vld [vmem:[%s525] sm:$0xff]
        %v527 = vld [vmem:[%s525 + $0x8] sm:$0xff]
        %v528 = vld [vmem:[%s525 + $0x10] sm:$0xff]
        %v529 = vld [vmem:[%s525 + $0x18] sm:$0xff]
        %v530 = vld [vmem:[%s525 + $0x20] sm:$0xff]
        %v531 = vld [vmem:[%s525 + $0x28] sm:$0xff]
        %v532 = vld [vmem:[%s525 + $0x30] sm:$0xff]
        %v533 = vld [vmem:[%s525 + $0x38] sm:$0xff]
        %v534 = vld [vmem:[%s525 + $0x40] sm:$0xff]
        %v535 = vld [vmem:[%s525 + $0x48] sm:$0xff]
        %v536 = vld [vmem:[%s525 + $0x50] sm:$0xff]
        %v537 = vld [vmem:[%s525 + $0x58] sm:$0xff]
        %v538 = vld [vmem:[%s525 + $0x60] sm:$0xff]
        %v539 = vld [vmem:[%s525 + $0x68] sm:$0x33]
        %v554 = vunpack.c.l.b16 %v526
        %v555 = vunpack.c.h.b16 %v526
        %v556 = vunpack.c.l.b16 %v527
        %v557 = vunpack.c.h.b16 %v527
        %v558 = vunpack.c.l.b16 %v528
        %v559 = vunpack.c.h.b16 %v528
        %v560 = vunpack.c.l.b16 %v529
        %v561 = vunpack.c.h.b16 %v529
        %v562 = vunpack.c.l.b16 %v530
        %v563 = vunpack.c.h.b16 %v530
        %v564 = vunpack.c.l.b16 %v531
        %v565 = vunpack.c.h.b16 %v531
        %v566 = vunpack.c.l.b16 %v532
        %v567 = vunpack.c.h.b16 %v532
        %v568 = vunpack.c.l.b16 %v533
        %v569 = vunpack.c.h.b16 %v533
        %v570 = vunpack.c.l.b16 %v534
        %v571 = vunpack.c.h.b16 %v534
        %v572 = vunpack.c.l.b16 %v535
        %v573 = vunpack.c.h.b16 %v535
        %v574 = vunpack.c.l.b16 %v536
        %v575 = vunpack.c.h.b16 %v536
        %v576 = vunpack.c.l.b16 %v537
        %v577 = vunpack.c.h.b16 %v537
        %v578 = vunpack.c.l.b16 %v538
        %v579 = vunpack.c.h.b16 %v538
        %v580 = vunpack.c.l.b16 %v539
        %v581 = vunpack.c.h.b16 %v539
        %v582 = vpack.c.b16 %v556, %v554
        %v583 = vpack.c.b16 %v557, %v555
        %v584 = vpack.c.b16 %v560, %v558
        %v585 = vpack.c.b16 %v561, %v559
        %v586 = vpack.c.b16 %v564, %v562
        %v587 = vpack.c.b16 %v565, %v563
        %v588 = vpack.c.b16 %v568, %v566
        %v589 = vpack.c.b16 %v569, %v567
        %v590 = vpack.c.b16 %v572, %v570
        %v591 = vpack.c.b16 %v573, %v571
        %v592 = vpack.c.b16 %v576, %v574
        %v593 = vpack.c.b16 %v577, %v575
        %v594 = vpack.c.b16 %v580, %v578
        %v595 = vpack.c.b16 %v581, %v579
        %vm608 = vcmask 883712
        %v610 = vsel %vm608, %v505, 0
        %v613 = vsel %vm608, %v506, 0
        %v616 = vsel %vm608, %v507, 0
        %v619 = vsel %vm608, %v508, 0
        %v622 = vsel %vm608, %v509, 0
        %v625 = vsel %vm608, %v510, 0
        %v628 = vsel %vm608, %v511, 0
        %v631 = vsel %vm608, %v512, 0
        %v634 = vsel %vm608, %v513, 0
        %v637 = vsel %vm608, %v514, 0
        %v640 = vsel %vm608, %v515, 0
        %v643 = vsel %vm608, %v516, 0
        %v646 = vsel %vm608, %v517, 0
        %v649 = vsel %vm608, %v518, 0
        %v652 = vsel %vm608, %v519, 0
        %v655 = vsel %vm608, %v520, 0
        %v658 = vsel %vm608, %v521, 0
        %v661 = vsel %vm608, %v522, 0
        %v664 = vsel %vm608, %v523, 0
        %v667 = vsel %vm608, %v524, 0
        %vm669 = vcmask 1045504
        %v671 = vsel %vm669, %v594, 0
        %v674 = vsel %vm669, %v595, 0
        %676 = vmatprep.subr.bf16.mxu0 0
        %677 = vmatpush1.bf16.msra.mxu0 0
        %678 = vmatprep.subr.bf16.mxu0 %v674
        %679 = vmatpush1.bf16.msra.mxu0 %v671
        %680 = vmatprep.subr.bf16.mxu0 %v593
        %681 = vmatpush1.bf16.msra.mxu0 %v592
        %682 = vmatprep.subr.bf16.mxu0 %v591
        %683 = vmatpush1.bf16.msra.mxu0 %v590
        %684 = vmatprep.subr.bf16.mxu0 %v589
        %685 = vmatpush1.bf16.msra.mxu0 %v588
        %686 = vmatprep.subr.bf16.mxu0 %v587
        %687 = vmatpush1.bf16.msra.mxu0 %v586
        %688 = vmatprep.subr.bf16.mxu0 %v585
        %689 = vmatpush1.bf16.msra.mxu0 %v584
        %690 = vmatprep.subr.bf16.mxu0 %v583
        %691 = vmatpush1.bf16.msra.mxu0 %v582
        %692 = vmatprep.subr.bf16.mxu0 0
        %693 = vmatpush2.bf16.msra.mxu0 0
        %694 = vmatprep.subr.bf16.mxu0 0
        %695 = vmatpush2.bf16.msra.mxu0 0
        %696 = vmatprep.subr.bf16.mxu0 0
        %697 = vmatpush2.bf16.msra.mxu0 0
        %698 = vmatprep.subr.bf16.mxu0 0
        %699 = vmatpush2.bf16.msra.mxu0 0
        %700 = vmatprep.subr.bf16.mxu0 0
        %701 = vmatpush2.bf16.msra.mxu0 0
        %702 = vmatprep.subr.bf16.mxu0 0
        %703 = vmatpush2.bf16.msra.mxu0 0
        %704 = vmatprep.subr.bf16.mxu0 0
        %705 = vmatpush2.bf16.msra.mxu0 0
        %706 = vmatprep.subr.bf16.mxu0 0
        %707 = vmatpush2.bf16.msra.mxu0 0
        %708 = vmatprep.mubr.bf16.mxu0 0
        %709 = vmatmul.mubr.bf16.gmra.mxu0 %v610
        %v710 = vpop.f32.mrf.mxu0
        %v711 = vadd.f32 0.0, %v710
        %v712 = vpop.f32.mrf.mxu0
        %v713 = vadd.f32 0.0, %v712
        %v714 = vpop.f32.mrf.mxu0
        %v715 = vadd.f32 0.0, %v714
        %v716 = vpop.f32.mrf.mxu0
        %v717 = vadd.f32 0.0, %v716
        %718 = vmatprep.mubr.bf16.mxu0 0
        %719 = vmatmul.mubr.bf16.gmra.mxu0 %v613
        %v720 = vpop.f32.mrf.mxu0
        %v721 = vadd.f32 0.0, %v720
        %v722 = vpop.f32.mrf.mxu0
        %v723 = vadd.f32 0.0, %v722
        %v724 = vpop.f32.mrf.mxu0
        %v725 = vadd.f32 0.0, %v724
        %v726 = vpop.f32.mrf.mxu0
        %v727 = vadd.f32 0.0, %v726
        %728 = vmatprep.mubr.bf16.mxu0 0
        %729 = vmatmul.mubr.bf16.gmra.mxu0 %v616
        %v730 = vpop.f32.mrf.mxu0
        %v731 = vadd.f32 0.0, %v730
        %v732 = vpop.f32.mrf.mxu0
        %v733 = vadd.f32 0.0, %v732
        %v734 = vpop.f32.mrf.mxu0
        %v735 = vadd.f32 0.0, %v734
        %v736 = vpop.f32.mrf.mxu0
        %v737 = vadd.f32 0.0, %v736
        %738 = vmatprep.mubr.bf16.mxu0 0
        %739 = vmatmul.mubr.bf16.gmra.mxu0 %v619
        %v740 = vpop.f32.mrf.mxu0
        %v741 = vadd.f32 0.0, %v740
        %v742 = vpop.f32.mrf.mxu0
        %v743 = vadd.f32 0.0, %v742
        %v744 = vpop.f32.mrf.mxu0
        %v745 = vadd.f32 0.0, %v744
        %v746 = vpop.f32.mrf.mxu0
        %v747 = vadd.f32 0.0, %v746
        %748 = vmatprep.mubr.bf16.mxu0 0
        %749 = vmatmul.mubr.bf16.gmra.mxu0 %v622
        %v750 = vpop.f32.mrf.mxu0
        %v751 = vadd.f32 0.0, %v750
        %v752 = vpop.f32.mrf.mxu0
        %v753 = vadd.f32 0.0, %v752
        %v754 = vpop.f32.mrf.mxu0
        %v755 = vadd.f32 0.0, %v754
        %v756 = vpop.f32.mrf.mxu0
        %v757 = vadd.f32 0.0, %v756
        %758 = vmatprep.mubr.bf16.mxu0 0
        %759 = vmatmul.mubr.bf16.gmra.mxu0 %v625
        %v760 = vpop.f32.mrf.mxu0
        %v761 = vadd.f32 0.0, %v760
        %v762 = vpop.f32.mrf.mxu0
        %v763 = vadd.f32 0.0, %v762
        %v764 = vpop.f32.mrf.mxu0
        %v765 = vadd.f32 0.0, %v764
        %v766 = vpop.f32.mrf.mxu0
        %v767 = vadd.f32 0.0, %v766
        %768 = vmatprep.mubr.bf16.mxu0 0
        %769 = vmatmul.mubr.bf16.gmra.mxu0 %v628
        %v770 = vpop.f32.mrf.mxu0
        %v771 = vadd.f32 0.0, %v770
        %v772 = vpop.f32.mrf.mxu0
        %v773 = vadd.f32 0.0, %v772
        %v774 = vpop.f32.mrf.mxu0
        %v775 = vadd.f32 0.0, %v774
        %v776 = vpop.f32.mrf.mxu0
        %v777 = vadd.f32 0.0, %v776
        %778 = vmatprep.mubr.bf16.mxu0 0
        %779 = vmatmul.mubr.bf16.gmra.mxu0 %v631
        %v780 = vpop.f32.mrf.mxu0
        %v781 = vadd.f32 0.0, %v780
        %v782 = vpop.f32.mrf.mxu0
        %v783 = vadd.f32 0.0, %v782
        %v784 = vpop.f32.mrf.mxu0
        %v785 = vadd.f32 0.0, %v784
        %v786 = vpop.f32.mrf.mxu0
        %v787 = vadd.f32 0.0, %v786
        %788 = vmatprep.mubr.bf16.mxu0 0
        %789 = vmatmul.mubr.bf16.gmra.mxu0 %v634
        %v790 = vpop.f32.mrf.mxu0
        %v791 = vadd.f32 0.0, %v790
        %v792 = vpop.f32.mrf.mxu0
        %v793 = vadd.f32 0.0, %v792
        %v794 = vpop.f32.mrf.mxu0
        %v795 = vadd.f32 0.0, %v794
        %v796 = vpop.f32.mrf.mxu0
        %v797 = vadd.f32 0.0, %v796
        %798 = vmatprep.mubr.bf16.mxu0 0
        %799 = vmatmul.mubr.bf16.gmra.mxu0 %v637
        %v800 = vpop.f32.mrf.mxu0
        %v801 = vadd.f32 0.0, %v800
        %v802 = vpop.f32.mrf.mxu0
        %v803 = vadd.f32 0.0, %v802
        %v804 = vpop.f32.mrf.mxu0
        %v805 = vadd.f32 0.0, %v804
        %v806 = vpop.f32.mrf.mxu0
        %v807 = vadd.f32 0.0, %v806
        %808 = vmatprep.mubr.bf16.mxu0 0
        %809 = vmatmul.mubr.bf16.gmra.mxu0 %v640
        %v810 = vpop.f32.mrf.mxu0
        %v811 = vadd.f32 0.0, %v810
        %v812 = vpop.f32.mrf.mxu0
        %v813 = vadd.f32 0.0, %v812
        %v814 = vpop.f32.mrf.mxu0
        %v815 = vadd.f32 0.0, %v814
        %v816 = vpop.f32.mrf.mxu0
        %v817 = vadd.f32 0.0, %v816
        %818 = vmatprep.mubr.bf16.mxu0 0
        %819 = vmatmul.mubr.bf16.gmra.mxu0 %v643
        %v820 = vpop.f32.mrf.mxu0
        %v821 = vadd.f32 0.0, %v820
        %v822 = vpop.f32.mrf.mxu0
        %v823 = vadd.f32 0.0, %v822
        %v824 = vpop.f32.mrf.mxu0
        %v825 = vadd.f32 0.0, %v824
        %v826 = vpop.f32.mrf.mxu0
        %v827 = vadd.f32 0.0, %v826
        %828 = vmatprep.mubr.bf16.mxu0 0
        %829 = vmatmul.mubr.bf16.gmra.mxu0 %v646
        %v830 = vpop.f32.mrf.mxu0
        %v831 = vadd.f32 0.0, %v830
        %v832 = vpop.f32.mrf.mxu0
        %v833 = vadd.f32 0.0, %v832
        %v834 = vpop.f32.mrf.mxu0
        %v835 = vadd.f32 0.0, %v834
        %v836 = vpop.f32.mrf.mxu0
        %v837 = vadd.f32 0.0, %v836
        %838 = vmatprep.mubr.bf16.mxu0 0
        %839 = vmatmul.mubr.bf16.gmra.mxu0 %v649
        %v840 = vpop.f32.mrf.mxu0
        %v841 = vadd.f32 0.0, %v840
        %v842 = vpop.f32.mrf.mxu0
        %v843 = vadd.f32 0.0, %v842
        %v844 = vpop.f32.mrf.mxu0
        %v845 = vadd.f32 0.0, %v844
        %v846 = vpop.f32.mrf.mxu0
        %v847 = vadd.f32 0.0, %v846
        %848 = vmatprep.mubr.bf16.mxu0 0
        %849 = vmatmul.mubr.bf16.gmra.mxu0 %v652
        %v850 = vpop.f32.mrf.mxu0
        %v851 = vadd.f32 0.0, %v850
        %v852 = vpop.f32.mrf.mxu0
        %v853 = vadd.f32 0.0, %v852
        %v854 = vpop.f32.mrf.mxu0
        %v855 = vadd.f32 0.0, %v854
        %v856 = vpop.f32.mrf.mxu0
        %v857 = vadd.f32 0.0, %v856
        %858 = vmatprep.mubr.bf16.mxu0 0
        %859 = vmatmul.mubr.bf16.gmra.mxu0 %v655
        %v860 = vpop.f32.mrf.mxu0
        %v861 = vadd.f32 0.0, %v860
        %v862 = vpop.f32.mrf.mxu0
        %v863 = vadd.f32 0.0, %v862
        %v864 = vpop.f32.mrf.mxu0
        %v865 = vadd.f32 0.0, %v864
        %v866 = vpop.f32.mrf.mxu0
        %v867 = vadd.f32 0.0, %v866
        %868 = vmatprep.mubr.bf16.mxu0 0
        %869 = vmatmul.mubr.bf16.gmra.mxu0 %v658
        %v870 = vpop.f32.mrf.mxu0
        %v871 = vadd.f32 0.0, %v870
        %v872 = vpop.f32.mrf.mxu0
        %v873 = vadd.f32 0.0, %v872
        %v874 = vpop.f32.mrf.mxu0
        %v875 = vadd.f32 0.0, %v874
        %v876 = vpop.f32.mrf.mxu0
        %v877 = vadd.f32 0.0, %v876
        %878 = vmatprep.mubr.bf16.mxu0 0
        %879 = vmatmul.mubr.bf16.gmra.mxu0 %v661
        %v880 = vpop.f32.mrf.mxu0
        %v881 = vadd.f32 0.0, %v880
        %v882 = vpop.f32.mrf.mxu0
        %v883 = vadd.f32 0.0, %v882
        %v884 = vpop.f32.mrf.mxu0
        %v885 = vadd.f32 0.0, %v884
        %v886 = vpop.f32.mrf.mxu0
        %v887 = vadd.f32 0.0, %v886
        %888 = vmatprep.mubr.bf16.mxu0 0
        %889 = vmatmul.mubr.bf16.gmra.mxu0 %v664
        %v890 = vpop.f32.mrf.mxu0
        %v891 = vadd.f32 0.0, %v890
        %v892 = vpop.f32.mrf.mxu0
        %v893 = vadd.f32 0.0, %v892
        %v894 = vpop.f32.mrf.mxu0
        %v895 = vadd.f32 0.0, %v894
        %v896 = vpop.f32.mrf.mxu0
        %v897 = vadd.f32 0.0, %v896
        %898 = vmatprep.mubr.bf16.mxu0 0
        %899 = vmatmul.mubr.bf16.gmra.mxu0 %v667
        %v900 = vpop.f32.mrf.mxu0
        %v901 = vadd.f32 0.0, %v900
        %v902 = vpop.f32.mrf.mxu0
        %v903 = vadd.f32 0.0, %v902
        %v904 = vpop.f32.mrf.mxu0
        %v905 = vadd.f32 0.0, %v904
        %v906 = vpop.f32.mrf.mxu0
        %v907 = vadd.f32 0.0, %v906
        %908 = vdwg.mxu0
        %v923 = vunpack.c.l.b16 %v451
        %v924 = vunpack.c.h.b16 %v451
        %v925 = vunpack.c.l.b16 %v452
        %v926 = vunpack.c.h.b16 %v452
        %v927 = vunpack.c.l.b16 %v453
        %v928 = vunpack.c.h.b16 %v453
        %v929 = vunpack.c.l.b16 %v454
        %v930 = vunpack.c.h.b16 %v454
        %v931 = vunpack.c.l.b16 %v455
        %v932 = vunpack.c.h.b16 %v455
        %v933 = vunpack.c.l.b16 %v456
        %v934 = vunpack.c.h.b16 %v456
        %v935 = vunpack.c.l.b16 %v457
        %v936 = vunpack.c.h.b16 %v457
        %v937 = vunpack.c.l.b16 %v458
        %v938 = vunpack.c.h.b16 %v458
        %v939 = vunpack.c.l.b16 %v459
        %v940 = vunpack.c.h.b16 %v459
        %v941 = vunpack.c.l.b16 %v460
        %v942 = vunpack.c.h.b16 %v460
        %v943 = vunpack.c.l.b16 %v461
        %v944 = vunpack.c.h.b16 %v461
        %v945 = vunpack.c.l.b16 %v462
        %v946 = vunpack.c.h.b16 %v462
        %v947 = vunpack.c.l.b16 %v463
        %v948 = vunpack.c.h.b16 %v463
        %v949 = vunpack.c.l.b16 %v464
        %v950 = vunpack.c.h.b16 %v464
        %v951 = vpack.c.b16 %v925, %v923
        %v952 = vpack.c.b16 %v926, %v924
        %v953 = vpack.c.b16 %v929, %v927
        %v954 = vpack.c.b16 %v930, %v928
        %v955 = vpack.c.b16 %v933, %v931
        %v956 = vpack.c.b16 %v934, %v932
        %v957 = vpack.c.b16 %v937, %v935
        %v958 = vpack.c.b16 %v938, %v936
        %v959 = vpack.c.b16 %v941, %v939
        %v960 = vpack.c.b16 %v942, %v940
        %v961 = vpack.c.b16 %v945, %v943
        %v962 = vpack.c.b16 %v946, %v944
        %v963 = vpack.c.b16 %v949, %v947
        %v964 = vpack.c.b16 %v950, %v948
        %v978 = vsel %vm608, %v431, 0
        %v981 = vsel %vm608, %v432, 0
        %v984 = vsel %vm608, %v433, 0
        %v987 = vsel %vm608, %v434, 0
        %v990 = vsel %vm608, %v435, 0
        %v993 = vsel %vm608, %v436, 0
        %v996 = vsel %vm608, %v437, 0
        %v999 = vsel %vm608, %v438, 0
        %v1002 = vsel %vm608, %v439, 0
        %v1005 = vsel %vm608, %v440, 0
        %v1008 = vsel %vm608, %v441, 0
        %v1011 = vsel %vm608, %v442, 0
        %v1014 = vsel %vm608, %v443, 0
        %v1017 = vsel %vm608, %v444, 0
        %v1020 = vsel %vm608, %v445, 0
        %v1023 = vsel %vm608, %v446, 0
        %v1026 = vsel %vm608, %v447, 0
        %v1029 = vsel %vm608, %v448, 0
        %v1032 = vsel %vm608, %v449, 0
        %v1035 = vsel %vm608, %v450, 0
        %v1038 = vsel %vm669, %v963, 0
        %v1041 = vsel %vm669, %v964, 0
        %1043 = vmatprep.subr.bf16.mxu0 0
        %1044 = vmatpush1.bf16.msra.mxu0 0
        %1045 = vmatprep.subr.bf16.mxu0 %v1041
        %1046 = vmatpush1.bf16.msra.mxu0 %v1038
        %1047 = vmatprep.subr.bf16.mxu0 %v962
        %1048 = vmatpush1.bf16.msra.mxu0 %v961
        %1049 = vmatprep.subr.bf16.mxu0 %v960
        %1050 = vmatpush1.bf16.msra.mxu0 %v959
        %1051 = vmatprep.subr.bf16.mxu0 %v958
        %1052 = vmatpush1.bf16.msra.mxu0 %v957
        %1053 = vmatprep.subr.bf16.mxu0 %v956
        %1054 = vmatpush1.bf16.msra.mxu0 %v955
        %1055 = vmatprep.subr.bf16.mxu0 %v954
        %1056 = vmatpush1.bf16.msra.mxu0 %v953
        %1057 = vmatprep.subr.bf16.mxu0 %v952
        %1058 = vmatpush1.bf16.msra.mxu0 %v951
        %1059 = vmatprep.subr.bf16.mxu0 0
        %1060 = vmatpush2.bf16.msra.mxu0 0
        %1061 = vmatprep.subr.bf16.mxu0 0
        %1062 = vmatpush2.bf16.msra.mxu0 0
        %1063 = vmatprep.subr.bf16.mxu0 0
        %1064 = vmatpush2.bf16.msra.mxu0 0
        %1065 = vmatprep.subr.bf16.mxu0 0
        %1066 = vmatpush2.bf16.msra.mxu0 0
        %1067 = vmatprep.subr.bf16.mxu0 0
        %1068 = vmatpush2.bf16.msra.mxu0 0
        %1069 = vmatprep.subr.bf16.mxu0 0
        %1070 = vmatpush2.bf16.msra.mxu0 0
        %1071 = vmatprep.subr.bf16.mxu0 0
        %1072 = vmatpush2.bf16.msra.mxu0 0
        %1073 = vmatprep.subr.bf16.mxu0 0
        %1074 = vmatpush2.bf16.msra.mxu0 0
        %1075 = vmatprep.mubr.bf16.mxu0 0
        %1076 = vmatmul.mubr.bf16.gmra.mxu0 %v978
        %v1077 = vpop.f32.mrf.mxu0
        %v1078 = vadd.f32 %v711, %v1077
        %v1079 = vpop.f32.mrf.mxu0
        %v1080 = vadd.f32 %v713, %v1079
        %v1081 = vpop.f32.mrf.mxu0
        %v1082 = vadd.f32 %v715, %v1081
        %v1083 = vpop.f32.mrf.mxu0
        %v1084 = vadd.f32 %v717, %v1083
        %1085 = vmatprep.mubr.bf16.mxu0 0
        %1086 = vmatmul.mubr.bf16.gmra.mxu0 %v981
        %v1087 = vpop.f32.mrf.mxu0
        %v1088 = vadd.f32 %v721, %v1087
        %v1089 = vpop.f32.mrf.mxu0
        %v1090 = vadd.f32 %v723, %v1089
        %v1091 = vpop.f32.mrf.mxu0
        %v1092 = vadd.f32 %v725, %v1091
        %v1093 = vpop.f32.mrf.mxu0
        %v1094 = vadd.f32 %v727, %v1093
        %1095 = vmatprep.mubr.bf16.mxu0 0
        %1096 = vmatmul.mubr.bf16.gmra.mxu0 %v984
        %v1097 = vpop.f32.mrf.mxu0
        %v1098 = vadd.f32 %v731, %v1097
        %v1099 = vpop.f32.mrf.mxu0
        %v1100 = vadd.f32 %v733, %v1099
        %v1101 = vpop.f32.mrf.mxu0
        %v1102 = vadd.f32 %v735, %v1101
        %v1103 = vpop.f32.mrf.mxu0
        %v1104 = vadd.f32 %v737, %v1103
        %1105 = vmatprep.mubr.bf16.mxu0 0
        %1106 = vmatmul.mubr.bf16.gmra.mxu0 %v987
        %v1107 = vpop.f32.mrf.mxu0
        %v1108 = vadd.f32 %v741, %v1107
        %v1109 = vpop.f32.mrf.mxu0
        %v1110 = vadd.f32 %v743, %v1109
        %v1111 = vpop.f32.mrf.mxu0
        %v1112 = vadd.f32 %v745, %v1111
        %v1113 = vpop.f32.mrf.mxu0
        %v1114 = vadd.f32 %v747, %v1113
        %1115 = vmatprep.mubr.bf16.mxu0 0
        %1116 = vmatmul.mubr.bf16.gmra.mxu0 %v990
        %v1117 = vpop.f32.mrf.mxu0
        %v1118 = vadd.f32 %v751, %v1117
        %v1119 = vpop.f32.mrf.mxu0
        %v1120 = vadd.f32 %v753, %v1119
        %v1121 = vpop.f32.mrf.mxu0
        %v1122 = vadd.f32 %v755, %v1121
        %v1123 = vpop.f32.mrf.mxu0
        %v1124 = vadd.f32 %v757, %v1123
        %1125 = vmatprep.mubr.bf16.mxu0 0
        %1126 = vmatmul.mubr.bf16.gmra.mxu0 %v993
        %v1127 = vpop.f32.mrf.mxu0
        %v1128 = vadd.f32 %v761, %v1127
        %v1129 = vpop.f32.mrf.mxu0
        %v1130 = vadd.f32 %v763, %v1129
        %v1131 = vpop.f32.mrf.mxu0
        %v1132 = vadd.f32 %v765, %v1131
        %v1133 = vpop.f32.mrf.mxu0
        %v1134 = vadd.f32 %v767, %v1133
        %1135 = vmatprep.mubr.bf16.mxu0 0
        %1136 = vmatmul.mubr.bf16.gmra.mxu0 %v996
        %v1137 = vpop.f32.mrf.mxu0
        %v1138 = vadd.f32 %v771, %v1137
        %v1139 = vpop.f32.mrf.mxu0
        %v1140 = vadd.f32 %v773, %v1139
        %v1141 = vpop.f32.mrf.mxu0
        %v1142 = vadd.f32 %v775, %v1141
        %v1143 = vpop.f32.mrf.mxu0
        %v1144 = vadd.f32 %v777, %v1143
        %1145 = vmatprep.mubr.bf16.mxu0 0
        %1146 = vmatmul.mubr.bf16.gmra.mxu0 %v999
        %v1147 = vpop.f32.mrf.mxu0
        %v1148 = vadd.f32 %v781, %v1147
        %v1149 = vpop.f32.mrf.mxu0
        %v1150 = vadd.f32 %v783, %v1149
        %v1151 = vpop.f32.mrf.mxu0
        %v1152 = vadd.f32 %v785, %v1151
        %v1153 = vpop.f32.mrf.mxu0
        %v1154 = vadd.f32 %v787, %v1153
        %1155 = vmatprep.mubr.bf16.mxu0 0
        %1156 = vmatmul.mubr.bf16.gmra.mxu0 %v1002
        %v1157 = vpop.f32.mrf.mxu0
        %v1158 = vadd.f32 %v791, %v1157
        %v1159 = vpop.f32.mrf.mxu0
        %v1160 = vadd.f32 %v793, %v1159
        %v1161 = vpop.f32.mrf.mxu0
        %v1162 = vadd.f32 %v795, %v1161
        %v1163 = vpop.f32.mrf.mxu0
        %v1164 = vadd.f32 %v797, %v1163
        %1165 = vmatprep.mubr.bf16.mxu0 0
        %1166 = vmatmul.mubr.bf16.gmra.mxu0 %v1005
        %v1167 = vpop.f32.mrf.mxu0
        %v1168 = vadd.f32 %v801, %v1167
        %v1169 = vpop.f32.mrf.mxu0
        %v1170 = vadd.f32 %v803, %v1169
        %v1171 = vpop.f32.mrf.mxu0
        %v1172 = vadd.f32 %v805, %v1171
        %v1173 = vpop.f32.mrf.mxu0
        %v1174 = vadd.f32 %v807, %v1173
        %1175 = vmatprep.mubr.bf16.mxu0 0
        %1176 = vmatmul.mubr.bf16.gmra.mxu0 %v1008
        %v1177 = vpop.f32.mrf.mxu0
        %v1178 = vadd.f32 %v811, %v1177
        %v1179 = vpop.f32.mrf.mxu0
        %v1180 = vadd.f32 %v813, %v1179
        %v1181 = vpop.f32.mrf.mxu0
        %v1182 = vadd.f32 %v815, %v1181
        %v1183 = vpop.f32.mrf.mxu0
        %v1184 = vadd.f32 %v817, %v1183
        %1185 = vmatprep.mubr.bf16.mxu0 0
        %1186 = vmatmul.mubr.bf16.gmra.mxu0 %v1011
        %v1187 = vpop.f32.mrf.mxu0
        %v1188 = vadd.f32 %v821, %v1187
        %v1189 = vpop.f32.mrf.mxu0
        %v1190 = vadd.f32 %v823, %v1189
        %v1191 = vpop.f32.mrf.mxu0
        %v1192 = vadd.f32 %v825, %v1191
        %v1193 = vpop.f32.mrf.mxu0
        %v1194 = vadd.f32 %v827, %v1193
        %1195 = vmatprep.mubr.bf16.mxu0 0
        %1196 = vmatmul.mubr.bf16.gmra.mxu0 %v1014
        %v1197 = vpop.f32.mrf.mxu0
        %v1198 = vadd.f32 %v831, %v1197
        %v1199 = vpop.f32.mrf.mxu0
        %v1200 = vadd.f32 %v833, %v1199
        %v1201 = vpop.f32.mrf.mxu0
        %v1202 = vadd.f32 %v835, %v1201
        %v1203 = vpop.f32.mrf.mxu0
        %v1204 = vadd.f32 %v837, %v1203
        %1205 = vmatprep.mubr.bf16.mxu0 0
        %1206 = vmatmul.mubr.bf16.gmra.mxu0 %v1017
        %v1207 = vpop.f32.mrf.mxu0
        %v1208 = vadd.f32 %v841, %v1207
        %v1209 = vpop.f32.mrf.mxu0
        %v1210 = vadd.f32 %v843, %v1209
        %v1211 = vpop.f32.mrf.mxu0
        %v1212 = vadd.f32 %v845, %v1211
        %v1213 = vpop.f32.mrf.mxu0
        %v1214 = vadd.f32 %v847, %v1213
        %1215 = vmatprep.mubr.bf16.mxu0 0
        %1216 = vmatmul.mubr.bf16.gmra.mxu0 %v1020
        %v1217 = vpop.f32.mrf.mxu0
        %v1218 = vadd.f32 %v851, %v1217
        %v1219 = vpop.f32.mrf.mxu0
        %v1220 = vadd.f32 %v853, %v1219
        %v1221 = vpop.f32.mrf.mxu0
        %v1222 = vadd.f32 %v855, %v1221
        %v1223 = vpop.f32.mrf.mxu0
        %v1224 = vadd.f32 %v857, %v1223
        %1225 = vmatprep.mubr.bf16.mxu0 0
        %1226 = vmatmul.mubr.bf16.gmra.mxu0 %v1023
        %v1227 = vpop.f32.mrf.mxu0
        %v1228 = vadd.f32 %v861, %v1227
        %v1229 = vpop.f32.mrf.mxu0
        %v1230 = vadd.f32 %v863, %v1229
        %v1231 = vpop.f32.mrf.mxu0
        %v1232 = vadd.f32 %v865, %v1231
        %v1233 = vpop.f32.mrf.mxu0
        %v1234 = vadd.f32 %v867, %v1233
        %1235 = vmatprep.mubr.bf16.mxu0 0
        %1236 = vmatmul.mubr.bf16.gmra.mxu0 %v1026
        %v1237 = vpop.f32.mrf.mxu0
        %v1238 = vadd.f32 %v871, %v1237
        %v1239 = vpop.f32.mrf.mxu0
        %v1240 = vadd.f32 %v873, %v1239
        %v1241 = vpop.f32.mrf.mxu0
        %v1242 = vadd.f32 %v875, %v1241
        %v1243 = vpop.f32.mrf.mxu0
        %v1244 = vadd.f32 %v877, %v1243
        %1245 = vmatprep.mubr.bf16.mxu0 0
        %1246 = vmatmul.mubr.bf16.gmra.mxu0 %v1029
        %v1247 = vpop.f32.mrf.mxu0
        %v1248 = vadd.f32 %v881, %v1247
        %v1249 = vpop.f32.mrf.mxu0
        %v1250 = vadd.f32 %v883, %v1249
        %v1251 = vpop.f32.mrf.mxu0
        %v1252 = vadd.f32 %v885, %v1251
        %v1253 = vpop.f32.mrf.mxu0
        %v1254 = vadd.f32 %v887, %v1253
        %1255 = vmatprep.mubr.bf16.mxu0 0
        %1256 = vmatmul.mubr.bf16.gmra.mxu0 %v1032
        %v1257 = vpop.f32.mrf.mxu0
        %v1258 = vadd.f32 %v891, %v1257
        %v1259 = vpop.f32.mrf.mxu0
        %v1260 = vadd.f32 %v893, %v1259
        %v1261 = vpop.f32.mrf.mxu0
        %v1262 = vadd.f32 %v895, %v1261
        %v1263 = vpop.f32.mrf.mxu0
        %v1264 = vadd.f32 %v897, %v1263
        %1265 = vmatprep.mubr.bf16.mxu0 0
        %1266 = vmatmul.mubr.bf16.gmra.mxu0 %v1035
        %v1267 = vpop.f32.mrf.mxu0
        %v1268 = vadd.f32 %v901, %v1267
        %v1269 = vpop.f32.mrf.mxu0
        %v1270 = vadd.f32 %v903, %v1269
        %v1271 = vpop.f32.mrf.mxu0
        %v1272 = vadd.f32 %v905, %v1271
        %v1273 = vpop.f32.mrf.mxu0
        %v1274 = vadd.f32 %v907, %v1273
        %1275 = vdwg.mxu0
        %v1276 = vld [vmem:[%s388 + $0x2] sm:$0xff]
        %v1277 = vld [vmem:[%s388 + $0xa] sm:$0xff]
        %v1278 = vld [vmem:[%s388 + $0x12] sm:$0xff]
        %v1279 = vld [vmem:[%s388 + $0x1a] sm:$0xff]
        %v1280 = vld [vmem:[%s388 + $0x22] sm:$0xff]
        %v1281 = vld [vmem:[%s388 + $0x32] sm:$0xff]
        %v1282 = vld [vmem:[%s388 + $0x3a] sm:$0xff]
        %v1283 = vld [vmem:[%s388 + $0x42] sm:$0xff]
        %v1284 = vld [vmem:[%s388 + $0x4a] sm:$0xff]
        %v1285 = vld [vmem:[%s388 + $0x52] sm:$0xff]
        %v1286 = vld [vmem:[%s388 + $0x62] sm:$0xff]
        %v1287 = vld [vmem:[%s388 + $0x6a] sm:$0xff]
        %v1288 = vld [vmem:[%s388 + $0x72] sm:$0xff]
        %v1289 = vld [vmem:[%s388 + $0x7a] sm:$0xff]
        %v1290 = vld [vmem:[%s388 + $0x82] sm:$0xff]
        %v1291 = vld [vmem:[%s388 + $0x92] sm:$0xff]
        %v1292 = vld [vmem:[%s388 + $0x9a] sm:$0xff]
        %v1293 = vld [vmem:[%s388 + $0xa2] sm:$0xff]
        %v1294 = vld [vmem:[%s388 + $0xaa] sm:$0xff]
        %v1295 = vld [vmem:[%s388 + $0xb2] sm:$0xff]
        %v1296 = vld [vmem:[%s388 + $0xc2] sm:$0xff]
        %v1297 = vld [vmem:[%s388 + $0xca] sm:$0xff]
        %v1298 = vld [vmem:[%s388 + $0xd2] sm:$0xff]
        %v1299 = vld [vmem:[%s388 + $0xda] sm:$0xff]
        %v1300 = vld [vmem:[%s388 + $0xe2] sm:$0xff]
        %v1301 = vld [vmem:[%s388 + $0xf2] sm:$0xff]
        %v1302 = vld [vmem:[%s388 + $0xfa] sm:$0xff]
        %v1303 = vld [vmem:[%s388 + $0x102] sm:$0xff]
        %v1304 = vld [vmem:[%s388 + $0x10a] sm:$0xff]
        %v1305 = vld [vmem:[%s388 + $0x112] sm:$0xff]
        %v1306 = vld [vmem:[%s388 + $0x122] sm:$0xff]
        %v1307 = vld [vmem:[%s388 + $0x12a] sm:$0xff]
        %v1308 = vld [vmem:[%s388 + $0x132] sm:$0xff]
        %v1309 = vld [vmem:[%s388 + $0x13a] sm:$0xff]
        %v1310 = vld [vmem:[%s388 + $0x142] sm:$0xff]
        %v1311 = vld [vmem:[%s388 + $0x152] sm:$0xff]
        %v1312 = vld [vmem:[%s388 + $0x15a] sm:$0xff]
        %v1313 = vld [vmem:[%s388 + $0x162] sm:$0xff]
        %v1314 = vld [vmem:[%s388 + $0x16a] sm:$0xff]
        %v1315 = vld [vmem:[%s388 + $0x172] sm:$0xff]
        %v1316 = vpack.c.bf16 %v1277, %v1276
        %v1317 = vpack.c.bf16 %v1279, %v1278
        %v1318 = vpack.c.bf16 %v1281, %v1280
        %v1319 = vpack.c.bf16 %v1283, %v1282
        %v1320 = vpack.c.bf16 %v1285, %v1284
        %v1321 = vpack.c.bf16 %v1287, %v1286
        %v1322 = vpack.c.bf16 %v1289, %v1288
        %v1323 = vpack.c.bf16 %v1291, %v1290
        %v1324 = vpack.c.bf16 %v1293, %v1292
        %v1325 = vpack.c.bf16 %v1295, %v1294
        %v1326 = vpack.c.bf16 %v1297, %v1296
        %v1327 = vpack.c.bf16 %v1299, %v1298
        %v1328 = vpack.c.bf16 %v1301, %v1300
        %v1329 = vpack.c.bf16 %v1303, %v1302
        %v1330 = vpack.c.bf16 %v1305, %v1304
        %v1331 = vpack.c.bf16 %v1307, %v1306
        %v1332 = vpack.c.bf16 %v1309, %v1308
        %v1333 = vpack.c.bf16 %v1311, %v1310
        %v1334 = vpack.c.bf16 %v1313, %v1312
        %v1335 = vpack.c.bf16 %v1315, %v1314
        %s1336 = scalar_lea.vmem %s1, 224
        %v1337 = vld [vmem:[%s1336] sm:$0xff]
        %v1338 = vld [vmem:[%s1336 + $0x8] sm:$0xff]
        %v1339 = vld [vmem:[%s1336 + $0x10] sm:$0xff]
        %v1340 = vld [vmem:[%s1336 + $0x18] sm:$0xff]
        %v1341 = vld [vmem:[%s1336 + $0x20] sm:$0xff]
        %v1342 = vld [vmem:[%s1336 + $0x28] sm:$0xff]
        %v1343 = vld [vmem:[%s1336 + $0x30] sm:$0xff]
        %v1344 = vld [vmem:[%s1336 + $0x38] sm:$0xff]
        %v1345 = vld [vmem:[%s1336 + $0x40] sm:$0xff]
        %v1346 = vld [vmem:[%s1336 + $0x48] sm:$0xff]
        %v1347 = vld [vmem:[%s1336 + $0x50] sm:$0xff]
        %v1348 = vld [vmem:[%s1336 + $0x58] sm:$0xff]
        %v1349 = vld [vmem:[%s1336 + $0x60] sm:$0xff]
        %v1350 = vld [vmem:[%s1336 + $0x68] sm:$0x33]
        %v1365 = vunpack.c.l.b16 %v1337
        %v1366 = vunpack.c.h.b16 %v1337
        %v1367 = vunpack.c.l.b16 %v1338
        %v1368 = vunpack.c.h.b16 %v1338
        %v1369 = vunpack.c.l.b16 %v1339
        %v1370 = vunpack.c.h.b16 %v1339
        %v1371 = vunpack.c.l.b16 %v1340
        %v1372 = vunpack.c.h.b16 %v1340
        %v1373 = vunpack.c.l.b16 %v1341
        %v1374 = vunpack.c.h.b16 %v1341
        %v1375 = vunpack.c.l.b16 %v1342
        %v1376 = vunpack.c.h.b16 %v1342
        %v1377 = vunpack.c.l.b16 %v1343
        %v1378 = vunpack.c.h.b16 %v1343
        %v1379 = vunpack.c.l.b16 %v1344
        %v1380 = vunpack.c.h.b16 %v1344
        %v1381 = vunpack.c.l.b16 %v1345
        %v1382 = vunpack.c.h.b16 %v1345
        %v1383 = vunpack.c.l.b16 %v1346
        %v1384 = vunpack.c.h.b16 %v1346
        %v1385 = vunpack.c.l.b16 %v1347
        %v1386 = vunpack.c.h.b16 %v1347
        %v1387 = vunpack.c.l.b16 %v1348
        %v1388 = vunpack.c.h.b16 %v1348
        %v1389 = vunpack.c.l.b16 %v1349
        %v1390 = vunpack.c.h.b16 %v1349
        %v1391 = vunpack.c.l.b16 %v1350
        %v1392 = vunpack.c.h.b16 %v1350
        %v1393 = vpack.c.b16 %v1367, %v1365
        %v1394 = vpack.c.b16 %v1368, %v1366
        %v1395 = vpack.c.b16 %v1371, %v1369
        %v1396 = vpack.c.b16 %v1372, %v1370
        %v1397 = vpack.c.b16 %v1375, %v1373
        %v1398 = vpack.c.b16 %v1376, %v1374
        %v1399 = vpack.c.b16 %v1379, %v1377
        %v1400 = vpack.c.b16 %v1380, %v1378
        %v1401 = vpack.c.b16 %v1383, %v1381
        %v1402 = vpack.c.b16 %v1384, %v1382
        %v1403 = vpack.c.b16 %v1387, %v1385
        %v1404 = vpack.c.b16 %v1388, %v1386
        %v1405 = vpack.c.b16 %v1391, %v1389
        %v1406 = vpack.c.b16 %v1392, %v1390
        %v1420 = vsel %vm608, %v1316, 0
        %v1423 = vsel %vm608, %v1317, 0
        %v1426 = vsel %vm608, %v1318, 0
        %v1429 = vsel %vm608, %v1319, 0
        %v1432 = vsel %vm608, %v1320, 0
        %v1435 = vsel %vm608, %v1321, 0
        %v1438 = vsel %vm608, %v1322, 0
        %v1441 = vsel %vm608, %v1323, 0
        %v1444 = vsel %vm608, %v1324, 0
        %v1447 = vsel %vm608, %v1325, 0
        %v1450 = vsel %vm608, %v1326, 0
        %v1453 = vsel %vm608, %v1327, 0
        %v1456 = vsel %vm608, %v1328, 0
        %v1459 = vsel %vm608, %v1329, 0
        %v1462 = vsel %vm608, %v1330, 0
        %v1465 = vsel %vm608, %v1331, 0
        %v1468 = vsel %vm608, %v1332, 0
        %v1471 = vsel %vm608, %v1333, 0
        %v1474 = vsel %vm608, %v1334, 0
        %v1477 = vsel %vm608, %v1335, 0
        %v1480 = vsel %vm669, %v1405, 0
        %v1483 = vsel %vm669, %v1406, 0
        %1485 = vmatprep.subr.bf16.mxu0 0
        %1486 = vmatpush1.bf16.msra.mxu0 0
        %1487 = vmatprep.subr.bf16.mxu0 %v1483
        %1488 = vmatpush1.bf16.msra.mxu0 %v1480
        %1489 = vmatprep.subr.bf16.mxu0 %v1404
        %1490 = vmatpush1.bf16.msra.mxu0 %v1403
        %1491 = vmatprep.subr.bf16.mxu0 %v1402
        %1492 = vmatpush1.bf16.msra.mxu0 %v1401
        %1493 = vmatprep.subr.bf16.mxu0 %v1400
        %1494 = vmatpush1.bf16.msra.mxu0 %v1399
        %1495 = vmatprep.subr.bf16.mxu0 %v1398
        %1496 = vmatpush1.bf16.msra.mxu0 %v1397
        %1497 = vmatprep.subr.bf16.mxu0 %v1396
        %1498 = vmatpush1.bf16.msra.mxu0 %v1395
        %1499 = vmatprep.subr.bf16.mxu0 %v1394
        %1500 = vmatpush1.bf16.msra.mxu0 %v1393
        %1501 = vmatprep.subr.bf16.mxu0 0
        %1502 = vmatpush2.bf16.msra.mxu0 0
        %1503 = vmatprep.subr.bf16.mxu0 0
        %1504 = vmatpush2.bf16.msra.mxu0 0
        %1505 = vmatprep.subr.bf16.mxu0 0
        %1506 = vmatpush2.bf16.msra.mxu0 0
        %1507 = vmatprep.subr.bf16.mxu0 0
        %1508 = vmatpush2.bf16.msra.mxu0 0
        %1509 = vmatprep.subr.bf16.mxu0 0
        %1510 = vmatpush2.bf16.msra.mxu0 0
        %1511 = vmatprep.subr.bf16.mxu0 0
        %1512 = vmatpush2.bf16.msra.mxu0 0
        %1513 = vmatprep.subr.bf16.mxu0 0
        %1514 = vmatpush2.bf16.msra.mxu0 0
        %1515 = vmatprep.subr.bf16.mxu0 0
        %1516 = vmatpush2.bf16.msra.mxu0 0
        %1517 = vmatprep.mubr.bf16.mxu0 0
        %1518 = vmatmul.mubr.bf16.gmra.mxu0 %v1420
        %v1519 = vpop.f32.mrf.mxu0
        %v1520 = vadd.f32 0.0, %v1519
        %v1521 = vpop.f32.mrf.mxu0
        %v1522 = vadd.f32 0.0, %v1521
        %v1523 = vpop.f32.mrf.mxu0
        %v1524 = vadd.f32 0.0, %v1523
        %v1525 = vpop.f32.mrf.mxu0
        %v1526 = vadd.f32 0.0, %v1525
        %1527 = vmatprep.mubr.bf16.mxu0 0
        %1528 = vmatmul.mubr.bf16.gmra.mxu0 %v1423
        %v1529 = vpop.f32.mrf.mxu0
        %v1530 = vadd.f32 0.0, %v1529
        %v1531 = vpop.f32.mrf.mxu0
        %v1532 = vadd.f32 0.0, %v1531
        %v1533 = vpop.f32.mrf.mxu0
        %v1534 = vadd.f32 0.0, %v1533
        %v1535 = vpop.f32.mrf.mxu0
        %v1536 = vadd.f32 0.0, %v1535
        %1537 = vmatprep.mubr.bf16.mxu0 0
        %1538 = vmatmul.mubr.bf16.gmra.mxu0 %v1426
        %v1539 = vpop.f32.mrf.mxu0
        %v1540 = vadd.f32 0.0, %v1539
        %v1541 = vpop.f32.mrf.mxu0
        %v1542 = vadd.f32 0.0, %v1541
        %v1543 = vpop.f32.mrf.mxu0
        %v1544 = vadd.f32 0.0, %v1543
        %v1545 = vpop.f32.mrf.mxu0
        %v1546 = vadd.f32 0.0, %v1545
        %1547 = vmatprep.mubr.bf16.mxu0 0
        %1548 = vmatmul.mubr.bf16.gmra.mxu0 %v1429
        %v1549 = vpop.f32.mrf.mxu0
        %v1550 = vadd.f32 0.0, %v1549
        %v1551 = vpop.f32.mrf.mxu0
        %v1552 = vadd.f32 0.0, %v1551
        %v1553 = vpop.f32.mrf.mxu0
        %v1554 = vadd.f32 0.0, %v1553
        %v1555 = vpop.f32.mrf.mxu0
        %v1556 = vadd.f32 0.0, %v1555
        %1557 = vmatprep.mubr.bf16.mxu0 0
        %1558 = vmatmul.mubr.bf16.gmra.mxu0 %v1432
        %v1559 = vpop.f32.mrf.mxu0
        %v1560 = vadd.f32 0.0, %v1559
        %v1561 = vpop.f32.mrf.mxu0
        %v1562 = vadd.f32 0.0, %v1561
        %v1563 = vpop.f32.mrf.mxu0
        %v1564 = vadd.f32 0.0, %v1563
        %v1565 = vpop.f32.mrf.mxu0
        %v1566 = vadd.f32 0.0, %v1565
        %1567 = vmatprep.mubr.bf16.mxu0 0
        %1568 = vmatmul.mubr.bf16.gmra.mxu0 %v1435
        %v1569 = vpop.f32.mrf.mxu0
        %v1570 = vadd.f32 0.0, %v1569
        %v1571 = vpop.f32.mrf.mxu0
        %v1572 = vadd.f32 0.0, %v1571
        %v1573 = vpop.f32.mrf.mxu0
        %v1574 = vadd.f32 0.0, %v1573
        %v1575 = vpop.f32.mrf.mxu0
        %v1576 = vadd.f32 0.0, %v1575
        %1577 = vmatprep.mubr.bf16.mxu0 0
        %1578 = vmatmul.mubr.bf16.gmra.mxu0 %v1438
        %v1579 = vpop.f32.mrf.mxu0
        %v1580 = vadd.f32 0.0, %v1579
        %v1581 = vpop.f32.mrf.mxu0
        %v1582 = vadd.f32 0.0, %v1581
        %v1583 = vpop.f32.mrf.mxu0
        %v1584 = vadd.f32 0.0, %v1583
        %v1585 = vpop.f32.mrf.mxu0
        %v1586 = vadd.f32 0.0, %v1585
        %1587 = vmatprep.mubr.bf16.mxu0 0
        %1588 = vmatmul.mubr.bf16.gmra.mxu0 %v1441
        %v1589 = vpop.f32.mrf.mxu0
        %v1590 = vadd.f32 0.0, %v1589
        %v1591 = vpop.f32.mrf.mxu0
        %v1592 = vadd.f32 0.0, %v1591
        %v1593 = vpop.f32.mrf.mxu0
        %v1594 = vadd.f32 0.0, %v1593
        %v1595 = vpop.f32.mrf.mxu0
        %v1596 = vadd.f32 0.0, %v1595
        %1597 = vmatprep.mubr.bf16.mxu0 0
        %1598 = vmatmul.mubr.bf16.gmra.mxu0 %v1444
        %v1599 = vpop.f32.mrf.mxu0
        %v1600 = vadd.f32 0.0, %v1599
        %v1601 = vpop.f32.mrf.mxu0
        %v1602 = vadd.f32 0.0, %v1601
        %v1603 = vpop.f32.mrf.mxu0
        %v1604 = vadd.f32 0.0, %v1603
        %v1605 = vpop.f32.mrf.mxu0
        %v1606 = vadd.f32 0.0, %v1605
        %1607 = vmatprep.mubr.bf16.mxu0 0
        %1608 = vmatmul.mubr.bf16.gmra.mxu0 %v1447
        %v1609 = vpop.f32.mrf.mxu0
        %v1610 = vadd.f32 0.0, %v1609
        %v1611 = vpop.f32.mrf.mxu0
        %v1612 = vadd.f32 0.0, %v1611
        %v1613 = vpop.f32.mrf.mxu0
        %v1614 = vadd.f32 0.0, %v1613
        %v1615 = vpop.f32.mrf.mxu0
        %v1616 = vadd.f32 0.0, %v1615
        %1617 = vmatprep.mubr.bf16.mxu0 0
        %1618 = vmatmul.mubr.bf16.gmra.mxu0 %v1450
        %v1619 = vpop.f32.mrf.mxu0
        %v1620 = vadd.f32 0.0, %v1619
        %v1621 = vpop.f32.mrf.mxu0
        %v1622 = vadd.f32 0.0, %v1621
        %v1623 = vpop.f32.mrf.mxu0
        %v1624 = vadd.f32 0.0, %v1623
        %v1625 = vpop.f32.mrf.mxu0
        %v1626 = vadd.f32 0.0, %v1625
        %1627 = vmatprep.mubr.bf16.mxu0 0
        %1628 = vmatmul.mubr.bf16.gmra.mxu0 %v1453
        %v1629 = vpop.f32.mrf.mxu0
        %v1630 = vadd.f32 0.0, %v1629
        %v1631 = vpop.f32.mrf.mxu0
        %v1632 = vadd.f32 0.0, %v1631
        %v1633 = vpop.f32.mrf.mxu0
        %v1634 = vadd.f32 0.0, %v1633
        %v1635 = vpop.f32.mrf.mxu0
        %v1636 = vadd.f32 0.0, %v1635
        %1637 = vmatprep.mubr.bf16.mxu0 0
        %1638 = vmatmul.mubr.bf16.gmra.mxu0 %v1456
        %v1639 = vpop.f32.mrf.mxu0
        %v1640 = vadd.f32 0.0, %v1639
        %v1641 = vpop.f32.mrf.mxu0
        %v1642 = vadd.f32 0.0, %v1641
        %v1643 = vpop.f32.mrf.mxu0
        %v1644 = vadd.f32 0.0, %v1643
        %v1645 = vpop.f32.mrf.mxu0
        %v1646 = vadd.f32 0.0, %v1645
        %1647 = vmatprep.mubr.bf16.mxu0 0
        %1648 = vmatmul.mubr.bf16.gmra.mxu0 %v1459
        %v1649 = vpop.f32.mrf.mxu0
        %v1650 = vadd.f32 0.0, %v1649
        %v1651 = vpop.f32.mrf.mxu0
        %v1652 = vadd.f32 0.0, %v1651
        %v1653 = vpop.f32.mrf.mxu0
        %v1654 = vadd.f32 0.0, %v1653
        %v1655 = vpop.f32.mrf.mxu0
        %v1656 = vadd.f32 0.0, %v1655
        %1657 = vmatprep.mubr.bf16.mxu0 0
        %1658 = vmatmul.mubr.bf16.gmra.mxu0 %v1462
        %v1659 = vpop.f32.mrf.mxu0
        %v1660 = vadd.f32 0.0, %v1659
        %v1661 = vpop.f32.mrf.mxu0
        %v1662 = vadd.f32 0.0, %v1661
        %v1663 = vpop.f32.mrf.mxu0
        %v1664 = vadd.f32 0.0, %v1663
        %v1665 = vpop.f32.mrf.mxu0
        %v1666 = vadd.f32 0.0, %v1665
        %1667 = vmatprep.mubr.bf16.mxu0 0
        %1668 = vmatmul.mubr.bf16.gmra.mxu0 %v1465
        %v1669 = vpop.f32.mrf.mxu0
        %v1670 = vadd.f32 0.0, %v1669
        %v1671 = vpop.f32.mrf.mxu0
        %v1672 = vadd.f32 0.0, %v1671
        %v1673 = vpop.f32.mrf.mxu0
        %v1674 = vadd.f32 0.0, %v1673
        %v1675 = vpop.f32.mrf.mxu0
        %v1676 = vadd.f32 0.0, %v1675
        %1677 = vmatprep.mubr.bf16.mxu0 0
        %1678 = vmatmul.mubr.bf16.gmra.mxu0 %v1468
        %v1679 = vpop.f32.mrf.mxu0
        %v1680 = vadd.f32 0.0, %v1679
        %v1681 = vpop.f32.mrf.mxu0
        %v1682 = vadd.f32 0.0, %v1681
        %v1683 = vpop.f32.mrf.mxu0
        %v1684 = vadd.f32 0.0, %v1683
        %v1685 = vpop.f32.mrf.mxu0
        %v1686 = vadd.f32 0.0, %v1685
        %1687 = vmatprep.mubr.bf16.mxu0 0
        %1688 = vmatmul.mubr.bf16.gmra.mxu0 %v1471
        %v1689 = vpop.f32.mrf.mxu0
        %v1690 = vadd.f32 0.0, %v1689
        %v1691 = vpop.f32.mrf.mxu0
        %v1692 = vadd.f32 0.0, %v1691
        %v1693 = vpop.f32.mrf.mxu0
        %v1694 = vadd.f32 0.0, %v1693
        %v1695 = vpop.f32.mrf.mxu0
        %v1696 = vadd.f32 0.0, %v1695
        %1697 = vmatprep.mubr.bf16.mxu0 0
        %1698 = vmatmul.mubr.bf16.gmra.mxu0 %v1474
        %v1699 = vpop.f32.mrf.mxu0
        %v1700 = vadd.f32 0.0, %v1699
        %v1701 = vpop.f32.mrf.mxu0
        %v1702 = vadd.f32 0.0, %v1701
        %v1703 = vpop.f32.mrf.mxu0
        %v1704 = vadd.f32 0.0, %v1703
        %v1705 = vpop.f32.mrf.mxu0
        %v1706 = vadd.f32 0.0, %v1705
        %1707 = vmatprep.mubr.bf16.mxu0 0
        %1708 = vmatmul.mubr.bf16.gmra.mxu0 %v1477
        %v1709 = vpop.f32.mrf.mxu0
        %v1710 = vadd.f32 0.0, %v1709
        %v1711 = vpop.f32.mrf.mxu0
        %v1712 = vadd.f32 0.0, %v1711
        %v1713 = vpop.f32.mrf.mxu0
        %v1714 = vadd.f32 0.0, %v1713
        %v1715 = vpop.f32.mrf.mxu0
        %v1716 = vadd.f32 0.0, %v1715
        %1717 = vdwg.mxu0
        %v1718 = vadd.f32 %v1078, %v1520
        %v1719 = vadd.f32 %v1080, %v1522
        %v1720 = vadd.f32 %v1082, %v1524
        %v1721 = vadd.f32 %v1084, %v1526
        %v1722 = vadd.f32 %v1088, %v1530
        %v1723 = vadd.f32 %v1090, %v1532
        %v1724 = vadd.f32 %v1092, %v1534
        %v1725 = vadd.f32 %v1094, %v1536
        %v1726 = vadd.f32 %v1098, %v1540
        %v1727 = vadd.f32 %v1100, %v1542
        %v1728 = vadd.f32 %v1102, %v1544
        %v1729 = vadd.f32 %v1104, %v1546
        %v1730 = vadd.f32 %v1108, %v1550
        %v1731 = vadd.f32 %v1110, %v1552
        %v1732 = vadd.f32 %v1112, %v1554
        %v1733 = vadd.f32 %v1114, %v1556
        %v1734 = vadd.f32 %v1118, %v1560
        %v1735 = vadd.f32 %v1120, %v1562
        %v1736 = vadd.f32 %v1122, %v1564
        %v1737 = vadd.f32 %v1124, %v1566
        %v1738 = vadd.f32 %v1128, %v1570
        %v1739 = vadd.f32 %v1130, %v1572
        %v1740 = vadd.f32 %v1132, %v1574
        %v1741 = vadd.f32 %v1134, %v1576
        %v1742 = vadd.f32 %v1138, %v1580
        %v1743 = vadd.f32 %v1140, %v1582
        %v1744 = vadd.f32 %v1142, %v1584
        %v1745 = vadd.f32 %v1144, %v1586
        %v1746 = vadd.f32 %v1148, %v1590
        %v1747 = vadd.f32 %v1150, %v1592
        %v1748 = vadd.f32 %v1152, %v1594
        %v1749 = vadd.f32 %v1154, %v1596
        %v1750 = vadd.f32 %v1158, %v1600
        %v1751 = vadd.f32 %v1160, %v1602
        %v1752 = vadd.f32 %v1162, %v1604
        %v1753 = vadd.f32 %v1164, %v1606
        %v1754 = vadd.f32 %v1168, %v1610
        %v1755 = vadd.f32 %v1170, %v1612
        %v1756 = vadd.f32 %v1172, %v1614
        %v1757 = vadd.f32 %v1174, %v1616
        %v1758 = vadd.f32 %v1178, %v1620
        %v1759 = vadd.f32 %v1180, %v1622
        %v1760 = vadd.f32 %v1182, %v1624
        %v1761 = vadd.f32 %v1184, %v1626
        %v1762 = vadd.f32 %v1188, %v1630
        %v1763 = vadd.f32 %v1190, %v1632
        %v1764 = vadd.f32 %v1192, %v1634
        %v1765 = vadd.f32 %v1194, %v1636
        %v1766 = vadd.f32 %v1198, %v1640
        %v1767 = vadd.f32 %v1200, %v1642
        %v1768 = vadd.f32 %v1202, %v1644
        %v1769 = vadd.f32 %v1204, %v1646
        %v1770 = vadd.f32 %v1208, %v1650
        %v1771 = vadd.f32 %v1210, %v1652
        %v1772 = vadd.f32 %v1212, %v1654
        %v1773 = vadd.f32 %v1214, %v1656
        %v1774 = vadd.f32 %v1218, %v1660
        %v1775 = vadd.f32 %v1220, %v1662
        %v1776 = vadd.f32 %v1222, %v1664
        %v1777 = vadd.f32 %v1224, %v1666
        %v1778 = vadd.f32 %v1228, %v1670
        %v1779 = vadd.f32 %v1230, %v1672
        %v1780 = vadd.f32 %v1232, %v1674
        %v1781 = vadd.f32 %v1234, %v1676
        %v1782 = vadd.f32 %v1238, %v1680
        %v1783 = vadd.f32 %v1240, %v1682
        %v1784 = vadd.f32 %v1242, %v1684
        %v1785 = vadd.f32 %v1244, %v1686
        %v1786 = vadd.f32 %v1248, %v1690
        %v1787 = vadd.f32 %v1250, %v1692
        %v1788 = vadd.f32 %v1252, %v1694
        %v1789 = vadd.f32 %v1254, %v1696
        %v1790 = vadd.f32 %v1258, %v1700
        %v1791 = vadd.f32 %v1260, %v1702
        %v1792 = vadd.f32 %v1262, %v1704
        %v1793 = vadd.f32 %v1264, %v1706
        %v1794 = vadd.f32 %v1268, %v1710
        %v1795 = vadd.f32 %v1270, %v1712
        %v1796 = vadd.f32 %v1272, %v1714
        %v1797 = vadd.f32 %v1274, %v1716
        %v1798 = vld [vmem:[%s388 + $0x3] sm:$0xff]
        %v1799 = vld [vmem:[%s388 + $0xb] sm:$0xff]
        %v1800 = vld [vmem:[%s388 + $0x13] sm:$0xff]
        %v1801 = vld [vmem:[%s388 + $0x1b] sm:$0xff]
        %v1802 = vld [vmem:[%s388 + $0x23] sm:$0xff]
        %v1803 = vld [vmem:[%s388 + $0x33] sm:$0xff]
        %v1804 = vld [vmem:[%s388 + $0x3b] sm:$0xff]
        %v1805 = vld [vmem:[%s388 + $0x43] sm:$0xff]
        %v1806 = vld [vmem:[%s388 + $0x4b] sm:$0xff]
        %v1807 = vld [vmem:[%s388 + $0x53] sm:$0xff]
        %v1808 = vld [vmem:[%s388 + $0x63] sm:$0xff]
        %v1809 = vld [vmem:[%s388 + $0x6b] sm:$0xff]
        %v1810 = vld [vmem:[%s388 + $0x73] sm:$0xff]
        %v1811 = vld [vmem:[%s388 + $0x7b] sm:$0xff]
        %v1812 = vld [vmem:[%s388 + $0x83] sm:$0xff]
        %v1813 = vld [vmem:[%s388 + $0x93] sm:$0xff]
        %v1814 = vld [vmem:[%s388 + $0x9b] sm:$0xff]
        %v1815 = vld [vmem:[%s388 + $0xa3] sm:$0xff]
        %v1816 = vld [vmem:[%s388 + $0xab] sm:$0xff]
        %v1817 = vld [vmem:[%s388 + $0xb3] sm:$0xff]
        %v1818 = vld [vmem:[%s388 + $0xc3] sm:$0xff]
        %v1819 = vld [vmem:[%s388 + $0xcb] sm:$0xff]
        %v1820 = vld [vmem:[%s388 + $0xd3] sm:$0xff]
        %v1821 = vld [vmem:[%s388 + $0xdb] sm:$0xff]
        %v1822 = vld [vmem:[%s388 + $0xe3] sm:$0xff]
        %v1823 = vld [vmem:[%s388 + $0xf3] sm:$0xff]
        %v1824 = vld [vmem:[%s388 + $0xfb] sm:$0xff]
        %v1825 = vld [vmem:[%s388 + $0x103] sm:$0xff]
        %v1826 = vld [vmem:[%s388 + $0x10b] sm:$0xff]
        %v1827 = vld [vmem:[%s388 + $0x113] sm:$0xff]
        %v1828 = vld [vmem:[%s388 + $0x123] sm:$0xff]
        %v1829 = vld [vmem:[%s388 + $0x12b] sm:$0xff]
        %v1830 = vld [vmem:[%s388 + $0x133] sm:$0xff]
        %v1831 = vld [vmem:[%s388 + $0x13b] sm:$0xff]
        %v1832 = vld [vmem:[%s388 + $0x143] sm:$0xff]
        %v1833 = vld [vmem:[%s388 + $0x153] sm:$0xff]
        %v1834 = vld [vmem:[%s388 + $0x15b] sm:$0xff]
        %v1835 = vld [vmem:[%s388 + $0x163] sm:$0xff]
        %v1836 = vld [vmem:[%s388 + $0x16b] sm:$0xff]
        %v1837 = vld [vmem:[%s388 + $0x173] sm:$0xff]
        %v1838 = vpack.c.bf16 %v1799, %v1798
        %v1839 = vpack.c.bf16 %v1801, %v1800
        %v1840 = vpack.c.bf16 %v1803, %v1802
        %v1841 = vpack.c.bf16 %v1805, %v1804
        %v1842 = vpack.c.bf16 %v1807, %v1806
        %v1843 = vpack.c.bf16 %v1809, %v1808
        %v1844 = vpack.c.bf16 %v1811, %v1810
        %v1845 = vpack.c.bf16 %v1813, %v1812
        %v1846 = vpack.c.bf16 %v1815, %v1814
        %v1847 = vpack.c.bf16 %v1817, %v1816
        %v1848 = vpack.c.bf16 %v1819, %v1818
        %v1849 = vpack.c.bf16 %v1821, %v1820
        %v1850 = vpack.c.bf16 %v1823, %v1822
        %v1851 = vpack.c.bf16 %v1825, %v1824
        %v1852 = vpack.c.bf16 %v1827, %v1826
        %v1853 = vpack.c.bf16 %v1829, %v1828
        %v1854 = vpack.c.bf16 %v1831, %v1830
        %v1855 = vpack.c.bf16 %v1833, %v1832
        %v1856 = vpack.c.bf16 %v1835, %v1834
        %v1857 = vpack.c.bf16 %v1837, %v1836
        %s1858 = scalar_lea.vmem %s1, 336
        %v1859 = vld [vmem:[%s1858] sm:$0xff]
        %v1860 = vld [vmem:[%s1858 + $0x8] sm:$0xff]
        %v1861 = vld [vmem:[%s1858 + $0x10] sm:$0xff]
        %v1862 = vld [vmem:[%s1858 + $0x18] sm:$0xff]
        %v1863 = vld [vmem:[%s1858 + $0x20] sm:$0xff]
        %v1864 = vld [vmem:[%s1858 + $0x28] sm:$0xff]
        %v1865 = vld [vmem:[%s1858 + $0x30] sm:$0xff]
        %v1866 = vld [vmem:[%s1858 + $0x38] sm:$0xff]
        %v1867 = vld [vmem:[%s1858 + $0x40] sm:$0xff]
        %v1868 = vld [vmem:[%s1858 + $0x48] sm:$0xff]
        %v1869 = vld [vmem:[%s1858 + $0x50] sm:$0xff]
        %v1870 = vld [vmem:[%s1858 + $0x58] sm:$0xff]
        %v1871 = vld [vmem:[%s1858 + $0x60] sm:$0xff]
        %v1872 = vld [vmem:[%s1858 + $0x68] sm:$0x33]
        %v1887 = vunpack.c.l.b16 %v1859
        %v1888 = vunpack.c.h.b16 %v1859
        %v1889 = vunpack.c.l.b16 %v1860
        %v1890 = vunpack.c.h.b16 %v1860
        %v1891 = vunpack.c.l.b16 %v1861
        %v1892 = vunpack.c.h.b16 %v1861
        %v1893 = vunpack.c.l.b16 %v1862
        %v1894 = vunpack.c.h.b16 %v1862
        %v1895 = vunpack.c.l.b16 %v1863
        %v1896 = vunpack.c.h.b16 %v1863
        %v1897 = vunpack.c.l.b16 %v1864
        %v1898 = vunpack.c.h.b16 %v1864
        %v1899 = vunpack.c.l.b16 %v1865
        %v1900 = vunpack.c.h.b16 %v1865
        %v1901 = vunpack.c.l.b16 %v1866
        %v1902 = vunpack.c.h.b16 %v1866
        %v1903 = vunpack.c.l.b16 %v1867
        %v1904 = vunpack.c.h.b16 %v1867
        %v1905 = vunpack.c.l.b16 %v1868
        %v1906 = vunpack.c.h.b16 %v1868
        %v1907 = vunpack.c.l.b16 %v1869
        %v1908 = vunpack.c.h.b16 %v1869
        %v1909 = vunpack.c.l.b16 %v1870
        %v1910 = vunpack.c.h.b16 %v1870
        %v1911 = vunpack.c.l.b16 %v1871
        %v1912 = vunpack.c.h.b16 %v1871
        %v1913 = vunpack.c.l.b16 %v1872
        %v1914 = vunpack.c.h.b16 %v1872
        %v1915 = vpack.c.b16 %v1889, %v1887
        %v1916 = vpack.c.b16 %v1890, %v1888
        %v1917 = vpack.c.b16 %v1893, %v1891
        %v1918 = vpack.c.b16 %v1894, %v1892
        %v1919 = vpack.c.b16 %v1897, %v1895
        %v1920 = vpack.c.b16 %v1898, %v1896
        %v1921 = vpack.c.b16 %v1901, %v1899
        %v1922 = vpack.c.b16 %v1902, %v1900
        %v1923 = vpack.c.b16 %v1905, %v1903
        %v1924 = vpack.c.b16 %v1906, %v1904
        %v1925 = vpack.c.b16 %v1909, %v1907
        %v1926 = vpack.c.b16 %v1910, %v1908
        %v1927 = vpack.c.b16 %v1913, %v1911
        %v1928 = vpack.c.b16 %v1914, %v1912
        %v1942 = vsel %vm608, %v1838, 0
        %v1945 = vsel %vm608, %v1839, 0
        %v1948 = vsel %vm608, %v1840, 0
        %v1951 = vsel %vm608, %v1841, 0
        %v1954 = vsel %vm608, %v1842, 0
        %v1957 = vsel %vm608, %v1843, 0
        %v1960 = vsel %vm608, %v1844, 0
        %v1963 = vsel %vm608, %v1845, 0
        %v1966 = vsel %vm608, %v1846, 0
        %v1969 = vsel %vm608, %v1847, 0
        %v1972 = vsel %vm608, %v1848, 0
        %v1975 = vsel %vm608, %v1849, 0
        %v1978 = vsel %vm608, %v1850, 0
        %v1981 = vsel %vm608, %v1851, 0
        %v1984 = vsel %vm608, %v1852, 0
        %v1987 = vsel %vm608, %v1853, 0
        %v1990 = vsel %vm608, %v1854, 0
        %v1993 = vsel %vm608, %v1855, 0
        %v1996 = vsel %vm608, %v1856, 0
        %v1999 = vsel %vm608, %v1857, 0
        %v2002 = vsel %vm669, %v1927, 0
        %v2005 = vsel %vm669, %v1928, 0
        %2007 = vmatprep.subr.bf16.mxu0 0
        %2008 = vmatpush1.bf16.msra.mxu0 0
        %2009 = vmatprep.subr.bf16.mxu0 %v2005
        %2010 = vmatpush1.bf16.msra.mxu0 %v2002
        %2011 = vmatprep.subr.bf16.mxu0 %v1926
        %2012 = vmatpush1.bf16.msra.mxu0 %v1925
        %2013 = vmatprep.subr.bf16.mxu0 %v1924
        %2014 = vmatpush1.bf16.msra.mxu0 %v1923
        %2015 = vmatprep.subr.bf16.mxu0 %v1922
        %2016 = vmatpush1.bf16.msra.mxu0 %v1921
        %2017 = vmatprep.subr.bf16.mxu0 %v1920
        %2018 = vmatpush1.bf16.msra.mxu0 %v1919
        %2019 = vmatprep.subr.bf16.mxu0 %v1918
        %2020 = vmatpush1.bf16.msra.mxu0 %v1917
        %2021 = vmatprep.subr.bf16.mxu0 %v1916
        %2022 = vmatpush1.bf16.msra.mxu0 %v1915
        %2023 = vmatprep.subr.bf16.mxu0 0
        %2024 = vmatpush2.bf16.msra.mxu0 0
        %2025 = vmatprep.subr.bf16.mxu0 0
        %2026 = vmatpush2.bf16.msra.mxu0 0
        %2027 = vmatprep.subr.bf16.mxu0 0
        %2028 = vmatpush2.bf16.msra.mxu0 0
        %2029 = vmatprep.subr.bf16.mxu0 0
        %2030 = vmatpush2.bf16.msra.mxu0 0
        %2031 = vmatprep.subr.bf16.mxu0 0
        %2032 = vmatpush2.bf16.msra.mxu0 0
        %2033 = vmatprep.subr.bf16.mxu0 0
        %2034 = vmatpush2.bf16.msra.mxu0 0
        %2035 = vmatprep.subr.bf16.mxu0 0
        %2036 = vmatpush2.bf16.msra.mxu0 0
        %2037 = vmatprep.subr.bf16.mxu0 0
        %2038 = vmatpush2.bf16.msra.mxu0 0
        %2039 = vmatprep.mubr.bf16.mxu0 0
        %2040 = vmatmul.mubr.bf16.gmra.mxu0 %v1942
        %v2041 = vpop.f32.mrf.mxu0
        %v2042 = vadd.f32 0.0, %v2041
        %v2043 = vpop.f32.mrf.mxu0
        %v2044 = vadd.f32 0.0, %v2043
        %v2045 = vpop.f32.mrf.mxu0
        %v2046 = vadd.f32 0.0, %v2045
        %v2047 = vpop.f32.mrf.mxu0
        %v2048 = vadd.f32 0.0, %v2047
        %2049 = vmatprep.mubr.bf16.mxu0 0
        %2050 = vmatmul.mubr.bf16.gmra.mxu0 %v1945
        %v2051 = vpop.f32.mrf.mxu0
        %v2052 = vadd.f32 0.0, %v2051
        %v2053 = vpop.f32.mrf.mxu0
        %v2054 = vadd.f32 0.0, %v2053
        %v2055 = vpop.f32.mrf.mxu0
        %v2056 = vadd.f32 0.0, %v2055
        %v2057 = vpop.f32.mrf.mxu0
        %v2058 = vadd.f32 0.0, %v2057
        %2059 = vmatprep.mubr.bf16.mxu0 0
        %2060 = vmatmul.mubr.bf16.gmra.mxu0 %v1948
        %v2061 = vpop.f32.mrf.mxu0
        %v2062 = vadd.f32 0.0, %v2061
        %v2063 = vpop.f32.mrf.mxu0
        %v2064 = vadd.f32 0.0, %v2063
        %v2065 = vpop.f32.mrf.mxu0
        %v2066 = vadd.f32 0.0, %v2065
        %v2067 = vpop.f32.mrf.mxu0
        %v2068 = vadd.f32 0.0, %v2067
        %2069 = vmatprep.mubr.bf16.mxu0 0
        %2070 = vmatmul.mubr.bf16.gmra.mxu0 %v1951
        %v2071 = vpop.f32.mrf.mxu0
        %v2072 = vadd.f32 0.0, %v2071
        %v2073 = vpop.f32.mrf.mxu0
        %v2074 = vadd.f32 0.0, %v2073
        %v2075 = vpop.f32.mrf.mxu0
        %v2076 = vadd.f32 0.0, %v2075
        %v2077 = vpop.f32.mrf.mxu0
        %v2078 = vadd.f32 0.0, %v2077
        %2079 = vmatprep.mubr.bf16.mxu0 0
        %2080 = vmatmul.mubr.bf16.gmra.mxu0 %v1954
        %v2081 = vpop.f32.mrf.mxu0
        %v2082 = vadd.f32 0.0, %v2081
        %v2083 = vpop.f32.mrf.mxu0
        %v2084 = vadd.f32 0.0, %v2083
        %v2085 = vpop.f32.mrf.mxu0
        %v2086 = vadd.f32 0.0, %v2085
        %v2087 = vpop.f32.mrf.mxu0
        %v2088 = vadd.f32 0.0, %v2087
        %2089 = vmatprep.mubr.bf16.mxu0 0
        %2090 = vmatmul.mubr.bf16.gmra.mxu0 %v1957
        %v2091 = vpop.f32.mrf.mxu0
        %v2092 = vadd.f32 0.0, %v2091
        %v2093 = vpop.f32.mrf.mxu0
        %v2094 = vadd.f32 0.0, %v2093
        %v2095 = vpop.f32.mrf.mxu0
        %v2096 = vadd.f32 0.0, %v2095
        %v2097 = vpop.f32.mrf.mxu0
        %v2098 = vadd.f32 0.0, %v2097
        %2099 = vmatprep.mubr.bf16.mxu0 0
        %2100 = vmatmul.mubr.bf16.gmra.mxu0 %v1960
        %v2101 = vpop.f32.mrf.mxu0
        %v2102 = vadd.f32 0.0, %v2101
        %v2103 = vpop.f32.mrf.mxu0
        %v2104 = vadd.f32 0.0, %v2103
        %v2105 = vpop.f32.mrf.mxu0
        %v2106 = vadd.f32 0.0, %v2105
        %v2107 = vpop.f32.mrf.mxu0
        %v2108 = vadd.f32 0.0, %v2107
        %2109 = vmatprep.mubr.bf16.mxu0 0
        %2110 = vmatmul.mubr.bf16.gmra.mxu0 %v1963
        %v2111 = vpop.f32.mrf.mxu0
        %v2112 = vadd.f32 0.0, %v2111
        %v2113 = vpop.f32.mrf.mxu0
        %v2114 = vadd.f32 0.0, %v2113
        %v2115 = vpop.f32.mrf.mxu0
        %v2116 = vadd.f32 0.0, %v2115
        %v2117 = vpop.f32.mrf.mxu0
        %v2118 = vadd.f32 0.0, %v2117
        %2119 = vmatprep.mubr.bf16.mxu0 0
        %2120 = vmatmul.mubr.bf16.gmra.mxu0 %v1966
        %v2121 = vpop.f32.mrf.mxu0
        %v2122 = vadd.f32 0.0, %v2121
        %v2123 = vpop.f32.mrf.mxu0
        %v2124 = vadd.f32 0.0, %v2123
        %v2125 = vpop.f32.mrf.mxu0
        %v2126 = vadd.f32 0.0, %v2125
        %v2127 = vpop.f32.mrf.mxu0
        %v2128 = vadd.f32 0.0, %v2127
        %2129 = vmatprep.mubr.bf16.mxu0 0
        %2130 = vmatmul.mubr.bf16.gmra.mxu0 %v1969
        %v2131 = vpop.f32.mrf.mxu0
        %v2132 = vadd.f32 0.0, %v2131
        %v2133 = vpop.f32.mrf.mxu0
        %v2134 = vadd.f32 0.0, %v2133
        %v2135 = vpop.f32.mrf.mxu0
        %v2136 = vadd.f32 0.0, %v2135
        %v2137 = vpop.f32.mrf.mxu0
        %v2138 = vadd.f32 0.0, %v2137
        %2139 = vmatprep.mubr.bf16.mxu0 0
        %2140 = vmatmul.mubr.bf16.gmra.mxu0 %v1972
        %v2141 = vpop.f32.mrf.mxu0
        %v2142 = vadd.f32 0.0, %v2141
        %v2143 = vpop.f32.mrf.mxu0
        %v2144 = vadd.f32 0.0, %v2143
        %v2145 = vpop.f32.mrf.mxu0
        %v2146 = vadd.f32 0.0, %v2145
        %v2147 = vpop.f32.mrf.mxu0
        %v2148 = vadd.f32 0.0, %v2147
        %2149 = vmatprep.mubr.bf16.mxu0 0
        %2150 = vmatmul.mubr.bf16.gmra.mxu0 %v1975
        %v2151 = vpop.f32.mrf.mxu0
        %v2152 = vadd.f32 0.0, %v2151
        %v2153 = vpop.f32.mrf.mxu0
        %v2154 = vadd.f32 0.0, %v2153
        %v2155 = vpop.f32.mrf.mxu0
        %v2156 = vadd.f32 0.0, %v2155
        %v2157 = vpop.f32.mrf.mxu0
        %v2158 = vadd.f32 0.0, %v2157
        %2159 = vmatprep.mubr.bf16.mxu0 0
        %2160 = vmatmul.mubr.bf16.gmra.mxu0 %v1978
        %v2161 = vpop.f32.mrf.mxu0
        %v2162 = vadd.f32 0.0, %v2161
        %v2163 = vpop.f32.mrf.mxu0
        %v2164 = vadd.f32 0.0, %v2163
        %v2165 = vpop.f32.mrf.mxu0
        %v2166 = vadd.f32 0.0, %v2165
        %v2167 = vpop.f32.mrf.mxu0
        %v2168 = vadd.f32 0.0, %v2167
        %2169 = vmatprep.mubr.bf16.mxu0 0
        %2170 = vmatmul.mubr.bf16.gmra.mxu0 %v1981
        %v2171 = vpop.f32.mrf.mxu0
        %v2172 = vadd.f32 0.0, %v2171
        %v2173 = vpop.f32.mrf.mxu0
        %v2174 = vadd.f32 0.0, %v2173
        %v2175 = vpop.f32.mrf.mxu0
        %v2176 = vadd.f32 0.0, %v2175
        %v2177 = vpop.f32.mrf.mxu0
        %v2178 = vadd.f32 0.0, %v2177
        %2179 = vmatprep.mubr.bf16.mxu0 0
        %2180 = vmatmul.mubr.bf16.gmra.mxu0 %v1984
        %v2181 = vpop.f32.mrf.mxu0
        %v2182 = vadd.f32 0.0, %v2181
        %v2183 = vpop.f32.mrf.mxu0
        %v2184 = vadd.f32 0.0, %v2183
        %v2185 = vpop.f32.mrf.mxu0
        %v2186 = vadd.f32 0.0, %v2185
        %v2187 = vpop.f32.mrf.mxu0
        %v2188 = vadd.f32 0.0, %v2187
        %2189 = vmatprep.mubr.bf16.mxu0 0
        %2190 = vmatmul.mubr.bf16.gmra.mxu0 %v1987
        %v2191 = vpop.f32.mrf.mxu0
        %v2192 = vadd.f32 0.0, %v2191
        %v2193 = vpop.f32.mrf.mxu0
        %v2194 = vadd.f32 0.0, %v2193
        %v2195 = vpop.f32.mrf.mxu0
        %v2196 = vadd.f32 0.0, %v2195
        %v2197 = vpop.f32.mrf.mxu0
        %v2198 = vadd.f32 0.0, %v2197
        %2199 = vmatprep.mubr.bf16.mxu0 0
        %2200 = vmatmul.mubr.bf16.gmra.mxu0 %v1990
        %v2201 = vpop.f32.mrf.mxu0
        %v2202 = vadd.f32 0.0, %v2201
        %v2203 = vpop.f32.mrf.mxu0
        %v2204 = vadd.f32 0.0, %v2203
        %v2205 = vpop.f32.mrf.mxu0
        %v2206 = vadd.f32 0.0, %v2205
        %v2207 = vpop.f32.mrf.mxu0
        %v2208 = vadd.f32 0.0, %v2207
        %2209 = vmatprep.mubr.bf16.mxu0 0
        %2210 = vmatmul.mubr.bf16.gmra.mxu0 %v1993
        %v2211 = vpop.f32.mrf.mxu0
        %v2212 = vadd.f32 0.0, %v2211
        %v2213 = vpop.f32.mrf.mxu0
        %v2214 = vadd.f32 0.0, %v2213
        %v2215 = vpop.f32.mrf.mxu0
        %v2216 = vadd.f32 0.0, %v2215
        %v2217 = vpop.f32.mrf.mxu0
        %v2218 = vadd.f32 0.0, %v2217
        %2219 = vmatprep.mubr.bf16.mxu0 0
        %2220 = vmatmul.mubr.bf16.gmra.mxu0 %v1996
        %v2221 = vpop.f32.mrf.mxu0
        %v2222 = vadd.f32 0.0, %v2221
        %v2223 = vpop.f32.mrf.mxu0
        %v2224 = vadd.f32 0.0, %v2223
        %v2225 = vpop.f32.mrf.mxu0
        %v2226 = vadd.f32 0.0, %v2225
        %v2227 = vpop.f32.mrf.mxu0
        %v2228 = vadd.f32 0.0, %v2227
        %2229 = vmatprep.mubr.bf16.mxu0 0
        %2230 = vmatmul.mubr.bf16.gmra.mxu0 %v1999
        %v2231 = vpop.f32.mrf.mxu0
        %v2232 = vadd.f32 0.0, %v2231
        %v2233 = vpop.f32.mrf.mxu0
        %v2234 = vadd.f32 0.0, %v2233
        %v2235 = vpop.f32.mrf.mxu0
        %v2236 = vadd.f32 0.0, %v2235
        %v2237 = vpop.f32.mrf.mxu0
        %v2238 = vadd.f32 0.0, %v2237
        %2239 = vdwg.mxu0
        %v2240 = vadd.f32 %v1718, %v2042
        %v2241 = vadd.f32 %v1719, %v2044
        %v2242 = vadd.f32 %v1720, %v2046
        %v2243 = vadd.f32 %v1721, %v2048
        %v2244 = vadd.f32 %v1722, %v2052
        %v2245 = vadd.f32 %v1723, %v2054
        %v2246 = vadd.f32 %v1724, %v2056
        %v2247 = vadd.f32 %v1725, %v2058
        %v2248 = vadd.f32 %v1726, %v2062
        %v2249 = vadd.f32 %v1727, %v2064
        %v2250 = vadd.f32 %v1728, %v2066
        %v2251 = vadd.f32 %v1729, %v2068
        %v2252 = vadd.f32 %v1730, %v2072
        %v2253 = vadd.f32 %v1731, %v2074
        %v2254 = vadd.f32 %v1732, %v2076
        %v2255 = vadd.f32 %v1733, %v2078
        %v2256 = vadd.f32 %v1734, %v2082
        %v2257 = vadd.f32 %v1735, %v2084
        %v2258 = vadd.f32 %v1736, %v2086
        %v2259 = vadd.f32 %v1737, %v2088
        %v2260 = vadd.f32 %v1738, %v2092
        %v2261 = vadd.f32 %v1739, %v2094
        %v2262 = vadd.f32 %v1740, %v2096
        %v2263 = vadd.f32 %v1741, %v2098
        %v2264 = vadd.f32 %v1742, %v2102
        %v2265 = vadd.f32 %v1743, %v2104
        %v2266 = vadd.f32 %v1744, %v2106
        %v2267 = vadd.f32 %v1745, %v2108
        %v2268 = vadd.f32 %v1746, %v2112
        %v2269 = vadd.f32 %v1747, %v2114
        %v2270 = vadd.f32 %v1748, %v2116
        %v2271 = vadd.f32 %v1749, %v2118
        %v2272 = vadd.f32 %v1750, %v2122
        %v2273 = vadd.f32 %v1751, %v2124
        %v2274 = vadd.f32 %v1752, %v2126
        %v2275 = vadd.f32 %v1753, %v2128
        %v2276 = vadd.f32 %v1754, %v2132
        %v2277 = vadd.f32 %v1755, %v2134
        %v2278 = vadd.f32 %v1756, %v2136
        %v2279 = vadd.f32 %v1757, %v2138
        %v2280 = vadd.f32 %v1758, %v2142
        %v2281 = vadd.f32 %v1759, %v2144
        %v2282 = vadd.f32 %v1760, %v2146
        %v2283 = vadd.f32 %v1761, %v2148
        %v2284 = vadd.f32 %v1762, %v2152
        %v2285 = vadd.f32 %v1763, %v2154
        %v2286 = vadd.f32 %v1764, %v2156
        %v2287 = vadd.f32 %v1765, %v2158
        %v2288 = vadd.f32 %v1766, %v2162
        %v2289 = vadd.f32 %v1767, %v2164
        %v2290 = vadd.f32 %v1768, %v2166
        %v2291 = vadd.f32 %v1769, %v2168
        %v2292 = vadd.f32 %v1770, %v2172
        %v2293 = vadd.f32 %v1771, %v2174
        %v2294 = vadd.f32 %v1772, %v2176
        %v2295 = vadd.f32 %v1773, %v2178
        %v2296 = vadd.f32 %v1774, %v2182
        %v2297 = vadd.f32 %v1775, %v2184
        %v2298 = vadd.f32 %v1776, %v2186
        %v2299 = vadd.f32 %v1777, %v2188
        %v2300 = vadd.f32 %v1778, %v2192
        %v2301 = vadd.f32 %v1779, %v2194
        %v2302 = vadd.f32 %v1780, %v2196
        %v2303 = vadd.f32 %v1781, %v2198
        %v2304 = vadd.f32 %v1782, %v2202
        %v2305 = vadd.f32 %v1783, %v2204
        %v2306 = vadd.f32 %v1784, %v2206
        %v2307 = vadd.f32 %v1785, %v2208
        %v2308 = vadd.f32 %v1786, %v2212
        %v2309 = vadd.f32 %v1787, %v2214
        %v2310 = vadd.f32 %v1788, %v2216
        %v2311 = vadd.f32 %v1789, %v2218
        %v2312 = vadd.f32 %v1790, %v2222
        %v2313 = vadd.f32 %v1791, %v2224
        %v2314 = vadd.f32 %v1792, %v2226
        %v2315 = vadd.f32 %v1793, %v2228
        %v2316 = vadd.f32 %v1794, %v2232
        %v2317 = vadd.f32 %v1795, %v2234
        %v2318 = vadd.f32 %v1796, %v2236
        %v2319 = vadd.f32 %v1797, %v2238
        %v2320 = vld [vmem:[%s388 + $0x4] sm:$0xff]
        %v2321 = vld [vmem:[%s388 + $0xc] sm:$0xff]
        %v2322 = vld [vmem:[%s388 + $0x14] sm:$0xff]
        %v2323 = vld [vmem:[%s388 + $0x1c] sm:$0xff]
        %v2324 = vld [vmem:[%s388 + $0x24] sm:$0xff]
        %v2325 = vld [vmem:[%s388 + $0x34] sm:$0xff]
        %v2326 = vld [vmem:[%s388 + $0x3c] sm:$0xff]
        %v2327 = vld [vmem:[%s388 + $0x44] sm:$0xff]
        %v2328 = vld [vmem:[%s388 + $0x4c] sm:$0xff]
        %v2329 = vld [vmem:[%s388 + $0x54] sm:$0xff]
        %v2330 = vld [vmem:[%s388 + $0x64] sm:$0xff]
        %v2331 = vld [vmem:[%s388 + $0x6c] sm:$0xff]
        %v2332 = vld [vmem:[%s388 + $0x74] sm:$0xff]
        %v2333 = vld [vmem:[%s388 + $0x7c] sm:$0xff]
        %v2334 = vld [vmem:[%s388 + $0x84] sm:$0xff]
        %v2335 = vld [vmem:[%s388 + $0x94] sm:$0xff]
        %v2336 = vld [vmem:[%s388 + $0x9c] sm:$0xff]
        %v2337 = vld [vmem:[%s388 + $0xa4] sm:$0xff]
        %v2338 = vld [vmem:[%s388 + $0xac] sm:$0xff]
        %v2339 = vld [vmem:[%s388 + $0xb4] sm:$0xff]
        %v2340 = vld [vmem:[%s388 + $0xc4] sm:$0xff]
        %v2341 = vld [vmem:[%s388 + $0xcc] sm:$0xff]
        %v2342 = vld [vmem:[%s388 + $0xd4] sm:$0xff]
        %v2343 = vld [vmem:[%s388 + $0xdc] sm:$0xff]
        %v2344 = vld [vmem:[%s388 + $0xe4] sm:$0xff]
        %v2345 = vld [vmem:[%s388 + $0xf4] sm:$0xff]
        %v2346 = vld [vmem:[%s388 + $0xfc] sm:$0xff]
        %v2347 = vld [vmem:[%s388 + $0x104] sm:$0xff]
        %v2348 = vld [vmem:[%s388 + $0x10c] sm:$0xff]
        %v2349 = vld [vmem:[%s388 + $0x114] sm:$0xff]
        %v2350 = vld [vmem:[%s388 + $0x124] sm:$0xff]
        %v2351 = vld [vmem:[%s388 + $0x12c] sm:$0xff]
        %v2352 = vld [vmem:[%s388 + $0x134] sm:$0xff]
        %v2353 = vld [vmem:[%s388 + $0x13c] sm:$0xff]
        %v2354 = vld [vmem:[%s388 + $0x144] sm:$0xff]
        %v2355 = vld [vmem:[%s388 + $0x154] sm:$0xff]
        %v2356 = vld [vmem:[%s388 + $0x15c] sm:$0xff]
        %v2357 = vld [vmem:[%s388 + $0x164] sm:$0xff]
        %v2358 = vld [vmem:[%s388 + $0x16c] sm:$0xff]
        %v2359 = vld [vmem:[%s388 + $0x174] sm:$0xff]
        %v2360 = vpack.c.bf16 %v2321, %v2320
        %v2361 = vpack.c.bf16 %v2323, %v2322
        %v2362 = vpack.c.bf16 %v2325, %v2324
        %v2363 = vpack.c.bf16 %v2327, %v2326
        %v2364 = vpack.c.bf16 %v2329, %v2328
        %v2365 = vpack.c.bf16 %v2331, %v2330
        %v2366 = vpack.c.bf16 %v2333, %v2332
        %v2367 = vpack.c.bf16 %v2335, %v2334
        %v2368 = vpack.c.bf16 %v2337, %v2336
        %v2369 = vpack.c.bf16 %v2339, %v2338
        %v2370 = vpack.c.bf16 %v2341, %v2340
        %v2371 = vpack.c.bf16 %v2343, %v2342
        %v2372 = vpack.c.bf16 %v2345, %v2344
        %v2373 = vpack.c.bf16 %v2347, %v2346
        %v2374 = vpack.c.bf16 %v2349, %v2348
        %v2375 = vpack.c.bf16 %v2351, %v2350
        %v2376 = vpack.c.bf16 %v2353, %v2352
        %v2377 = vpack.c.bf16 %v2355, %v2354
        %v2378 = vpack.c.bf16 %v2357, %v2356
        %v2379 = vpack.c.bf16 %v2359, %v2358
        %s2380 = scalar_lea.vmem %s1, 448
        %v2381 = vld [vmem:[%s2380] sm:$0xff]
        %v2382 = vld [vmem:[%s2380 + $0x8] sm:$0xff]
        %v2383 = vld [vmem:[%s2380 + $0x10] sm:$0xff]
        %v2384 = vld [vmem:[%s2380 + $0x18] sm:$0xff]
        %v2385 = vld [vmem:[%s2380 + $0x20] sm:$0xff]
        %v2386 = vld [vmem:[%s2380 + $0x28] sm:$0xff]
        %v2387 = vld [vmem:[%s2380 + $0x30] sm:$0xff]
        %v2388 = vld [vmem:[%s2380 + $0x38] sm:$0xff]
        %v2389 = vld [vmem:[%s2380 + $0x40] sm:$0xff]
        %v2390 = vld [vmem:[%s2380 + $0x48] sm:$0xff]
        %v2391 = vld [vmem:[%s2380 + $0x50] sm:$0xff]
        %v2392 = vld [vmem:[%s2380 + $0x58] sm:$0xff]
        %v2393 = vld [vmem:[%s2380 + $0x60] sm:$0xff]
        %v2394 = vld [vmem:[%s2380 + $0x68] sm:$0x33]
        %v2409 = vunpack.c.l.b16 %v2381
        %v2410 = vunpack.c.h.b16 %v2381
        %v2411 = vunpack.c.l.b16 %v2382
        %v2412 = vunpack.c.h.b16 %v2382
        %v2413 = vunpack.c.l.b16 %v2383
        %v2414 = vunpack.c.h.b16 %v2383
        %v2415 = vunpack.c.l.b16 %v2384
        %v2416 = vunpack.c.h.b16 %v2384
        %v2417 = vunpack.c.l.b16 %v2385
        %v2418 = vunpack.c.h.b16 %v2385
        %v2419 = vunpack.c.l.b16 %v2386
        %v2420 = vunpack.c.h.b16 %v2386
        %v2421 = vunpack.c.l.b16 %v2387
        %v2422 = vunpack.c.h.b16 %v2387
        %v2423 = vunpack.c.l.b16 %v2388
        %v2424 = vunpack.c.h.b16 %v2388
        %v2425 = vunpack.c.l.b16 %v2389
        %v2426 = vunpack.c.h.b16 %v2389
        %v2427 = vunpack.c.l.b16 %v2390
        %v2428 = vunpack.c.h.b16 %v2390
        %v2429 = vunpack.c.l.b16 %v2391
        %v2430 = vunpack.c.h.b16 %v2391
        %v2431 = vunpack.c.l.b16 %v2392
        %v2432 = vunpack.c.h.b16 %v2392
        %v2433 = vunpack.c.l.b16 %v2393
        %v2434 = vunpack.c.h.b16 %v2393
        %v2435 = vunpack.c.l.b16 %v2394
        %v2436 = vunpack.c.h.b16 %v2394
        %v2437 = vpack.c.b16 %v2411, %v2409
        %v2438 = vpack.c.b16 %v2412, %v2410
        %v2439 = vpack.c.b16 %v2415, %v2413
        %v2440 = vpack.c.b16 %v2416, %v2414
        %v2441 = vpack.c.b16 %v2419, %v2417
        %v2442 = vpack.c.b16 %v2420, %v2418
        %v2443 = vpack.c.b16 %v2423, %v2421
        %v2444 = vpack.c.b16 %v2424, %v2422
        %v2445 = vpack.c.b16 %v2427, %v2425
        %v2446 = vpack.c.b16 %v2428, %v2426
        %v2447 = vpack.c.b16 %v2431, %v2429
        %v2448 = vpack.c.b16 %v2432, %v2430
        %v2449 = vpack.c.b16 %v2435, %v2433
        %v2450 = vpack.c.b16 %v2436, %v2434
        %v2464 = vsel %vm608, %v2360, 0
        %v2467 = vsel %vm608, %v2361, 0
        %v2470 = vsel %vm608, %v2362, 0
        %v2473 = vsel %vm608, %v2363, 0
        %v2476 = vsel %vm608, %v2364, 0
        %v2479 = vsel %vm608, %v2365, 0
        %v2482 = vsel %vm608, %v2366, 0
        %v2485 = vsel %vm608, %v2367, 0
        %v2488 = vsel %vm608, %v2368, 0
        %v2491 = vsel %vm608, %v2369, 0
        %v2494 = vsel %vm608, %v2370, 0
        %v2497 = vsel %vm608, %v2371, 0
        %v2500 = vsel %vm608, %v2372, 0
        %v2503 = vsel %vm608, %v2373, 0
        %v2506 = vsel %vm608, %v2374, 0
        %v2509 = vsel %vm608, %v2375, 0
        %v2512 = vsel %vm608, %v2376, 0
        %v2515 = vsel %vm608, %v2377, 0
        %v2518 = vsel %vm608, %v2378, 0
        %v2521 = vsel %vm608, %v2379, 0
        %v2524 = vsel %vm669, %v2449, 0
        %v2527 = vsel %vm669, %v2450, 0
        %2529 = vmatprep.subr.bf16.mxu0 0
        %2530 = vmatpush1.bf16.msra.mxu0 0
        %2531 = vmatprep.subr.bf16.mxu0 %v2527
        %2532 = vmatpush1.bf16.msra.mxu0 %v2524
        %2533 = vmatprep.subr.bf16.mxu0 %v2448
        %2534 = vmatpush1.bf16.msra.mxu0 %v2447
        %2535 = vmatprep.subr.bf16.mxu0 %v2446
        %2536 = vmatpush1.bf16.msra.mxu0 %v2445
        %2537 = vmatprep.subr.bf16.mxu0 %v2444
        %2538 = vmatpush1.bf16.msra.mxu0 %v2443
        %2539 = vmatprep.subr.bf16.mxu0 %v2442
        %2540 = vmatpush1.bf16.msra.mxu0 %v2441
        %2541 = vmatprep.subr.bf16.mxu0 %v2440
        %2542 = vmatpush1.bf16.msra.mxu0 %v2439
        %2543 = vmatprep.subr.bf16.mxu0 %v2438
        %2544 = vmatpush1.bf16.msra.mxu0 %v2437
        %2545 = vmatprep.subr.bf16.mxu0 0
        %2546 = vmatpush2.bf16.msra.mxu0 0
        %2547 = vmatprep.subr.bf16.mxu0 0
        %2548 = vmatpush2.bf16.msra.mxu0 0
        %2549 = vmatprep.subr.bf16.mxu0 0
        %2550 = vmatpush2.bf16.msra.mxu0 0
        %2551 = vmatprep.subr.bf16.mxu0 0
        %2552 = vmatpush2.bf16.msra.mxu0 0
        %2553 = vmatprep.subr.bf16.mxu0 0
        %2554 = vmatpush2.bf16.msra.mxu0 0
        %2555 = vmatprep.subr.bf16.mxu0 0
        %2556 = vmatpush2.bf16.msra.mxu0 0
        %2557 = vmatprep.subr.bf16.mxu0 0
        %2558 = vmatpush2.bf16.msra.mxu0 0
        %2559 = vmatprep.subr.bf16.mxu0 0
        %2560 = vmatpush2.bf16.msra.mxu0 0
        %2561 = vmatprep.mubr.bf16.mxu0 0
        %2562 = vmatmul.mubr.bf16.gmra.mxu0 %v2464
        %v2563 = vpop.f32.mrf.mxu0
        %v2564 = vadd.f32 0.0, %v2563
        %v2565 = vpop.f32.mrf.mxu0
        %v2566 = vadd.f32 0.0, %v2565
        %v2567 = vpop.f32.mrf.mxu0
        %v2568 = vadd.f32 0.0, %v2567
        %v2569 = vpop.f32.mrf.mxu0
        %v2570 = vadd.f32 0.0, %v2569
        %2571 = vmatprep.mubr.bf16.mxu0 0
        %2572 = vmatmul.mubr.bf16.gmra.mxu0 %v2467
        %v2573 = vpop.f32.mrf.mxu0
        %v2574 = vadd.f32 0.0, %v2573
        %v2575 = vpop.f32.mrf.mxu0
        %v2576 = vadd.f32 0.0, %v2575
        %v2577 = vpop.f32.mrf.mxu0
        %v2578 = vadd.f32 0.0, %v2577
        %v2579 = vpop.f32.mrf.mxu0
        %v2580 = vadd.f32 0.0, %v2579
        %2581 = vmatprep.mubr.bf16.mxu0 0
        %2582 = vmatmul.mubr.bf16.gmra.mxu0 %v2470
        %v2583 = vpop.f32.mrf.mxu0
        %v2584 = vadd.f32 0.0, %v2583
        %v2585 = vpop.f32.mrf.mxu0
        %v2586 = vadd.f32 0.0, %v2585
        %v2587 = vpop.f32.mrf.mxu0
        %v2588 = vadd.f32 0.0, %v2587
        %v2589 = vpop.f32.mrf.mxu0
        %v2590 = vadd.f32 0.0, %v2589
        %2591 = vmatprep.mubr.bf16.mxu0 0
        %2592 = vmatmul.mubr.bf16.gmra.mxu0 %v2473
        %v2593 = vpop.f32.mrf.mxu0
        %v2594 = vadd.f32 0.0, %v2593
        %v2595 = vpop.f32.mrf.mxu0
        %v2596 = vadd.f32 0.0, %v2595
        %v2597 = vpop.f32.mrf.mxu0
        %v2598 = vadd.f32 0.0, %v2597
        %v2599 = vpop.f32.mrf.mxu0
        %v2600 = vadd.f32 0.0, %v2599
        %2601 = vmatprep.mubr.bf16.mxu0 0
        %2602 = vmatmul.mubr.bf16.gmra.mxu0 %v2476
        %v2603 = vpop.f32.mrf.mxu0
        %v2604 = vadd.f32 0.0, %v2603
        %v2605 = vpop.f32.mrf.mxu0
        %v2606 = vadd.f32 0.0, %v2605
        %v2607 = vpop.f32.mrf.mxu0
        %v2608 = vadd.f32 0.0, %v2607
        %v2609 = vpop.f32.mrf.mxu0
        %v2610 = vadd.f32 0.0, %v2609
        %2611 = vmatprep.mubr.bf16.mxu0 0
        %2612 = vmatmul.mubr.bf16.gmra.mxu0 %v2479
        %v2613 = vpop.f32.mrf.mxu0
        %v2614 = vadd.f32 0.0, %v2613
        %v2615 = vpop.f32.mrf.mxu0
        %v2616 = vadd.f32 0.0, %v2615
        %v2617 = vpop.f32.mrf.mxu0
        %v2618 = vadd.f32 0.0, %v2617
        %v2619 = vpop.f32.mrf.mxu0
        %v2620 = vadd.f32 0.0, %v2619
        %2621 = vmatprep.mubr.bf16.mxu0 0
        %2622 = vmatmul.mubr.bf16.gmra.mxu0 %v2482
        %v2623 = vpop.f32.mrf.mxu0
        %v2624 = vadd.f32 0.0, %v2623
        %v2625 = vpop.f32.mrf.mxu0
        %v2626 = vadd.f32 0.0, %v2625
        %v2627 = vpop.f32.mrf.mxu0
        %v2628 = vadd.f32 0.0, %v2627
        %v2629 = vpop.f32.mrf.mxu0
        %v2630 = vadd.f32 0.0, %v2629
        %2631 = vmatprep.mubr.bf16.mxu0 0
        %2632 = vmatmul.mubr.bf16.gmra.mxu0 %v2485
        %v2633 = vpop.f32.mrf.mxu0
        %v2634 = vadd.f32 0.0, %v2633
        %v2635 = vpop.f32.mrf.mxu0
        %v2636 = vadd.f32 0.0, %v2635
        %v2637 = vpop.f32.mrf.mxu0
        %v2638 = vadd.f32 0.0, %v2637
        %v2639 = vpop.f32.mrf.mxu0
        %v2640 = vadd.f32 0.0, %v2639
        %2641 = vmatprep.mubr.bf16.mxu0 0
        %2642 = vmatmul.mubr.bf16.gmra.mxu0 %v2488
        %v2643 = vpop.f32.mrf.mxu0
        %v2644 = vadd.f32 0.0, %v2643
        %v2645 = vpop.f32.mrf.mxu0
        %v2646 = vadd.f32 0.0, %v2645
        %v2647 = vpop.f32.mrf.mxu0
        %v2648 = vadd.f32 0.0, %v2647
        %v2649 = vpop.f32.mrf.mxu0
        %v2650 = vadd.f32 0.0, %v2649
        %2651 = vmatprep.mubr.bf16.mxu0 0
        %2652 = vmatmul.mubr.bf16.gmra.mxu0 %v2491
        %v2653 = vpop.f32.mrf.mxu0
        %v2654 = vadd.f32 0.0, %v2653
        %v2655 = vpop.f32.mrf.mxu0
        %v2656 = vadd.f32 0.0, %v2655
        %v2657 = vpop.f32.mrf.mxu0
        %v2658 = vadd.f32 0.0, %v2657
        %v2659 = vpop.f32.mrf.mxu0
        %v2660 = vadd.f32 0.0, %v2659
        %2661 = vmatprep.mubr.bf16.mxu0 0
        %2662 = vmatmul.mubr.bf16.gmra.mxu0 %v2494
        %v2663 = vpop.f32.mrf.mxu0
        %v2664 = vadd.f32 0.0, %v2663
        %v2665 = vpop.f32.mrf.mxu0
        %v2666 = vadd.f32 0.0, %v2665
        %v2667 = vpop.f32.mrf.mxu0
        %v2668 = vadd.f32 0.0, %v2667
        %v2669 = vpop.f32.mrf.mxu0
        %v2670 = vadd.f32 0.0, %v2669
        %2671 = vmatprep.mubr.bf16.mxu0 0
        %2672 = vmatmul.mubr.bf16.gmra.mxu0 %v2497
        %v2673 = vpop.f32.mrf.mxu0
        %v2674 = vadd.f32 0.0, %v2673
        %v2675 = vpop.f32.mrf.mxu0
        %v2676 = vadd.f32 0.0, %v2675
        %v2677 = vpop.f32.mrf.mxu0
        %v2678 = vadd.f32 0.0, %v2677
        %v2679 = vpop.f32.mrf.mxu0
        %v2680 = vadd.f32 0.0, %v2679
        %2681 = vmatprep.mubr.bf16.mxu0 0
        %2682 = vmatmul.mubr.bf16.gmra.mxu0 %v2500
        %v2683 = vpop.f32.mrf.mxu0
        %v2684 = vadd.f32 0.0, %v2683
        %v2685 = vpop.f32.mrf.mxu0
        %v2686 = vadd.f32 0.0, %v2685
        %v2687 = vpop.f32.mrf.mxu0
        %v2688 = vadd.f32 0.0, %v2687
        %v2689 = vpop.f32.mrf.mxu0
        %v2690 = vadd.f32 0.0, %v2689
        %2691 = vmatprep.mubr.bf16.mxu0 0
        %2692 = vmatmul.mubr.bf16.gmra.mxu0 %v2503
        %v2693 = vpop.f32.mrf.mxu0
        %v2694 = vadd.f32 0.0, %v2693
        %v2695 = vpop.f32.mrf.mxu0
        %v2696 = vadd.f32 0.0, %v2695
        %v2697 = vpop.f32.mrf.mxu0
        %v2698 = vadd.f32 0.0, %v2697
        %v2699 = vpop.f32.mrf.mxu0
        %v2700 = vadd.f32 0.0, %v2699
        %2701 = vmatprep.mubr.bf16.mxu0 0
        %2702 = vmatmul.mubr.bf16.gmra.mxu0 %v2506
        %v2703 = vpop.f32.mrf.mxu0
        %v2704 = vadd.f32 0.0, %v2703
        %v2705 = vpop.f32.mrf.mxu0
        %v2706 = vadd.f32 0.0, %v2705
        %v2707 = vpop.f32.mrf.mxu0
        %v2708 = vadd.f32 0.0, %v2707
        %v2709 = vpop.f32.mrf.mxu0
        %v2710 = vadd.f32 0.0, %v2709
        %2711 = vmatprep.mubr.bf16.mxu0 0
        %2712 = vmatmul.mubr.bf16.gmra.mxu0 %v2509
        %v2713 = vpop.f32.mrf.mxu0
        %v2714 = vadd.f32 0.0, %v2713
        %v2715 = vpop.f32.mrf.mxu0
        %v2716 = vadd.f32 0.0, %v2715
        %v2717 = vpop.f32.mrf.mxu0
        %v2718 = vadd.f32 0.0, %v2717
        %v2719 = vpop.f32.mrf.mxu0
        %v2720 = vadd.f32 0.0, %v2719
        %2721 = vmatprep.mubr.bf16.mxu0 0
        %2722 = vmatmul.mubr.bf16.gmra.mxu0 %v2512
        %v2723 = vpop.f32.mrf.mxu0
        %v2724 = vadd.f32 0.0, %v2723
        %v2725 = vpop.f32.mrf.mxu0
        %v2726 = vadd.f32 0.0, %v2725
        %v2727 = vpop.f32.mrf.mxu0
        %v2728 = vadd.f32 0.0, %v2727
        %v2729 = vpop.f32.mrf.mxu0
        %v2730 = vadd.f32 0.0, %v2729
        %2731 = vmatprep.mubr.bf16.mxu0 0
        %2732 = vmatmul.mubr.bf16.gmra.mxu0 %v2515
        %v2733 = vpop.f32.mrf.mxu0
        %v2734 = vadd.f32 0.0, %v2733
        %v2735 = vpop.f32.mrf.mxu0
        %v2736 = vadd.f32 0.0, %v2735
        %v2737 = vpop.f32.mrf.mxu0
        %v2738 = vadd.f32 0.0, %v2737
        %v2739 = vpop.f32.mrf.mxu0
        %v2740 = vadd.f32 0.0, %v2739
        %2741 = vmatprep.mubr.bf16.mxu0 0
        %2742 = vmatmul.mubr.bf16.gmra.mxu0 %v2518
        %v2743 = vpop.f32.mrf.mxu0
        %v2744 = vadd.f32 0.0, %v2743
        %v2745 = vpop.f32.mrf.mxu0
        %v2746 = vadd.f32 0.0, %v2745
        %v2747 = vpop.f32.mrf.mxu0
        %v2748 = vadd.f32 0.0, %v2747
        %v2749 = vpop.f32.mrf.mxu0
        %v2750 = vadd.f32 0.0, %v2749
        %2751 = vmatprep.mubr.bf16.mxu0 0
        %2752 = vmatmul.mubr.bf16.gmra.mxu0 %v2521
        %v2753 = vpop.f32.mrf.mxu0
        %v2754 = vadd.f32 0.0, %v2753
        %v2755 = vpop.f32.mrf.mxu0
        %v2756 = vadd.f32 0.0, %v2755
        %v2757 = vpop.f32.mrf.mxu0
        %v2758 = vadd.f32 0.0, %v2757
        %v2759 = vpop.f32.mrf.mxu0
        %v2760 = vadd.f32 0.0, %v2759
        %2761 = vdwg.mxu0
        %v2762 = vadd.f32 %v2240, %v2564
        %v2763 = vadd.f32 %v2241, %v2566
        %v2764 = vadd.f32 %v2242, %v2568
        %v2765 = vadd.f32 %v2243, %v2570
        %v2766 = vadd.f32 %v2244, %v2574
        %v2767 = vadd.f32 %v2245, %v2576
        %v2768 = vadd.f32 %v2246, %v2578
        %v2769 = vadd.f32 %v2247, %v2580
        %v2770 = vadd.f32 %v2248, %v2584
        %v2771 = vadd.f32 %v2249, %v2586
        %v2772 = vadd.f32 %v2250, %v2588
        %v2773 = vadd.f32 %v2251, %v2590
        %v2774 = vadd.f32 %v2252, %v2594
        %v2775 = vadd.f32 %v2253, %v2596
        %v2776 = vadd.f32 %v2254, %v2598
        %v2777 = vadd.f32 %v2255, %v2600
        %v2778 = vadd.f32 %v2256, %v2604
        %v2779 = vadd.f32 %v2257, %v2606
        %v2780 = vadd.f32 %v2258, %v2608
        %v2781 = vadd.f32 %v2259, %v2610
        %v2782 = vadd.f32 %v2260, %v2614
        %v2783 = vadd.f32 %v2261, %v2616
        %v2784 = vadd.f32 %v2262, %v2618
        %v2785 = vadd.f32 %v2263, %v2620
        %v2786 = vadd.f32 %v2264, %v2624
        %v2787 = vadd.f32 %v2265, %v2626
        %v2788 = vadd.f32 %v2266, %v2628
        %v2789 = vadd.f32 %v2267, %v2630
        %v2790 = vadd.f32 %v2268, %v2634
        %v2791 = vadd.f32 %v2269, %v2636
        %v2792 = vadd.f32 %v2270, %v2638
        %v2793 = vadd.f32 %v2271, %v2640
        %v2794 = vadd.f32 %v2272, %v2644
        %v2795 = vadd.f32 %v2273, %v2646
        %v2796 = vadd.f32 %v2274, %v2648
        %v2797 = vadd.f32 %v2275, %v2650
        %v2798 = vadd.f32 %v2276, %v2654
        %v2799 = vadd.f32 %v2277, %v2656
        %v2800 = vadd.f32 %v2278, %v2658
        %v2801 = vadd.f32 %v2279, %v2660
        %v2802 = vadd.f32 %v2280, %v2664
        %v2803 = vadd.f32 %v2281, %v2666
        %v2804 = vadd.f32 %v2282, %v2668
        %v2805 = vadd.f32 %v2283, %v2670
        %v2806 = vadd.f32 %v2284, %v2674
        %v2807 = vadd.f32 %v2285, %v2676
        %v2808 = vadd.f32 %v2286, %v2678
        %v2809 = vadd.f32 %v2287, %v2680
        %v2810 = vadd.f32 %v2288, %v2684
        %v2811 = vadd.f32 %v2289, %v2686
        %v2812 = vadd.f32 %v2290, %v2688
        %v2813 = vadd.f32 %v2291, %v2690
        %v2814 = vadd.f32 %v2292, %v2694
        %v2815 = vadd.f32 %v2293, %v2696
        %v2816 = vadd.f32 %v2294, %v2698
        %v2817 = vadd.f32 %v2295, %v2700
        %v2818 = vadd.f32 %v2296, %v2704
        %v2819 = vadd.f32 %v2297, %v2706
        %v2820 = vadd.f32 %v2298, %v2708
        %v2821 = vadd.f32 %v2299, %v2710
        %v2822 = vadd.f32 %v2300, %v2714
        %v2823 = vadd.f32 %v2301, %v2716
        %v2824 = vadd.f32 %v2302, %v2718
        %v2825 = vadd.f32 %v2303, %v2720
        %v2826 = vadd.f32 %v2304, %v2724
        %v2827 = vadd.f32 %v2305, %v2726
        %v2828 = vadd.f32 %v2306, %v2728
        %v2829 = vadd.f32 %v2307, %v2730
        %v2830 = vadd.f32 %v2308, %v2734
        %v2831 = vadd.f32 %v2309, %v2736
        %v2832 = vadd.f32 %v2310, %v2738
        %v2833 = vadd.f32 %v2311, %v2740
        %v2834 = vadd.f32 %v2312, %v2744
        %v2835 = vadd.f32 %v2313, %v2746
        %v2836 = vadd.f32 %v2314, %v2748
        %v2837 = vadd.f32 %v2315, %v2750
        %v2838 = vadd.f32 %v2316, %v2754
        %v2839 = vadd.f32 %v2317, %v2756
        %v2840 = vadd.f32 %v2318, %v2758
        %v2841 = vadd.f32 %v2319, %v2760
        %v2842 = vld [vmem:[%s2] sm:$0x3]
        %v2844 = vlaneseq
        %v2845 = vshrl.u32 %v2844, 7
        %v2846 = vsub.s32 0, %v2845
        %v2847 = vrot.slane %v2842, %v2846
        %v2848 = vlaneseq
        %v2849 = vshrl.u32 %v2848, 7
        %v2850 = vsub.s32 1, %v2849
        %v2851 = vrot.slane %v2842, %v2850
        %v2854 = vadd.f32 %v2762, %v2847
        %v2855 = vadd.f32 %v2763, %v2851
        %v2856 = vadd.f32 %v2764, %v2847
        %v2857 = vadd.f32 %v2765, %v2851
        %v2858 = vadd.f32 %v2766, %v2847
        %v2859 = vadd.f32 %v2767, %v2851
        %v2860 = vadd.f32 %v2768, %v2847
        %v2861 = vadd.f32 %v2769, %v2851
        %v2862 = vadd.f32 %v2770, %v2847
        %v2863 = vadd.f32 %v2771, %v2851
        %v2864 = vadd.f32 %v2772, %v2847
        %v2865 = vadd.f32 %v2773, %v2851
        %v2866 = vadd.f32 %v2774, %v2847
        %v2867 = vadd.f32 %v2775, %v2851
        %v2868 = vadd.f32 %v2776, %v2847
        %v2869 = vadd.f32 %v2777, %v2851
        %v2870 = vadd.f32 %v2778, %v2847
        %v2871 = vadd.f32 %v2779, %v2851
        %v2872 = vadd.f32 %v2780, %v2847
        %v2873 = vadd.f32 %v2781, %v2851
        %v2874 = vadd.f32 %v2782, %v2847
        %v2875 = vadd.f32 %v2783, %v2851
        %v2876 = vadd.f32 %v2784, %v2847
        %v2877 = vadd.f32 %v2785, %v2851
        %v2878 = vadd.f32 %v2786, %v2847
        %v2879 = vadd.f32 %v2787, %v2851
        %v2880 = vadd.f32 %v2788, %v2847
        %v2881 = vadd.f32 %v2789, %v2851
        %v2882 = vadd.f32 %v2790, %v2847
        %v2883 = vadd.f32 %v2791, %v2851
        %v2884 = vadd.f32 %v2792, %v2847
        %v2885 = vadd.f32 %v2793, %v2851
        %v2886 = vadd.f32 %v2794, %v2847
        %v2887 = vadd.f32 %v2795, %v2851
        %v2888 = vadd.f32 %v2796, %v2847
        %v2889 = vadd.f32 %v2797, %v2851
        %v2890 = vadd.f32 %v2798, %v2847
        %v2891 = vadd.f32 %v2799, %v2851
        %v2892 = vadd.f32 %v2800, %v2847
        %v2893 = vadd.f32 %v2801, %v2851
        %v2894 = vadd.f32 %v2802, %v2847
        %v2895 = vadd.f32 %v2803, %v2851
        %v2896 = vadd.f32 %v2804, %v2847
        %v2897 = vadd.f32 %v2805, %v2851
        %v2898 = vadd.f32 %v2806, %v2847
        %v2899 = vadd.f32 %v2807, %v2851
        %v2900 = vadd.f32 %v2808, %v2847
        %v2901 = vadd.f32 %v2809, %v2851
        %v2902 = vadd.f32 %v2810, %v2847
        %v2903 = vadd.f32 %v2811, %v2851
        %v2904 = vadd.f32 %v2812, %v2847
        %v2905 = vadd.f32 %v2813, %v2851
        %v2906 = vadd.f32 %v2814, %v2847
        %v2907 = vadd.f32 %v2815, %v2851
        %v2908 = vadd.f32 %v2816, %v2847
        %v2909 = vadd.f32 %v2817, %v2851
        %v2910 = vadd.f32 %v2818, %v2847
        %v2911 = vadd.f32 %v2819, %v2851
        %v2912 = vadd.f32 %v2820, %v2847
        %v2913 = vadd.f32 %v2821, %v2851
        %v2914 = vadd.f32 %v2822, %v2847
        %v2915 = vadd.f32 %v2823, %v2851
        %v2916 = vadd.f32 %v2824, %v2847
        %v2917 = vadd.f32 %v2825, %v2851
        %v2918 = vadd.f32 %v2826, %v2847
        %v2919 = vadd.f32 %v2827, %v2851
        %v2920 = vadd.f32 %v2828, %v2847
        %v2921 = vadd.f32 %v2829, %v2851
        %v2922 = vadd.f32 %v2830, %v2847
        %v2923 = vadd.f32 %v2831, %v2851
        %v2924 = vadd.f32 %v2832, %v2847
        %v2925 = vadd.f32 %v2833, %v2851
        %v2926 = vadd.f32 %v2834, %v2847
        %v2927 = vadd.f32 %v2835, %v2851
        %v2928 = vadd.f32 %v2836, %v2847
        %v2929 = vadd.f32 %v2837, %v2851
        %v2930 = vadd.f32 %v2838, %v2847
        %v2931 = vadd.f32 %v2839, %v2851
        %v2932 = vadd.f32 %v2840, %v2847
        %v2933 = vadd.f32 %v2841, %v2851
        %v2934 = vmax.f32 %v2854, 0.0
        %v2935 = vmax.f32 %v2855, 0.0
        %v2936 = vmax.f32 %v2856, 0.0
        %v2937 = vmax.f32 %v2857, 0.0
        %v2938 = vmax.f32 %v2858, 0.0
        %v2939 = vmax.f32 %v2859, 0.0
        %v2940 = vmax.f32 %v2860, 0.0
        %v2941 = vmax.f32 %v2861, 0.0
        %v2942 = vmax.f32 %v2862, 0.0
        %v2943 = vmax.f32 %v2863, 0.0
        %v2944 = vmax.f32 %v2864, 0.0
        %v2945 = vmax.f32 %v2865, 0.0
        %v2946 = vmax.f32 %v2866, 0.0
        %v2947 = vmax.f32 %v2867, 0.0
        %v2948 = vmax.f32 %v2868, 0.0
        %v2949 = vmax.f32 %v2869, 0.0
        %v2950 = vmax.f32 %v2870, 0.0
        %v2951 = vmax.f32 %v2871, 0.0
        %v2952 = vmax.f32 %v2872, 0.0
        %v2953 = vmax.f32 %v2873, 0.0
        %v2954 = vmax.f32 %v2874, 0.0
        %v2955 = vmax.f32 %v2875, 0.0
        %v2956 = vmax.f32 %v2876, 0.0
        %v2957 = vmax.f32 %v2877, 0.0
        %v2958 = vmax.f32 %v2878, 0.0
        %v2959 = vmax.f32 %v2879, 0.0
        %v2960 = vmax.f32 %v2880, 0.0
        %v2961 = vmax.f32 %v2881, 0.0
        %v2962 = vmax.f32 %v2882, 0.0
        %v2963 = vmax.f32 %v2883, 0.0
        %v2964 = vmax.f32 %v2884, 0.0
        %v2965 = vmax.f32 %v2885, 0.0
        %v2966 = vmax.f32 %v2886, 0.0
        %v2967 = vmax.f32 %v2887, 0.0
        %v2968 = vmax.f32 %v2888, 0.0
        %v2969 = vmax.f32 %v2889, 0.0
        %v2970 = vmax.f32 %v2890, 0.0
        %v2971 = vmax.f32 %v2891, 0.0
        %v2972 = vmax.f32 %v2892, 0.0
        %v2973 = vmax.f32 %v2893, 0.0
        %v2974 = vmax.f32 %v2894, 0.0
        %v2975 = vmax.f32 %v2895, 0.0
        %v2976 = vmax.f32 %v2896, 0.0
        %v2977 = vmax.f32 %v2897, 0.0
        %v2978 = vmax.f32 %v2898, 0.0
        %v2979 = vmax.f32 %v2899, 0.0
        %v2980 = vmax.f32 %v2900, 0.0
        %v2981 = vmax.f32 %v2901, 0.0
        %v2982 = vmax.f32 %v2902, 0.0
        %v2983 = vmax.f32 %v2903, 0.0
        %v2984 = vmax.f32 %v2904, 0.0
        %v2985 = vmax.f32 %v2905, 0.0
        %v2986 = vmax.f32 %v2906, 0.0
        %v2987 = vmax.f32 %v2907, 0.0
        %v2988 = vmax.f32 %v2908, 0.0
        %v2989 = vmax.f32 %v2909, 0.0
        %v2990 = vmax.f32 %v2910, 0.0
        %v2991 = vmax.f32 %v2911, 0.0
        %v2992 = vmax.f32 %v2912, 0.0
        %v2993 = vmax.f32 %v2913, 0.0
        %v2994 = vmax.f32 %v2914, 0.0
        %v2995 = vmax.f32 %v2915, 0.0
        %v2996 = vmax.f32 %v2916, 0.0
        %v2997 = vmax.f32 %v2917, 0.0
        %v2998 = vmax.f32 %v2918, 0.0
        %v2999 = vmax.f32 %v2919, 0.0
        %v3000 = vmax.f32 %v2920, 0.0
        %v3001 = vmax.f32 %v2921, 0.0
        %v3002 = vmax.f32 %v2922, 0.0
        %v3003 = vmax.f32 %v2923, 0.0
        %v3004 = vmax.f32 %v2924, 0.0
        %v3005 = vmax.f32 %v2925, 0.0
        %v3006 = vmax.f32 %v2926, 0.0
        %v3007 = vmax.f32 %v2927, 0.0
        %v3008 = vmax.f32 %v2928, 0.0
        %v3009 = vmax.f32 %v2929, 0.0
        %v3010 = vmax.f32 %v2930, 0.0
        %v3011 = vmax.f32 %v2931, 0.0
        %v3012 = vmax.f32 %v2932, 0.0
        %v3013 = vmax.f32 %v2933, 0.0
        %v3014 = vmax.f32 %v2934, %v2935
        %v3015 = vmax.f32 %v2936, %v2937
        %v3016 = vmax.f32 %v2938, %v2939
        %v3017 = vmax.f32 %v2940, %v2941
        %v3018 = vmax.f32 %v2944, %v2945
        %v3019 = vmax.f32 %v2946, %v2947
        %v3020 = vmax.f32 %v2948, %v2949
        %v3021 = vmax.f32 %v2950, %v2951
        %v3022 = vmax.f32 %v2954, %v2955
        %v3023 = vmax.f32 %v2956, %v2957
        %v3024 = vmax.f32 %v2958, %v2959
        %v3025 = vmax.f32 %v2960, %v2961
        %v3026 = vmax.f32 %v2964, %v2965
        %v3027 = vmax.f32 %v2966, %v2967
        %v3028 = vmax.f32 %v2968, %v2969
        %v3029 = vmax.f32 %v2970, %v2971
        %v3030 = vmax.f32 %v2974, %v2975
        %v3031 = vmax.f32 %v2976, %v2977
        %v3032 = vmax.f32 %v2978, %v2979
        %v3033 = vmax.f32 %v2980, %v2981
        %v3034 = vmax.f32 %v2984, %v2985
        %v3035 = vmax.f32 %v2986, %v2987
        %v3036 = vmax.f32 %v2988, %v2989
        %v3037 = vmax.f32 %v2990, %v2991
        %v3038 = vmax.f32 %v2994, %v2995
        %v3039 = vmax.f32 %v2996, %v2997
        %v3040 = vmax.f32 %v2998, %v2999
        %v3041 = vmax.f32 %v3000, %v3001
        %v3042 = vmax.f32 %v3004, %v3005
        %v3043 = vmax.f32 %v3006, %v3007
        %v3044 = vmax.f32 %v3008, %v3009
        %v3045 = vmax.f32 %v3010, %v3011
        %v3046 = vmax.f32 %v2942, %v2943
        %v3047 = vmax.f32 %v2952, %v2953
        %v3048 = vmax.f32 %v2962, %v2963
        %v3049 = vmax.f32 %v2972, %v2973
        %v3050 = vmax.f32 %v2982, %v2983
        %v3051 = vmax.f32 %v2992, %v2993
        %v3052 = vmax.f32 %v3002, %v3003
        %v3053 = vmax.f32 %v3012, %v3013
        %vm3094 = vcmask 1046528
        %v3095 = vrot.slane %v3014, 1
        %v3096 = vrot.slane %v3015, 1
        %v3097 = vsel %vm3094, %v3095, %v3096
        %v3098 = vrot.slane %v3016, 1
        %v3099 = vsel %vm3094, %v3096, %v3098
        %v3100 = vrot.slane %v3017, 1
        %v3101 = vsel %vm3094, %v3098, %v3100
        %v3102 = vrot.slane %v3046, 1
        %v3103 = vsel %vm3094, %v3100, %v3102
        %v3104 = vrot.slane %v3018, 1
        %v3105 = vrot.slane %v3019, 1
        %v3106 = vsel %vm3094, %v3104, %v3105
        %v3107 = vrot.slane %v3020, 1
        %v3108 = vsel %vm3094, %v3105, %v3107
        %v3109 = vrot.slane %v3021, 1
        %v3110 = vsel %vm3094, %v3107, %v3109
        %v3111 = vrot.slane %v3047, 1
        %v3112 = vsel %vm3094, %v3109, %v3111
        %v3113 = vrot.slane %v3022, 1
        %v3114 = vrot.slane %v3023, 1
        %v3115 = vsel %vm3094, %v3113, %v3114
        %v3116 = vrot.slane %v3024, 1
        %v3117 = vsel %vm3094, %v3114, %v3116
        %v3118 = vrot.slane %v3025, 1
        %v3119 = vsel %vm3094, %v3116, %v3118
        %v3120 = vrot.slane %v3048, 1
        %v3121 = vsel %vm3094, %v3118, %v3120
        %v3122 = vrot.slane %v3026, 1
        %v3123 = vrot.slane %v3027, 1
        %v3124 = vsel %vm3094, %v3122, %v3123
        %v3125 = vrot.slane %v3028, 1
        %v3126 = vsel %vm3094, %v3123, %v3125
        %v3127 = vrot.slane %v3029, 1
        %v3128 = vsel %vm3094, %v3125, %v3127
        %v3129 = vrot.slane %v3049, 1
        %v3130 = vsel %vm3094, %v3127, %v3129
        %v3131 = vrot.slane %v3030, 1
        %v3132 = vrot.slane %v3031, 1
        %v3133 = vsel %vm3094, %v3131, %v3132
        %v3134 = vrot.slane %v3032, 1
        %v3135 = vsel %vm3094, %v3132, %v3134
        %v3136 = vrot.slane %v3033, 1
        %v3137 = vsel %vm3094, %v3134, %v3136
        %v3138 = vrot.slane %v3050, 1
        %v3139 = vsel %vm3094, %v3136, %v3138
        %v3140 = vrot.slane %v3034, 1
        %v3141 = vrot.slane %v3035, 1
        %v3142 = vsel %vm3094, %v3140, %v3141
        %v3143 = vrot.slane %v3036, 1
        %v3144 = vsel %vm3094, %v3141, %v3143
        %v3145 = vrot.slane %v3037, 1
        %v3146 = vsel %vm3094, %v3143, %v3145
        %v3147 = vrot.slane %v3051, 1
        %v3148 = vsel %vm3094, %v3145, %v3147
        %v3149 = vrot.slane %v3038, 1
        %v3150 = vrot.slane %v3039, 1
        %v3151 = vsel %vm3094, %v3149, %v3150
        %v3152 = vrot.slane %v3040, 1
        %v3153 = vsel %vm3094, %v3150, %v3152
        %v3154 = vrot.slane %v3041, 1
        %v3155 = vsel %vm3094, %v3152, %v3154
        %v3156 = vrot.slane %v3052, 1
        %v3157 = vsel %vm3094, %v3154, %v3156
        %v3158 = vrot.slane %v3042, 1
        %v3159 = vrot.slane %v3043, 1
        %v3160 = vsel %vm3094, %v3158, %v3159
        %v3161 = vrot.slane %v3044, 1
        %v3162 = vsel %vm3094, %v3159, %v3161
        %v3163 = vrot.slane %v3045, 1
        %v3164 = vsel %vm3094, %v3161, %v3163
        %v3165 = vrot.slane %v3053, 1
        %v3166 = vsel %vm3094, %v3163, %v3165
        %v3199 = vmax.f32 %v3014, %v3097
        %v3200 = vmax.f32 %v3015, %v3099
        %v3201 = vmax.f32 %v3016, %v3101
        %v3202 = vmax.f32 %v3017, %v3103
        %v3203 = vmax.f32 %v3018, %v3106
        %v3204 = vmax.f32 %v3019, %v3108
        %v3205 = vmax.f32 %v3020, %v3110
        %v3206 = vmax.f32 %v3021, %v3112
        %v3207 = vmax.f32 %v3022, %v3115
        %v3208 = vmax.f32 %v3023, %v3117
        %v3209 = vmax.f32 %v3024, %v3119
        %v3210 = vmax.f32 %v3025, %v3121
        %v3211 = vmax.f32 %v3026, %v3124
        %v3212 = vmax.f32 %v3027, %v3126
        %v3213 = vmax.f32 %v3028, %v3128
        %v3214 = vmax.f32 %v3029, %v3130
        %v3215 = vmax.f32 %v3030, %v3133
        %v3216 = vmax.f32 %v3031, %v3135
        %v3217 = vmax.f32 %v3032, %v3137
        %v3218 = vmax.f32 %v3033, %v3139
        %v3219 = vmax.f32 %v3034, %v3142
        %v3220 = vmax.f32 %v3035, %v3144
        %v3221 = vmax.f32 %v3036, %v3146
        %v3222 = vmax.f32 %v3037, %v3148
        %v3223 = vmax.f32 %v3038, %v3151
        %v3224 = vmax.f32 %v3039, %v3153
        %v3225 = vmax.f32 %v3040, %v3155
        %v3226 = vmax.f32 %v3041, %v3157
        %v3227 = vmax.f32 %v3042, %v3160
        %v3228 = vmax.f32 %v3043, %v3162
        %v3229 = vmax.f32 %v3044, %v3164
        %v3230 = vmax.f32 %v3045, %v3166
        %v3231 = vpack.c.bf16 %v3200, %v3199
        %v3232 = vpack.c.bf16 %v3203, %v3201
        %v3233 = vpack.c.bf16 %v3205, %v3204
        %v3234 = vpack.c.bf16 %v3208, %v3207
        %v3235 = vpack.c.bf16 %v3211, %v3209
        %v3236 = vpack.c.bf16 %v3213, %v3212
        %v3237 = vpack.c.bf16 %v3216, %v3215
        %v3238 = vpack.c.bf16 %v3219, %v3217
        %v3239 = vpack.c.bf16 %v3221, %v3220
        %v3240 = vpack.c.bf16 %v3224, %v3223
        %v3241 = vpack.c.bf16 %v3227, %v3225
        %v3242 = vpack.c.bf16 %v3229, %v3228
        %v3243 = vld [vmem:[%s3] sm:$0xff]
        %v3244 = vld [vmem:[%s3 + $0x8] sm:$0xff]
        %v3245 = vld [vmem:[%s3 + $0x10] sm:$0xff]
        %v3246 = vld [vmem:[%s3 + $0x18] sm:$0xff]
        %v3247 = vld [vmem:[%s3 + $0x20] sm:$0xff]
        %v3248 = vld [vmem:[%s3 + $0x28] sm:$0xff]
        %v3249 = vld [vmem:[%s3 + $0x30] sm:$0xff]
        %v3250 = vld [vmem:[%s3 + $0x38] sm:$0xff]
        %v3251 = vld [vmem:[%s3 + $0x40] sm:$0xff]
        %v3252 = vld [vmem:[%s3 + $0x48] sm:$0xff]
        %v3253 = vld [vmem:[%s3 + $0x50] sm:$0xff]
        %v3254 = vld [vmem:[%s3 + $0x58] sm:$0xff]
        %v3255 = vld [vmem:[%s3 + $0x60] sm:$0xff]
        %v3256 = vld [vmem:[%s3 + $0x68] sm:$0xff]
        %v3257 = vld [vmem:[%s3 + $0x70] sm:$0xff]
        %v3258 = vld [vmem:[%s3 + $0x78] sm:$0xff]
        %v3291 = vrot.slane %v3199, 2
        %v3292 = vrot.slane %v3200, 2
        %v3293 = vsel %vm669, %v3291, %v3292
        %v3294 = vrot.slane %v3201, 2
        %v3295 = vsel %vm669, %v3292, %v3294
        %v3296 = vrot.slane %v3202, 2
        %v3297 = vsel %vm669, %v3294, %v3296
        %v3298 = vrot.slane %v3203, 2
        %v3299 = vrot.slane %v3204, 2
        %v3300 = vsel %vm669, %v3298, %v3299
        %v3301 = vrot.slane %v3205, 2
        %v3302 = vsel %vm669, %v3299, %v3301
        %v3303 = vrot.slane %v3206, 2
        %v3304 = vsel %vm669, %v3301, %v3303
        %v3305 = vrot.slane %v3207, 2
        %v3306 = vrot.slane %v3208, 2
        %v3307 = vsel %vm669, %v3305, %v3306
        %v3308 = vrot.slane %v3209, 2
        %v3309 = vsel %vm669, %v3306, %v3308
        %v3310 = vrot.slane %v3210, 2
        %v3311 = vsel %vm669, %v3308, %v3310
        %v3312 = vrot.slane %v3211, 2
        %v3313 = vrot.slane %v3212, 2
        %v3314 = vsel %vm669, %v3312, %v3313
        %v3315 = vrot.slane %v3213, 2
        %v3316 = vsel %vm669, %v3313, %v3315
        %v3317 = vrot.slane %v3214, 2
        %v3318 = vsel %vm669, %v3315, %v3317
        %v3319 = vrot.slane %v3215, 2
        %v3320 = vrot.slane %v3216, 2
        %v3321 = vsel %vm669, %v3319, %v3320
        %v3322 = vrot.slane %v3217, 2
        %v3323 = vsel %vm669, %v3320, %v3322
        %v3324 = vrot.slane %v3218, 2
        %v3325 = vsel %vm669, %v3322, %v3324
        %v3326 = vrot.slane %v3219, 2
        %v3327 = vrot.slane %v3220, 2
        %v3328 = vsel %vm669, %v3326, %v3327
        %v3329 = vrot.slane %v3221, 2
        %v3330 = vsel %vm669, %v3327, %v3329
        %v3331 = vrot.slane %v3222, 2
        %v3332 = vsel %vm669, %v3329, %v3331
        %v3333 = vrot.slane %v3223, 2
        %v3334 = vrot.slane %v3224, 2
        %v3335 = vsel %vm669, %v3333, %v3334
        %v3336 = vrot.slane %v3225, 2
        %v3337 = vsel %vm669, %v3334, %v3336
        %v3338 = vrot.slane %v3226, 2
        %v3339 = vsel %vm669, %v3336, %v3338
        %v3340 = vrot.slane %v3227, 2
        %v3341 = vrot.slane %v3228, 2
        %v3342 = vsel %vm669, %v3340, %v3341
        %v3343 = vrot.slane %v3229, 2
        %v3344 = vsel %vm669, %v3341, %v3343
        %v3345 = vrot.slane %v3230, 2
        %v3346 = vsel %vm669, %v3343, %v3345
        %v3371 = vpack.c.bf16 %v3295, %v3293
        %v3372 = vpack.c.bf16 %v3300, %v3297
        %v3373 = vpack.c.bf16 %v3304, %v3302
        %v3374 = vpack.c.bf16 %v3309, %v3307
        %v3375 = vpack.c.bf16 %v3314, %v3311
        %v3376 = vpack.c.bf16 %v3318, %v3316
        %v3377 = vpack.c.bf16 %v3323, %v3321
        %v3378 = vpack.c.bf16 %v3328, %v3325
        %v3379 = vpack.c.bf16 %v3332, %v3330
        %v3380 = vpack.c.bf16 %v3337, %v3335
        %v3381 = vpack.c.bf16 %v3342, %v3339
        %v3382 = vpack.c.bf16 %v3346, %v3344
        %s3383 = scalar_lea.vmem %s3, 128
        %v3384 = vld [vmem:[%s3383] sm:$0xff]
        %v3385 = vld [vmem:[%s3383 + $0x8] sm:$0xff]
        %v3386 = vld [vmem:[%s3383 + $0x10] sm:$0xff]
        %v3387 = vld [vmem:[%s3383 + $0x18] sm:$0xff]
        %v3388 = vld [vmem:[%s3383 + $0x20] sm:$0xff]
        %v3389 = vld [vmem:[%s3383 + $0x28] sm:$0xff]
        %v3390 = vld [vmem:[%s3383 + $0x30] sm:$0xff]
        %v3391 = vld [vmem:[%s3383 + $0x38] sm:$0xff]
        %v3392 = vld [vmem:[%s3383 + $0x40] sm:$0xff]
        %v3393 = vld [vmem:[%s3383 + $0x48] sm:$0xff]
        %v3394 = vld [vmem:[%s3383 + $0x50] sm:$0xff]
        %v3395 = vld [vmem:[%s3383 + $0x58] sm:$0xff]
        %v3396 = vld [vmem:[%s3383 + $0x60] sm:$0xff]
        %v3397 = vld [vmem:[%s3383 + $0x68] sm:$0xff]
        %v3398 = vld [vmem:[%s3383 + $0x70] sm:$0xff]
        %v3399 = vld [vmem:[%s3383 + $0x78] sm:$0xff]
        %v3416 = vunpack.c.l.b16 %v3384
        %v3417 = vunpack.c.h.b16 %v3384
        %v3418 = vunpack.c.l.b16 %v3385
        %v3419 = vunpack.c.h.b16 %v3385
        %v3420 = vunpack.c.l.b16 %v3386
        %v3421 = vunpack.c.h.b16 %v3386
        %v3422 = vunpack.c.l.b16 %v3387
        %v3423 = vunpack.c.h.b16 %v3387
        %v3424 = vunpack.c.l.b16 %v3388
        %v3425 = vunpack.c.h.b16 %v3388
        %v3426 = vunpack.c.l.b16 %v3389
        %v3427 = vunpack.c.h.b16 %v3389
        %v3428 = vunpack.c.l.b16 %v3390
        %v3429 = vunpack.c.h.b16 %v3390
        %v3430 = vunpack.c.l.b16 %v3391
        %v3431 = vunpack.c.h.b16 %v3391
        %v3432 = vunpack.c.l.b16 %v3392
        %v3433 = vunpack.c.h.b16 %v3392
        %v3434 = vunpack.c.l.b16 %v3393
        %v3435 = vunpack.c.h.b16 %v3393
        %v3436 = vunpack.c.l.b16 %v3394
        %v3437 = vunpack.c.h.b16 %v3394
        %v3438 = vunpack.c.l.b16 %v3395
        %v3439 = vunpack.c.h.b16 %v3395
        %v3440 = vunpack.c.l.b16 %v3396
        %v3441 = vunpack.c.h.b16 %v3396
        %v3442 = vunpack.c.l.b16 %v3397
        %v3443 = vunpack.c.h.b16 %v3397
        %v3444 = vunpack.c.l.b16 %v3398
        %v3445 = vunpack.c.h.b16 %v3398
        %v3446 = vunpack.c.l.b16 %v3399
        %v3447 = vunpack.c.h.b16 %v3399
        %v3448 = vpack.c.b16 %v3418, %v3416
        %v3449 = vpack.c.b16 %v3419, %v3417
        %v3450 = vpack.c.b16 %v3422, %v3420
        %v3451 = vpack.c.b16 %v3423, %v3421
        %v3452 = vpack.c.b16 %v3426, %v3424
        %v3453 = vpack.c.b16 %v3427, %v3425
        %v3454 = vpack.c.b16 %v3430, %v3428
        %v3455 = vpack.c.b16 %v3431, %v3429
        %v3456 = vpack.c.b16 %v3434, %v3432
        %v3457 = vpack.c.b16 %v3435, %v3433
        %v3458 = vpack.c.b16 %v3438, %v3436
        %v3459 = vpack.c.b16 %v3439, %v3437
        %v3460 = vpack.c.b16 %v3442, %v3440
        %v3461 = vpack.c.b16 %v3443, %v3441
        %v3462 = vpack.c.b16 %v3446, %v3444
        %v3463 = vpack.c.b16 %v3447, %v3445
        %3480 = vmatprep.subr.bf16.mxu0 %v3463
        %3481 = vmatpush1.bf16.msra.mxu0 %v3462
        %3482 = vmatprep.subr.bf16.mxu0 %v3461
        %3483 = vmatpush1.bf16.msra.mxu0 %v3460
        %3484 = vmatprep.subr.bf16.mxu0 %v3459
        %3485 = vmatpush1.bf16.msra.mxu0 %v3458
        %3486 = vmatprep.subr.bf16.mxu0 %v3457
        %3487 = vmatpush1.bf16.msra.mxu0 %v3456
        %3488 = vmatprep.subr.bf16.mxu0 %v3455
        %3489 = vmatpush1.bf16.msra.mxu0 %v3454
        %3490 = vmatprep.subr.bf16.mxu0 %v3453
        %3491 = vmatpush1.bf16.msra.mxu0 %v3452
        %3492 = vmatprep.subr.bf16.mxu0 %v3451
        %3493 = vmatpush1.bf16.msra.mxu0 %v3450
        %3494 = vmatprep.subr.bf16.mxu0 %v3449
        %3495 = vmatpush1.bf16.msra.mxu0 %v3448
        %3496 = vmatprep.subr.bf16.mxu0 0
        %3497 = vmatpush2.bf16.msra.mxu0 0
        %3498 = vmatprep.subr.bf16.mxu0 0
        %3499 = vmatpush2.bf16.msra.mxu0 0
        %3500 = vmatprep.subr.bf16.mxu0 0
        %3501 = vmatpush2.bf16.msra.mxu0 0
        %3502 = vmatprep.subr.bf16.mxu0 0
        %3503 = vmatpush2.bf16.msra.mxu0 0
        %3504 = vmatprep.subr.bf16.mxu0 0
        %3505 = vmatpush2.bf16.msra.mxu0 0
        %3506 = vmatprep.subr.bf16.mxu0 0
        %3507 = vmatpush2.bf16.msra.mxu0 0
        %3508 = vmatprep.subr.bf16.mxu0 0
        %3509 = vmatpush2.bf16.msra.mxu0 0
        %3510 = vmatprep.subr.bf16.mxu0 0
        %3511 = vmatpush2.bf16.msra.mxu0 0
        %3512 = vmatprep.mubr.bf16.mxu0 0
        %3513 = vmatmul.mubr.bf16.gmra.mxu0 %v3371
        %v3514 = vpop.f32.mrf.mxu0
        %v3515 = vadd.f32 0.0, %v3514
        %v3516 = vpop.f32.mrf.mxu0
        %v3517 = vadd.f32 0.0, %v3516
        %v3518 = vpop.f32.mrf.mxu0
        %v3519 = vadd.f32 0.0, %v3518
        %v3520 = vpop.f32.mrf.mxu0
        %v3521 = vadd.f32 0.0, %v3520
        %3522 = vmatprep.mubr.bf16.mxu0 0
        %3523 = vmatmul.mubr.bf16.gmra.mxu0 %v3372
        %v3524 = vpop.f32.mrf.mxu0
        %v3525 = vadd.f32 0.0, %v3524
        %v3526 = vpop.f32.mrf.mxu0
        %v3527 = vadd.f32 0.0, %v3526
        %v3528 = vpop.f32.mrf.mxu0
        %v3529 = vadd.f32 0.0, %v3528
        %v3530 = vpop.f32.mrf.mxu0
        %v3531 = vadd.f32 0.0, %v3530
        %3532 = vmatprep.mubr.bf16.mxu0 0
        %3533 = vmatmul.mubr.bf16.gmra.mxu0 %v3373
        %v3534 = vpop.f32.mrf.mxu0
        %v3535 = vadd.f32 0.0, %v3534
        %v3536 = vpop.f32.mrf.mxu0
        %v3537 = vadd.f32 0.0, %v3536
        %v3538 = vpop.f32.mrf.mxu0
        %v3539 = vadd.f32 0.0, %v3538
        %v3540 = vpop.f32.mrf.mxu0
        %v3541 = vadd.f32 0.0, %v3540
        %3542 = vmatprep.mubr.bf16.mxu0 0
        %3543 = vmatmul.mubr.bf16.gmra.mxu0 %v3374
        %v3544 = vpop.f32.mrf.mxu0
        %v3545 = vadd.f32 0.0, %v3544
        %v3546 = vpop.f32.mrf.mxu0
        %v3547 = vadd.f32 0.0, %v3546
        %v3548 = vpop.f32.mrf.mxu0
        %v3549 = vadd.f32 0.0, %v3548
        %v3550 = vpop.f32.mrf.mxu0
        %v3551 = vadd.f32 0.0, %v3550
        %3552 = vmatprep.mubr.bf16.mxu0 0
        %3553 = vmatmul.mubr.bf16.gmra.mxu0 %v3375
        %v3554 = vpop.f32.mrf.mxu0
        %v3555 = vadd.f32 0.0, %v3554
        %v3556 = vpop.f32.mrf.mxu0
        %v3557 = vadd.f32 0.0, %v3556
        %v3558 = vpop.f32.mrf.mxu0
        %v3559 = vadd.f32 0.0, %v3558
        %v3560 = vpop.f32.mrf.mxu0
        %v3561 = vadd.f32 0.0, %v3560
        %3562 = vmatprep.mubr.bf16.mxu0 0
        %3563 = vmatmul.mubr.bf16.gmra.mxu0 %v3376
        %v3564 = vpop.f32.mrf.mxu0
        %v3565 = vadd.f32 0.0, %v3564
        %v3566 = vpop.f32.mrf.mxu0
        %v3567 = vadd.f32 0.0, %v3566
        %v3568 = vpop.f32.mrf.mxu0
        %v3569 = vadd.f32 0.0, %v3568
        %v3570 = vpop.f32.mrf.mxu0
        %v3571 = vadd.f32 0.0, %v3570
        %3572 = vmatprep.mubr.bf16.mxu0 0
        %3573 = vmatmul.mubr.bf16.gmra.mxu0 %v3377
        %v3574 = vpop.f32.mrf.mxu0
        %v3575 = vadd.f32 0.0, %v3574
        %v3576 = vpop.f32.mrf.mxu0
        %v3577 = vadd.f32 0.0, %v3576
        %v3578 = vpop.f32.mrf.mxu0
        %v3579 = vadd.f32 0.0, %v3578
        %v3580 = vpop.f32.mrf.mxu0
        %v3581 = vadd.f32 0.0, %v3580
        %3582 = vmatprep.mubr.bf16.mxu0 0
        %3583 = vmatmul.mubr.bf16.gmra.mxu0 %v3378
        %v3584 = vpop.f32.mrf.mxu0
        %v3585 = vadd.f32 0.0, %v3584
        %v3586 = vpop.f32.mrf.mxu0
        %v3587 = vadd.f32 0.0, %v3586
        %v3588 = vpop.f32.mrf.mxu0
        %v3589 = vadd.f32 0.0, %v3588
        %v3590 = vpop.f32.mrf.mxu0
        %v3591 = vadd.f32 0.0, %v3590
        %3592 = vmatprep.mubr.bf16.mxu0 0
        %3593 = vmatmul.mubr.bf16.gmra.mxu0 %v3379
        %v3594 = vpop.f32.mrf.mxu0
        %v3595 = vadd.f32 0.0, %v3594
        %v3596 = vpop.f32.mrf.mxu0
        %v3597 = vadd.f32 0.0, %v3596
        %v3598 = vpop.f32.mrf.mxu0
        %v3599 = vadd.f32 0.0, %v3598
        %v3600 = vpop.f32.mrf.mxu0
        %v3601 = vadd.f32 0.0, %v3600
        %3602 = vmatprep.mubr.bf16.mxu0 0
        %3603 = vmatmul.mubr.bf16.gmra.mxu0 %v3380
        %v3604 = vpop.f32.mrf.mxu0
        %v3605 = vadd.f32 0.0, %v3604
        %v3606 = vpop.f32.mrf.mxu0
        %v3607 = vadd.f32 0.0, %v3606
        %v3608 = vpop.f32.mrf.mxu0
        %v3609 = vadd.f32 0.0, %v3608
        %v3610 = vpop.f32.mrf.mxu0
        %v3611 = vadd.f32 0.0, %v3610
        %3612 = vmatprep.mubr.bf16.mxu0 0
        %3613 = vmatmul.mubr.bf16.gmra.mxu0 %v3381
        %v3614 = vpop.f32.mrf.mxu0
        %v3615 = vadd.f32 0.0, %v3614
        %v3616 = vpop.f32.mrf.mxu0
        %v3617 = vadd.f32 0.0, %v3616
        %v3618 = vpop.f32.mrf.mxu0
        %v3619 = vadd.f32 0.0, %v3618
        %v3620 = vpop.f32.mrf.mxu0
        %v3621 = vadd.f32 0.0, %v3620
        %3622 = vmatprep.mubr.bf16.mxu0 0
        %3623 = vmatmul.mubr.bf16.gmra.mxu0 %v3382
        %v3624 = vpop.f32.mrf.mxu0
        %v3625 = vadd.f32 0.0, %v3624
        %v3626 = vpop.f32.mrf.mxu0
        %v3627 = vadd.f32 0.0, %v3626
        %v3628 = vpop.f32.mrf.mxu0
        %v3629 = vadd.f32 0.0, %v3628
        %v3630 = vpop.f32.mrf.mxu0
        %v3631 = vadd.f32 0.0, %v3630
        %3632 = vdwg.mxu0
        %v3649 = vunpack.c.l.b16 %v3243
        %v3650 = vunpack.c.h.b16 %v3243
        %v3651 = vunpack.c.l.b16 %v3244
        %v3652 = vunpack.c.h.b16 %v3244
        %v3653 = vunpack.c.l.b16 %v3245
        %v3654 = vunpack.c.h.b16 %v3245
        %v3655 = vunpack.c.l.b16 %v3246
        %v3656 = vunpack.c.h.b16 %v3246
        %v3657 = vunpack.c.l.b16 %v3247
        %v3658 = vunpack.c.h.b16 %v3247
        %v3659 = vunpack.c.l.b16 %v3248
        %v3660 = vunpack.c.h.b16 %v3248
        %v3661 = vunpack.c.l.b16 %v3249
        %v3662 = vunpack.c.h.b16 %v3249
        %v3663 = vunpack.c.l.b16 %v3250
        %v3664 = vunpack.c.h.b16 %v3250
        %v3665 = vunpack.c.l.b16 %v3251
        %v3666 = vunpack.c.h.b16 %v3251
        %v3667 = vunpack.c.l.b16 %v3252
        %v3668 = vunpack.c.h.b16 %v3252
        %v3669 = vunpack.c.l.b16 %v3253
        %v3670 = vunpack.c.h.b16 %v3253
        %v3671 = vunpack.c.l.b16 %v3254
        %v3672 = vunpack.c.h.b16 %v3254
        %v3673 = vunpack.c.l.b16 %v3255
        %v3674 = vunpack.c.h.b16 %v3255
        %v3675 = vunpack.c.l.b16 %v3256
        %v3676 = vunpack.c.h.b16 %v3256
        %v3677 = vunpack.c.l.b16 %v3257
        %v3678 = vunpack.c.h.b16 %v3257
        %v3679 = vunpack.c.l.b16 %v3258
        %v3680 = vunpack.c.h.b16 %v3258
        %v3681 = vpack.c.b16 %v3651, %v3649
        %v3682 = vpack.c.b16 %v3652, %v3650
        %v3683 = vpack.c.b16 %v3655, %v3653
        %v3684 = vpack.c.b16 %v3656, %v3654
        %v3685 = vpack.c.b16 %v3659, %v3657
        %v3686 = vpack.c.b16 %v3660, %v3658
        %v3687 = vpack.c.b16 %v3663, %v3661
        %v3688 = vpack.c.b16 %v3664, %v3662
        %v3689 = vpack.c.b16 %v3667, %v3665
        %v3690 = vpack.c.b16 %v3668, %v3666
        %v3691 = vpack.c.b16 %v3671, %v3669
        %v3692 = vpack.c.b16 %v3672, %v3670
        %v3693 = vpack.c.b16 %v3675, %v3673
        %v3694 = vpack.c.b16 %v3676, %v3674
        %v3695 = vpack.c.b16 %v3679, %v3677
        %v3696 = vpack.c.b16 %v3680, %v3678
        %3713 = vmatprep.subr.bf16.mxu0 %v3696
        %3714 = vmatpush1.bf16.msra.mxu0 %v3695
        %3715 = vmatprep.subr.bf16.mxu0 %v3694
        %3716 = vmatpush1.bf16.msra.mxu0 %v3693
        %3717 = vmatprep.subr.bf16.mxu0 %v3692
        %3718 = vmatpush1.bf16.msra.mxu0 %v3691
        %3719 = vmatprep.subr.bf16.mxu0 %v3690
        %3720 = vmatpush1.bf16.msra.mxu0 %v3689
        %3721 = vmatprep.subr.bf16.mxu0 %v3688
        %3722 = vmatpush1.bf16.msra.mxu0 %v3687
        %3723 = vmatprep.subr.bf16.mxu0 %v3686
        %3724 = vmatpush1.bf16.msra.mxu0 %v3685
        %3725 = vmatprep.subr.bf16.mxu0 %v3684
        %3726 = vmatpush1.bf16.msra.mxu0 %v3683
        %3727 = vmatprep.subr.bf16.mxu0 %v3682
        %3728 = vmatpush1.bf16.msra.mxu0 %v3681
        %3729 = vmatprep.subr.bf16.mxu0 0
        %3730 = vmatpush2.bf16.msra.mxu0 0
        %3731 = vmatprep.subr.bf16.mxu0 0
        %3732 = vmatpush2.bf16.msra.mxu0 0
        %3733 = vmatprep.subr.bf16.mxu0 0
        %3734 = vmatpush2.bf16.msra.mxu0 0
        %3735 = vmatprep.subr.bf16.mxu0 0
        %3736 = vmatpush2.bf16.msra.mxu0 0
        %3737 = vmatprep.subr.bf16.mxu0 0
        %3738 = vmatpush2.bf16.msra.mxu0 0
        %3739 = vmatprep.subr.bf16.mxu0 0
        %3740 = vmatpush2.bf16.msra.mxu0 0
        %3741 = vmatprep.subr.bf16.mxu0 0
        %3742 = vmatpush2.bf16.msra.mxu0 0
        %3743 = vmatprep.subr.bf16.mxu0 0
        %3744 = vmatpush2.bf16.msra.mxu0 0
        %3745 = vmatprep.mubr.bf16.mxu0 0
        %3746 = vmatmul.mubr.bf16.gmra.mxu0 %v3231
        %v3747 = vpop.f32.mrf.mxu0
        %v3748 = vadd.f32 %v3515, %v3747
        %v3749 = vpop.f32.mrf.mxu0
        %v3750 = vadd.f32 %v3517, %v3749
        %v3751 = vpop.f32.mrf.mxu0
        %v3752 = vadd.f32 %v3519, %v3751
        %v3753 = vpop.f32.mrf.mxu0
        %v3754 = vadd.f32 %v3521, %v3753
        %3755 = vmatprep.mubr.bf16.mxu0 0
        %3756 = vmatmul.mubr.bf16.gmra.mxu0 %v3232
        %v3757 = vpop.f32.mrf.mxu0
        %v3758 = vadd.f32 %v3525, %v3757
        %v3759 = vpop.f32.mrf.mxu0
        %v3760 = vadd.f32 %v3527, %v3759
        %v3761 = vpop.f32.mrf.mxu0
        %v3762 = vadd.f32 %v3529, %v3761
        %v3763 = vpop.f32.mrf.mxu0
        %v3764 = vadd.f32 %v3531, %v3763
        %3765 = vmatprep.mubr.bf16.mxu0 0
        %3766 = vmatmul.mubr.bf16.gmra.mxu0 %v3233
        %v3767 = vpop.f32.mrf.mxu0
        %v3768 = vadd.f32 %v3535, %v3767
        %v3769 = vpop.f32.mrf.mxu0
        %v3770 = vadd.f32 %v3537, %v3769
        %v3771 = vpop.f32.mrf.mxu0
        %v3772 = vadd.f32 %v3539, %v3771
        %v3773 = vpop.f32.mrf.mxu0
        %v3774 = vadd.f32 %v3541, %v3773
        %3775 = vmatprep.mubr.bf16.mxu0 0
        %3776 = vmatmul.mubr.bf16.gmra.mxu0 %v3234
        %v3777 = vpop.f32.mrf.mxu0
        %v3778 = vadd.f32 %v3545, %v3777
        %v3779 = vpop.f32.mrf.mxu0
        %v3780 = vadd.f32 %v3547, %v3779
        %v3781 = vpop.f32.mrf.mxu0
        %v3782 = vadd.f32 %v3549, %v3781
        %v3783 = vpop.f32.mrf.mxu0
        %v3784 = vadd.f32 %v3551, %v3783
        %3785 = vmatprep.mubr.bf16.mxu0 0
        %3786 = vmatmul.mubr.bf16.gmra.mxu0 %v3235
        %v3787 = vpop.f32.mrf.mxu0
        %v3788 = vadd.f32 %v3555, %v3787
        %v3789 = vpop.f32.mrf.mxu0
        %v3790 = vadd.f32 %v3557, %v3789
        %v3791 = vpop.f32.mrf.mxu0
        %v3792 = vadd.f32 %v3559, %v3791
        %v3793 = vpop.f32.mrf.mxu0
        %v3794 = vadd.f32 %v3561, %v3793
        %3795 = vmatprep.mubr.bf16.mxu0 0
        %3796 = vmatmul.mubr.bf16.gmra.mxu0 %v3236
        %v3797 = vpop.f32.mrf.mxu0
        %v3798 = vadd.f32 %v3565, %v3797
        %v3799 = vpop.f32.mrf.mxu0
        %v3800 = vadd.f32 %v3567, %v3799
        %v3801 = vpop.f32.mrf.mxu0
        %v3802 = vadd.f32 %v3569, %v3801
        %v3803 = vpop.f32.mrf.mxu0
        %v3804 = vadd.f32 %v3571, %v3803
        %3805 = vmatprep.mubr.bf16.mxu0 0
        %3806 = vmatmul.mubr.bf16.gmra.mxu0 %v3237
        %v3807 = vpop.f32.mrf.mxu0
        %v3808 = vadd.f32 %v3575, %v3807
        %v3809 = vpop.f32.mrf.mxu0
        %v3810 = vadd.f32 %v3577, %v3809
        %v3811 = vpop.f32.mrf.mxu0
        %v3812 = vadd.f32 %v3579, %v3811
        %v3813 = vpop.f32.mrf.mxu0
        %v3814 = vadd.f32 %v3581, %v3813
        %3815 = vmatprep.mubr.bf16.mxu0 0
        %3816 = vmatmul.mubr.bf16.gmra.mxu0 %v3238
        %v3817 = vpop.f32.mrf.mxu0
        %v3818 = vadd.f32 %v3585, %v3817
        %v3819 = vpop.f32.mrf.mxu0
        %v3820 = vadd.f32 %v3587, %v3819
        %v3821 = vpop.f32.mrf.mxu0
        %v3822 = vadd.f32 %v3589, %v3821
        %v3823 = vpop.f32.mrf.mxu0
        %v3824 = vadd.f32 %v3591, %v3823
        %3825 = vmatprep.mubr.bf16.mxu0 0
        %3826 = vmatmul.mubr.bf16.gmra.mxu0 %v3239
        %v3827 = vpop.f32.mrf.mxu0
        %v3828 = vadd.f32 %v3595, %v3827
        %v3829 = vpop.f32.mrf.mxu0
        %v3830 = vadd.f32 %v3597, %v3829
        %v3831 = vpop.f32.mrf.mxu0
        %v3832 = vadd.f32 %v3599, %v3831
        %v3833 = vpop.f32.mrf.mxu0
        %v3834 = vadd.f32 %v3601, %v3833
        %3835 = vmatprep.mubr.bf16.mxu0 0
        %3836 = vmatmul.mubr.bf16.gmra.mxu0 %v3240
        %v3837 = vpop.f32.mrf.mxu0
        %v3838 = vadd.f32 %v3605, %v3837
        %v3839 = vpop.f32.mrf.mxu0
        %v3840 = vadd.f32 %v3607, %v3839
        %v3841 = vpop.f32.mrf.mxu0
        %v3842 = vadd.f32 %v3609, %v3841
        %v3843 = vpop.f32.mrf.mxu0
        %v3844 = vadd.f32 %v3611, %v3843
        %3845 = vmatprep.mubr.bf16.mxu0 0
        %3846 = vmatmul.mubr.bf16.gmra.mxu0 %v3241
        %v3847 = vpop.f32.mrf.mxu0
        %v3848 = vadd.f32 %v3615, %v3847
        %v3849 = vpop.f32.mrf.mxu0
        %v3850 = vadd.f32 %v3617, %v3849
        %v3851 = vpop.f32.mrf.mxu0
        %v3852 = vadd.f32 %v3619, %v3851
        %v3853 = vpop.f32.mrf.mxu0
        %v3854 = vadd.f32 %v3621, %v3853
        %3855 = vmatprep.mubr.bf16.mxu0 0
        %3856 = vmatmul.mubr.bf16.gmra.mxu0 %v3242
        %v3857 = vpop.f32.mrf.mxu0
        %v3858 = vadd.f32 %v3625, %v3857
        %v3859 = vpop.f32.mrf.mxu0
        %v3860 = vadd.f32 %v3627, %v3859
        %v3861 = vpop.f32.mrf.mxu0
        %v3862 = vadd.f32 %v3629, %v3861
        %v3863 = vpop.f32.mrf.mxu0
        %v3864 = vadd.f32 %v3631, %v3863
        %3865 = vdwg.mxu0
        %vm3866 = vcmask 1043456
        %v3867 = vrot.slane %v3199, 4
        %v3868 = vrot.slane %v3200, 4
        %v3869 = vsel %vm3866, %v3867, %v3868
        %v3870 = vrot.slane %v3201, 4
        %v3871 = vsel %vm3866, %v3868, %v3870
        %v3872 = vrot.slane %v3202, 4
        %v3873 = vsel %vm3866, %v3870, %v3872
        %v3874 = vrot.slane %v3203, 4
        %v3875 = vrot.slane %v3204, 4
        %v3876 = vsel %vm3866, %v3874, %v3875
        %v3877 = vrot.slane %v3205, 4
        %v3878 = vsel %vm3866, %v3875, %v3877
        %v3879 = vrot.slane %v3206, 4
        %v3880 = vsel %vm3866, %v3877, %v3879
        %v3881 = vrot.slane %v3207, 4
        %v3882 = vrot.slane %v3208, 4
        %v3883 = vsel %vm3866, %v3881, %v3882
        %v3884 = vrot.slane %v3209, 4
        %v3885 = vsel %vm3866, %v3882, %v3884
        %v3886 = vrot.slane %v3210, 4
        %v3887 = vsel %vm3866, %v3884, %v3886
        %v3888 = vrot.slane %v3211, 4
        %v3889 = vrot.slane %v3212, 4
        %v3890 = vsel %vm3866, %v3888, %v3889
        %v3891 = vrot.slane %v3213, 4
        %v3892 = vsel %vm3866, %v3889, %v3891
        %v3893 = vrot.slane %v3214, 4
        %v3894 = vsel %vm3866, %v3891, %v3893
        %v3895 = vrot.slane %v3215, 4
        %v3896 = vrot.slane %v3216, 4
        %v3897 = vsel %vm3866, %v3895, %v3896
        %v3898 = vrot.slane %v3217, 4
        %v3899 = vsel %vm3866, %v3896, %v3898
        %v3900 = vrot.slane %v3218, 4
        %v3901 = vsel %vm3866, %v3898, %v3900
        %v3902 = vrot.slane %v3219, 4
        %v3903 = vrot.slane %v3220, 4
        %v3904 = vsel %vm3866, %v3902, %v3903
        %v3905 = vrot.slane %v3221, 4
        %v3906 = vsel %vm3866, %v3903, %v3905
        %v3907 = vrot.slane %v3222, 4
        %v3908 = vsel %vm3866, %v3905, %v3907
        %v3909 = vrot.slane %v3223, 4
        %v3910 = vrot.slane %v3224, 4
        %v3911 = vsel %vm3866, %v3909, %v3910
        %v3912 = vrot.slane %v3225, 4
        %v3913 = vsel %vm3866, %v3910, %v3912
        %v3914 = vrot.slane %v3226, 4
        %v3915 = vsel %vm3866, %v3912, %v3914
        %v3916 = vrot.slane %v3227, 4
        %v3917 = vrot.slane %v3228, 4
        %v3918 = vsel %vm3866, %v3916, %v3917
        %v3919 = vrot.slane %v3229, 4
        %v3920 = vsel %vm3866, %v3917, %v3919
        %v3921 = vrot.slane %v3230, 4
        %v3922 = vsel %vm3866, %v3919, %v3921
        %v3947 = vpack.c.bf16 %v3871, %v3869
        %v3948 = vpack.c.bf16 %v3876, %v3873
        %v3949 = vpack.c.bf16 %v3880, %v3878
        %v3950 = vpack.c.bf16 %v3885, %v3883
        %v3951 = vpack.c.bf16 %v3890, %v3887
        %v3952 = vpack.c.bf16 %v3894, %v3892
        %v3953 = vpack.c.bf16 %v3899, %v3897
        %v3954 = vpack.c.bf16 %v3904, %v3901
        %v3955 = vpack.c.bf16 %v3908, %v3906
        %v3956 = vpack.c.bf16 %v3913, %v3911
        %v3957 = vpack.c.bf16 %v3918, %v3915
        %v3958 = vpack.c.bf16 %v3922, %v3920
        %s3959 = scalar_lea.vmem %s3, 256
        %v3960 = vld [vmem:[%s3959] sm:$0xff]
        %v3961 = vld [vmem:[%s3959 + $0x8] sm:$0xff]
        %v3962 = vld [vmem:[%s3959 + $0x10] sm:$0xff]
        %v3963 = vld [vmem:[%s3959 + $0x18] sm:$0xff]
        %v3964 = vld [vmem:[%s3959 + $0x20] sm:$0xff]
        %v3965 = vld [vmem:[%s3959 + $0x28] sm:$0xff]
        %v3966 = vld [vmem:[%s3959 + $0x30] sm:$0xff]
        %v3967 = vld [vmem:[%s3959 + $0x38] sm:$0xff]
        %v3968 = vld [vmem:[%s3959 + $0x40] sm:$0xff]
        %v3969 = vld [vmem:[%s3959 + $0x48] sm:$0xff]
        %v3970 = vld [vmem:[%s3959 + $0x50] sm:$0xff]
        %v3971 = vld [vmem:[%s3959 + $0x58] sm:$0xff]
        %v3972 = vld [vmem:[%s3959 + $0x60] sm:$0xff]
        %v3973 = vld [vmem:[%s3959 + $0x68] sm:$0xff]
        %v3974 = vld [vmem:[%s3959 + $0x70] sm:$0xff]
        %v3975 = vld [vmem:[%s3959 + $0x78] sm:$0xff]
        %v3992 = vunpack.c.l.b16 %v3960
        %v3993 = vunpack.c.h.b16 %v3960
        %v3994 = vunpack.c.l.b16 %v3961
        %v3995 = vunpack.c.h.b16 %v3961
        %v3996 = vunpack.c.l.b16 %v3962
        %v3997 = vunpack.c.h.b16 %v3962
        %v3998 = vunpack.c.l.b16 %v3963
        %v3999 = vunpack.c.h.b16 %v3963
        %v4000 = vunpack.c.l.b16 %v3964
        %v4001 = vunpack.c.h.b16 %v3964
        %v4002 = vunpack.c.l.b16 %v3965
        %v4003 = vunpack.c.h.b16 %v3965
        %v4004 = vunpack.c.l.b16 %v3966
        %v4005 = vunpack.c.h.b16 %v3966
        %v4006 = vunpack.c.l.b16 %v3967
        %v4007 = vunpack.c.h.b16 %v3967
        %v4008 = vunpack.c.l.b16 %v3968
        %v4009 = vunpack.c.h.b16 %v3968
        %v4010 = vunpack.c.l.b16 %v3969
        %v4011 = vunpack.c.h.b16 %v3969
        %v4012 = vunpack.c.l.b16 %v3970
        %v4013 = vunpack.c.h.b16 %v3970
        %v4014 = vunpack.c.l.b16 %v3971
        %v4015 = vunpack.c.h.b16 %v3971
        %v4016 = vunpack.c.l.b16 %v3972
        %v4017 = vunpack.c.h.b16 %v3972
        %v4018 = vunpack.c.l.b16 %v3973
        %v4019 = vunpack.c.h.b16 %v3973
        %v4020 = vunpack.c.l.b16 %v3974
        %v4021 = vunpack.c.h.b16 %v3974
        %v4022 = vunpack.c.l.b16 %v3975
        %v4023 = vunpack.c.h.b16 %v3975
        %v4024 = vpack.c.b16 %v3994, %v3992
        %v4025 = vpack.c.b16 %v3995, %v3993
        %v4026 = vpack.c.b16 %v3998, %v3996
        %v4027 = vpack.c.b16 %v3999, %v3997
        %v4028 = vpack.c.b16 %v4002, %v4000
        %v4029 = vpack.c.b16 %v4003, %v4001
        %v4030 = vpack.c.b16 %v4006, %v4004
        %v4031 = vpack.c.b16 %v4007, %v4005
        %v4032 = vpack.c.b16 %v4010, %v4008
        %v4033 = vpack.c.b16 %v4011, %v4009
        %v4034 = vpack.c.b16 %v4014, %v4012
        %v4035 = vpack.c.b16 %v4015, %v4013
        %v4036 = vpack.c.b16 %v4018, %v4016
        %v4037 = vpack.c.b16 %v4019, %v4017
        %v4038 = vpack.c.b16 %v4022, %v4020
        %v4039 = vpack.c.b16 %v4023, %v4021
        %4056 = vmatprep.subr.bf16.mxu0 %v4039
        %4057 = vmatpush1.bf16.msra.mxu0 %v4038
        %4058 = vmatprep.subr.bf16.mxu0 %v4037
        %4059 = vmatpush1.bf16.msra.mxu0 %v4036
        %4060 = vmatprep.subr.bf16.mxu0 %v4035
        %4061 = vmatpush1.bf16.msra.mxu0 %v4034
        %4062 = vmatprep.subr.bf16.mxu0 %v4033
        %4063 = vmatpush1.bf16.msra.mxu0 %v4032
        %4064 = vmatprep.subr.bf16.mxu0 %v4031
        %4065 = vmatpush1.bf16.msra.mxu0 %v4030
        %4066 = vmatprep.subr.bf16.mxu0 %v4029
        %4067 = vmatpush1.bf16.msra.mxu0 %v4028
        %4068 = vmatprep.subr.bf16.mxu0 %v4027
        %4069 = vmatpush1.bf16.msra.mxu0 %v4026
        %4070 = vmatprep.subr.bf16.mxu0 %v4025
        %4071 = vmatpush1.bf16.msra.mxu0 %v4024
        %4072 = vmatprep.subr.bf16.mxu0 0
        %4073 = vmatpush2.bf16.msra.mxu0 0
        %4074 = vmatprep.subr.bf16.mxu0 0
        %4075 = vmatpush2.bf16.msra.mxu0 0
        %4076 = vmatprep.subr.bf16.mxu0 0
        %4077 = vmatpush2.bf16.msra.mxu0 0
        %4078 = vmatprep.subr.bf16.mxu0 0
        %4079 = vmatpush2.bf16.msra.mxu0 0
        %4080 = vmatprep.subr.bf16.mxu0 0
        %4081 = vmatpush2.bf16.msra.mxu0 0
        %4082 = vmatprep.subr.bf16.mxu0 0
        %4083 = vmatpush2.bf16.msra.mxu0 0
        %4084 = vmatprep.subr.bf16.mxu0 0
        %4085 = vmatpush2.bf16.msra.mxu0 0
        %4086 = vmatprep.subr.bf16.mxu0 0
        %4087 = vmatpush2.bf16.msra.mxu0 0
        %4088 = vmatprep.mubr.bf16.mxu0 0
        %4089 = vmatmul.mubr.bf16.gmra.mxu0 %v3947
        %v4090 = vpop.f32.mrf.mxu0
        %v4091 = vadd.f32 0.0, %v4090
        %v4092 = vpop.f32.mrf.mxu0
        %v4093 = vadd.f32 0.0, %v4092
        %v4094 = vpop.f32.mrf.mxu0
        %v4095 = vadd.f32 0.0, %v4094
        %v4096 = vpop.f32.mrf.mxu0
        %v4097 = vadd.f32 0.0, %v4096
        %4098 = vmatprep.mubr.bf16.mxu0 0
        %4099 = vmatmul.mubr.bf16.gmra.mxu0 %v3948
        %v4100 = vpop.f32.mrf.mxu0
        %v4101 = vadd.f32 0.0, %v4100
        %v4102 = vpop.f32.mrf.mxu0
        %v4103 = vadd.f32 0.0, %v4102
        %v4104 = vpop.f32.mrf.mxu0
        %v4105 = vadd.f32 0.0, %v4104
        %v4106 = vpop.f32.mrf.mxu0
        %v4107 = vadd.f32 0.0, %v4106
        %4108 = vmatprep.mubr.bf16.mxu0 0
        %4109 = vmatmul.mubr.bf16.gmra.mxu0 %v3949
        %v4110 = vpop.f32.mrf.mxu0
        %v4111 = vadd.f32 0.0, %v4110
        %v4112 = vpop.f32.mrf.mxu0
        %v4113 = vadd.f32 0.0, %v4112
        %v4114 = vpop.f32.mrf.mxu0
        %v4115 = vadd.f32 0.0, %v4114
        %v4116 = vpop.f32.mrf.mxu0
        %v4117 = vadd.f32 0.0, %v4116
        %4118 = vmatprep.mubr.bf16.mxu0 0
        %4119 = vmatmul.mubr.bf16.gmra.mxu0 %v3950
        %v4120 = vpop.f32.mrf.mxu0
        %v4121 = vadd.f32 0.0, %v4120
        %v4122 = vpop.f32.mrf.mxu0
        %v4123 = vadd.f32 0.0, %v4122
        %v4124 = vpop.f32.mrf.mxu0
        %v4125 = vadd.f32 0.0, %v4124
        %v4126 = vpop.f32.mrf.mxu0
        %v4127 = vadd.f32 0.0, %v4126
        %4128 = vmatprep.mubr.bf16.mxu0 0
        %4129 = vmatmul.mubr.bf16.gmra.mxu0 %v3951
        %v4130 = vpop.f32.mrf.mxu0
        %v4131 = vadd.f32 0.0, %v4130
        %v4132 = vpop.f32.mrf.mxu0
        %v4133 = vadd.f32 0.0, %v4132
        %v4134 = vpop.f32.mrf.mxu0
        %v4135 = vadd.f32 0.0, %v4134
        %v4136 = vpop.f32.mrf.mxu0
        %v4137 = vadd.f32 0.0, %v4136
        %4138 = vmatprep.mubr.bf16.mxu0 0
        %4139 = vmatmul.mubr.bf16.gmra.mxu0 %v3952
        %v4140 = vpop.f32.mrf.mxu0
        %v4141 = vadd.f32 0.0, %v4140
        %v4142 = vpop.f32.mrf.mxu0
        %v4143 = vadd.f32 0.0, %v4142
        %v4144 = vpop.f32.mrf.mxu0
        %v4145 = vadd.f32 0.0, %v4144
        %v4146 = vpop.f32.mrf.mxu0
        %v4147 = vadd.f32 0.0, %v4146
        %4148 = vmatprep.mubr.bf16.mxu0 0
        %4149 = vmatmul.mubr.bf16.gmra.mxu0 %v3953
        %v4150 = vpop.f32.mrf.mxu0
        %v4151 = vadd.f32 0.0, %v4150
        %v4152 = vpop.f32.mrf.mxu0
        %v4153 = vadd.f32 0.0, %v4152
        %v4154 = vpop.f32.mrf.mxu0
        %v4155 = vadd.f32 0.0, %v4154
        %v4156 = vpop.f32.mrf.mxu0
        %v4157 = vadd.f32 0.0, %v4156
        %4158 = vmatprep.mubr.bf16.mxu0 0
        %4159 = vmatmul.mubr.bf16.gmra.mxu0 %v3954
        %v4160 = vpop.f32.mrf.mxu0
        %v4161 = vadd.f32 0.0, %v4160
        %v4162 = vpop.f32.mrf.mxu0
        %v4163 = vadd.f32 0.0, %v4162
        %v4164 = vpop.f32.mrf.mxu0
        %v4165 = vadd.f32 0.0, %v4164
        %v4166 = vpop.f32.mrf.mxu0
        %v4167 = vadd.f32 0.0, %v4166
        %4168 = vmatprep.mubr.bf16.mxu0 0
        %4169 = vmatmul.mubr.bf16.gmra.mxu0 %v3955
        %v4170 = vpop.f32.mrf.mxu0
        %v4171 = vadd.f32 0.0, %v4170
        %v4172 = vpop.f32.mrf.mxu0
        %v4173 = vadd.f32 0.0, %v4172
        %v4174 = vpop.f32.mrf.mxu0
        %v4175 = vadd.f32 0.0, %v4174
        %v4176 = vpop.f32.mrf.mxu0
        %v4177 = vadd.f32 0.0, %v4176
        %4178 = vmatprep.mubr.bf16.mxu0 0
        %4179 = vmatmul.mubr.bf16.gmra.mxu0 %v3956
        %v4180 = vpop.f32.mrf.mxu0
        %v4181 = vadd.f32 0.0, %v4180
        %v4182 = vpop.f32.mrf.mxu0
        %v4183 = vadd.f32 0.0, %v4182
        %v4184 = vpop.f32.mrf.mxu0
        %v4185 = vadd.f32 0.0, %v4184
        %v4186 = vpop.f32.mrf.mxu0
        %v4187 = vadd.f32 0.0, %v4186
        %4188 = vmatprep.mubr.bf16.mxu0 0
        %4189 = vmatmul.mubr.bf16.gmra.mxu0 %v3957
        %v4190 = vpop.f32.mrf.mxu0
        %v4191 = vadd.f32 0.0, %v4190
        %v4192 = vpop.f32.mrf.mxu0
        %v4193 = vadd.f32 0.0, %v4192
        %v4194 = vpop.f32.mrf.mxu0
        %v4195 = vadd.f32 0.0, %v4194
        %v4196 = vpop.f32.mrf.mxu0
        %v4197 = vadd.f32 0.0, %v4196
        %4198 = vmatprep.mubr.bf16.mxu0 0
        %4199 = vmatmul.mubr.bf16.gmra.mxu0 %v3958
        %v4200 = vpop.f32.mrf.mxu0
        %v4201 = vadd.f32 0.0, %v4200
        %v4202 = vpop.f32.mrf.mxu0
        %v4203 = vadd.f32 0.0, %v4202
        %v4204 = vpop.f32.mrf.mxu0
        %v4205 = vadd.f32 0.0, %v4204
        %v4206 = vpop.f32.mrf.mxu0
        %v4207 = vadd.f32 0.0, %v4206
        %4208 = vdwg.mxu0
        %v4209 = vadd.f32 %v3748, %v4091
        %v4210 = vadd.f32 %v3750, %v4093
        %v4211 = vadd.f32 %v3752, %v4095
        %v4212 = vadd.f32 %v3754, %v4097
        %v4213 = vadd.f32 %v3758, %v4101
        %v4214 = vadd.f32 %v3760, %v4103
        %v4215 = vadd.f32 %v3762, %v4105
        %v4216 = vadd.f32 %v3764, %v4107
        %v4217 = vadd.f32 %v3768, %v4111
        %v4218 = vadd.f32 %v3770, %v4113
        %v4219 = vadd.f32 %v3772, %v4115
        %v4220 = vadd.f32 %v3774, %v4117
        %v4221 = vadd.f32 %v3778, %v4121
        %v4222 = vadd.f32 %v3780, %v4123
        %v4223 = vadd.f32 %v3782, %v4125
        %v4224 = vadd.f32 %v3784, %v4127
        %v4225 = vadd.f32 %v3788, %v4131
        %v4226 = vadd.f32 %v3790, %v4133
        %v4227 = vadd.f32 %v3792, %v4135
        %v4228 = vadd.f32 %v3794, %v4137
        %v4229 = vadd.f32 %v3798, %v4141
        %v4230 = vadd.f32 %v3800, %v4143
        %v4231 = vadd.f32 %v3802, %v4145
        %v4232 = vadd.f32 %v3804, %v4147
        %v4233 = vadd.f32 %v3808, %v4151
        %v4234 = vadd.f32 %v3810, %v4153
        %v4235 = vadd.f32 %v3812, %v4155
        %v4236 = vadd.f32 %v3814, %v4157
        %v4237 = vadd.f32 %v3818, %v4161
        %v4238 = vadd.f32 %v3820, %v4163
        %v4239 = vadd.f32 %v3822, %v4165
        %v4240 = vadd.f32 %v3824, %v4167
        %v4241 = vadd.f32 %v3828, %v4171
        %v4242 = vadd.f32 %v3830, %v4173
        %v4243 = vadd.f32 %v3832, %v4175
        %v4244 = vadd.f32 %v3834, %v4177
        %v4245 = vadd.f32 %v3838, %v4181
        %v4246 = vadd.f32 %v3840, %v4183
        %v4247 = vadd.f32 %v3842, %v4185
        %v4248 = vadd.f32 %v3844, %v4187
        %v4249 = vadd.f32 %v3848, %v4191
        %v4250 = vadd.f32 %v3850, %v4193
        %v4251 = vadd.f32 %v3852, %v4195
        %v4252 = vadd.f32 %v3854, %v4197
        %v4253 = vadd.f32 %v3858, %v4201
        %v4254 = vadd.f32 %v3860, %v4203
        %v4255 = vadd.f32 %v3862, %v4205
        %v4256 = vadd.f32 %v3864, %v4207
        %vm4257 = vcmask 1041408
        %v4258 = vrot.slane %v3199, 6
        %v4259 = vrot.slane %v3200, 6
        %v4260 = vsel %vm4257, %v4258, %v4259
        %v4261 = vrot.slane %v3201, 6
        %v4262 = vsel %vm4257, %v4259, %v4261
        %v4263 = vrot.slane %v3202, 6
        %v4264 = vsel %vm4257, %v4261, %v4263
        %v4265 = vrot.slane %v3203, 6
        %v4266 = vrot.slane %v3204, 6
        %v4267 = vsel %vm4257, %v4265, %v4266
        %v4268 = vrot.slane %v3205, 6
        %v4269 = vsel %vm4257, %v4266, %v4268
        %v4270 = vrot.slane %v3206, 6
        %v4271 = vsel %vm4257, %v4268, %v4270
        %v4272 = vrot.slane %v3207, 6
        %v4273 = vrot.slane %v3208, 6
        %v4274 = vsel %vm4257, %v4272, %v4273
        %v4275 = vrot.slane %v3209, 6
        %v4276 = vsel %vm4257, %v4273, %v4275
        %v4277 = vrot.slane %v3210, 6
        %v4278 = vsel %vm4257, %v4275, %v4277
        %v4279 = vrot.slane %v3211, 6
        %v4280 = vrot.slane %v3212, 6
        %v4281 = vsel %vm4257, %v4279, %v4280
        %v4282 = vrot.slane %v3213, 6
        %v4283 = vsel %vm4257, %v4280, %v4282
        %v4284 = vrot.slane %v3214, 6
        %v4285 = vsel %vm4257, %v4282, %v4284
        %v4286 = vrot.slane %v3215, 6
        %v4287 = vrot.slane %v3216, 6
        %v4288 = vsel %vm4257, %v4286, %v4287
        %v4289 = vrot.slane %v3217, 6
        %v4290 = vsel %vm4257, %v4287, %v4289
        %v4291 = vrot.slane %v3218, 6
        %v4292 = vsel %vm4257, %v4289, %v4291
        %v4293 = vrot.slane %v3219, 6
        %v4294 = vrot.slane %v3220, 6
        %v4295 = vsel %vm4257, %v4293, %v4294
        %v4296 = vrot.slane %v3221, 6
        %v4297 = vsel %vm4257, %v4294, %v4296
        %v4298 = vrot.slane %v3222, 6
        %v4299 = vsel %vm4257, %v4296, %v4298
        %v4300 = vrot.slane %v3223, 6
        %v4301 = vrot.slane %v3224, 6
        %v4302 = vsel %vm4257, %v4300, %v4301
        %v4303 = vrot.slane %v3225, 6
        %v4304 = vsel %vm4257, %v4301, %v4303
        %v4305 = vrot.slane %v3226, 6
        %v4306 = vsel %vm4257, %v4303, %v4305
        %v4307 = vrot.slane %v3227, 6
        %v4308 = vrot.slane %v3228, 6
        %v4309 = vsel %vm4257, %v4307, %v4308
        %v4310 = vrot.slane %v3229, 6
        %v4311 = vsel %vm4257, %v4308, %v4310
        %v4312 = vrot.slane %v3230, 6
        %v4313 = vsel %vm4257, %v4310, %v4312
        %v4338 = vpack.c.bf16 %v4262, %v4260
        %v4339 = vpack.c.bf16 %v4267, %v4264
        %v4340 = vpack.c.bf16 %v4271, %v4269
        %v4341 = vpack.c.bf16 %v4276, %v4274
        %v4342 = vpack.c.bf16 %v4281, %v4278
        %v4343 = vpack.c.bf16 %v4285, %v4283
        %v4344 = vpack.c.bf16 %v4290, %v4288
        %v4345 = vpack.c.bf16 %v4295, %v4292
        %v4346 = vpack.c.bf16 %v4299, %v4297
        %v4347 = vpack.c.bf16 %v4304, %v4302
        %v4348 = vpack.c.bf16 %v4309, %v4306
        %v4349 = vpack.c.bf16 %v4313, %v4311
        %s4350 = scalar_lea.vmem %s3, 384
        %v4351 = vld [vmem:[%s4350] sm:$0xff]
        %v4352 = vld [vmem:[%s4350 + $0x8] sm:$0xff]
        %v4353 = vld [vmem:[%s4350 + $0x10] sm:$0xff]
        %v4354 = vld [vmem:[%s4350 + $0x18] sm:$0xff]
        %v4355 = vld [vmem:[%s4350 + $0x20] sm:$0xff]
        %v4356 = vld [vmem:[%s4350 + $0x28] sm:$0xff]
        %v4357 = vld [vmem:[%s4350 + $0x30] sm:$0xff]
        %v4358 = vld [vmem:[%s4350 + $0x38] sm:$0xff]
        %v4359 = vld [vmem:[%s4350 + $0x40] sm:$0xff]
        %v4360 = vld [vmem:[%s4350 + $0x48] sm:$0xff]
        %v4361 = vld [vmem:[%s4350 + $0x50] sm:$0xff]
        %v4362 = vld [vmem:[%s4350 + $0x58] sm:$0xff]
        %v4363 = vld [vmem:[%s4350 + $0x60] sm:$0xff]
        %v4364 = vld [vmem:[%s4350 + $0x68] sm:$0xff]
        %v4365 = vld [vmem:[%s4350 + $0x70] sm:$0xff]
        %v4366 = vld [vmem:[%s4350 + $0x78] sm:$0xff]
        %v4383 = vunpack.c.l.b16 %v4351
        %v4384 = vunpack.c.h.b16 %v4351
        %v4385 = vunpack.c.l.b16 %v4352
        %v4386 = vunpack.c.h.b16 %v4352
        %v4387 = vunpack.c.l.b16 %v4353
        %v4388 = vunpack.c.h.b16 %v4353
        %v4389 = vunpack.c.l.b16 %v4354
        %v4390 = vunpack.c.h.b16 %v4354
        %v4391 = vunpack.c.l.b16 %v4355
        %v4392 = vunpack.c.h.b16 %v4355
        %v4393 = vunpack.c.l.b16 %v4356
        %v4394 = vunpack.c.h.b16 %v4356
        %v4395 = vunpack.c.l.b16 %v4357
        %v4396 = vunpack.c.h.b16 %v4357
        %v4397 = vunpack.c.l.b16 %v4358
        %v4398 = vunpack.c.h.b16 %v4358
        %v4399 = vunpack.c.l.b16 %v4359
        %v4400 = vunpack.c.h.b16 %v4359
        %v4401 = vunpack.c.l.b16 %v4360
        %v4402 = vunpack.c.h.b16 %v4360
        %v4403 = vunpack.c.l.b16 %v4361
        %v4404 = vunpack.c.h.b16 %v4361
        %v4405 = vunpack.c.l.b16 %v4362
        %v4406 = vunpack.c.h.b16 %v4362
        %v4407 = vunpack.c.l.b16 %v4363
        %v4408 = vunpack.c.h.b16 %v4363
        %v4409 = vunpack.c.l.b16 %v4364
        %v4410 = vunpack.c.h.b16 %v4364
        %v4411 = vunpack.c.l.b16 %v4365
        %v4412 = vunpack.c.h.b16 %v4365
        %v4413 = vunpack.c.l.b16 %v4366
        %v4414 = vunpack.c.h.b16 %v4366
        %v4415 = vpack.c.b16 %v4385, %v4383
        %v4416 = vpack.c.b16 %v4386, %v4384
        %v4417 = vpack.c.b16 %v4389, %v4387
        %v4418 = vpack.c.b16 %v4390, %v4388
        %v4419 = vpack.c.b16 %v4393, %v4391
        %v4420 = vpack.c.b16 %v4394, %v4392
        %v4421 = vpack.c.b16 %v4397, %v4395
        %v4422 = vpack.c.b16 %v4398, %v4396
        %v4423 = vpack.c.b16 %v4401, %v4399
        %v4424 = vpack.c.b16 %v4402, %v4400
        %v4425 = vpack.c.b16 %v4405, %v4403
        %v4426 = vpack.c.b16 %v4406, %v4404
        %v4427 = vpack.c.b16 %v4409, %v4407
        %v4428 = vpack.c.b16 %v4410, %v4408
        %v4429 = vpack.c.b16 %v4413, %v4411
        %v4430 = vpack.c.b16 %v4414, %v4412
        %4447 = vmatprep.subr.bf16.mxu0 %v4430
        %4448 = vmatpush1.bf16.msra.mxu0 %v4429
        %4449 = vmatprep.subr.bf16.mxu0 %v4428
        %4450 = vmatpush1.bf16.msra.mxu0 %v4427
        %4451 = vmatprep.subr.bf16.mxu0 %v4426
        %4452 = vmatpush1.bf16.msra.mxu0 %v4425
        %4453 = vmatprep.subr.bf16.mxu0 %v4424
        %4454 = vmatpush1.bf16.msra.mxu0 %v4423
        %4455 = vmatprep.subr.bf16.mxu0 %v4422
        %4456 = vmatpush1.bf16.msra.mxu0 %v4421
        %4457 = vmatprep.subr.bf16.mxu0 %v4420
        %4458 = vmatpush1.bf16.msra.mxu0 %v4419
        %4459 = vmatprep.subr.bf16.mxu0 %v4418
        %4460 = vmatpush1.bf16.msra.mxu0 %v4417
        %4461 = vmatprep.subr.bf16.mxu0 %v4416
        %4462 = vmatpush1.bf16.msra.mxu0 %v4415
        %4463 = vmatprep.subr.bf16.mxu0 0
        %4464 = vmatpush2.bf16.msra.mxu0 0
        %4465 = vmatprep.subr.bf16.mxu0 0
        %4466 = vmatpush2.bf16.msra.mxu0 0
        %4467 = vmatprep.subr.bf16.mxu0 0
        %4468 = vmatpush2.bf16.msra.mxu0 0
        %4469 = vmatprep.subr.bf16.mxu0 0
        %4470 = vmatpush2.bf16.msra.mxu0 0
        %4471 = vmatprep.subr.bf16.mxu0 0
        %4472 = vmatpush2.bf16.msra.mxu0 0
        %4473 = vmatprep.subr.bf16.mxu0 0
        %4474 = vmatpush2.bf16.msra.mxu0 0
        %4475 = vmatprep.subr.bf16.mxu0 0
        %4476 = vmatpush2.bf16.msra.mxu0 0
        %4477 = vmatprep.subr.bf16.mxu0 0
        %4478 = vmatpush2.bf16.msra.mxu0 0
        %4479 = vmatprep.mubr.bf16.mxu0 0
        %4480 = vmatmul.mubr.bf16.gmra.mxu0 %v4338
        %v4481 = vpop.f32.mrf.mxu0
        %v4482 = vadd.f32 0.0, %v4481
        %v4483 = vpop.f32.mrf.mxu0
        %v4484 = vadd.f32 0.0, %v4483
        %v4485 = vpop.f32.mrf.mxu0
        %v4486 = vadd.f32 0.0, %v4485
        %v4487 = vpop.f32.mrf.mxu0
        %v4488 = vadd.f32 0.0, %v4487
        %4489 = vmatprep.mubr.bf16.mxu0 0
        %4490 = vmatmul.mubr.bf16.gmra.mxu0 %v4339
        %v4491 = vpop.f32.mrf.mxu0
        %v4492 = vadd.f32 0.0, %v4491
        %v4493 = vpop.f32.mrf.mxu0
        %v4494 = vadd.f32 0.0, %v4493
        %v4495 = vpop.f32.mrf.mxu0
        %v4496 = vadd.f32 0.0, %v4495
        %v4497 = vpop.f32.mrf.mxu0
        %v4498 = vadd.f32 0.0, %v4497
        %4499 = vmatprep.mubr.bf16.mxu0 0
        %4500 = vmatmul.mubr.bf16.gmra.mxu0 %v4340
        %v4501 = vpop.f32.mrf.mxu0
        %v4502 = vadd.f32 0.0, %v4501
        %v4503 = vpop.f32.mrf.mxu0
        %v4504 = vadd.f32 0.0, %v4503
        %v4505 = vpop.f32.mrf.mxu0
        %v4506 = vadd.f32 0.0, %v4505
        %v4507 = vpop.f32.mrf.mxu0
        %v4508 = vadd.f32 0.0, %v4507
        %4509 = vmatprep.mubr.bf16.mxu0 0
        %4510 = vmatmul.mubr.bf16.gmra.mxu0 %v4341
        %v4511 = vpop.f32.mrf.mxu0
        %v4512 = vadd.f32 0.0, %v4511
        %v4513 = vpop.f32.mrf.mxu0
        %v4514 = vadd.f32 0.0, %v4513
        %v4515 = vpop.f32.mrf.mxu0
        %v4516 = vadd.f32 0.0, %v4515
        %v4517 = vpop.f32.mrf.mxu0
        %v4518 = vadd.f32 0.0, %v4517
        %4519 = vmatprep.mubr.bf16.mxu0 0
        %4520 = vmatmul.mubr.bf16.gmra.mxu0 %v4342
        %v4521 = vpop.f32.mrf.mxu0
        %v4522 = vadd.f32 0.0, %v4521
        %v4523 = vpop.f32.mrf.mxu0
        %v4524 = vadd.f32 0.0, %v4523
        %v4525 = vpop.f32.mrf.mxu0
        %v4526 = vadd.f32 0.0, %v4525
        %v4527 = vpop.f32.mrf.mxu0
        %v4528 = vadd.f32 0.0, %v4527
        %4529 = vmatprep.mubr.bf16.mxu0 0
        %4530 = vmatmul.mubr.bf16.gmra.mxu0 %v4343
        %v4531 = vpop.f32.mrf.mxu0
        %v4532 = vadd.f32 0.0, %v4531
        %v4533 = vpop.f32.mrf.mxu0
        %v4534 = vadd.f32 0.0, %v4533
        %v4535 = vpop.f32.mrf.mxu0
        %v4536 = vadd.f32 0.0, %v4535
        %v4537 = vpop.f32.mrf.mxu0
        %v4538 = vadd.f32 0.0, %v4537
        %4539 = vmatprep.mubr.bf16.mxu0 0
        %4540 = vmatmul.mubr.bf16.gmra.mxu0 %v4344
        %v4541 = vpop.f32.mrf.mxu0
        %v4542 = vadd.f32 0.0, %v4541
        %v4543 = vpop.f32.mrf.mxu0
        %v4544 = vadd.f32 0.0, %v4543
        %v4545 = vpop.f32.mrf.mxu0
        %v4546 = vadd.f32 0.0, %v4545
        %v4547 = vpop.f32.mrf.mxu0
        %v4548 = vadd.f32 0.0, %v4547
        %4549 = vmatprep.mubr.bf16.mxu0 0
        %4550 = vmatmul.mubr.bf16.gmra.mxu0 %v4345
        %v4551 = vpop.f32.mrf.mxu0
        %v4552 = vadd.f32 0.0, %v4551
        %v4553 = vpop.f32.mrf.mxu0
        %v4554 = vadd.f32 0.0, %v4553
        %v4555 = vpop.f32.mrf.mxu0
        %v4556 = vadd.f32 0.0, %v4555
        %v4557 = vpop.f32.mrf.mxu0
        %v4558 = vadd.f32 0.0, %v4557
        %4559 = vmatprep.mubr.bf16.mxu0 0
        %4560 = vmatmul.mubr.bf16.gmra.mxu0 %v4346
        %v4561 = vpop.f32.mrf.mxu0
        %v4562 = vadd.f32 0.0, %v4561
        %v4563 = vpop.f32.mrf.mxu0
        %v4564 = vadd.f32 0.0, %v4563
        %v4565 = vpop.f32.mrf.mxu0
        %v4566 = vadd.f32 0.0, %v4565
        %v4567 = vpop.f32.mrf.mxu0
        %v4568 = vadd.f32 0.0, %v4567
        %4569 = vmatprep.mubr.bf16.mxu0 0
        %4570 = vmatmul.mubr.bf16.gmra.mxu0 %v4347
        %v4571 = vpop.f32.mrf.mxu0
        %v4572 = vadd.f32 0.0, %v4571
        %v4573 = vpop.f32.mrf.mxu0
        %v4574 = vadd.f32 0.0, %v4573
        %v4575 = vpop.f32.mrf.mxu0
        %v4576 = vadd.f32 0.0, %v4575
        %v4577 = vpop.f32.mrf.mxu0
        %v4578 = vadd.f32 0.0, %v4577
        %4579 = vmatprep.mubr.bf16.mxu0 0
        %4580 = vmatmul.mubr.bf16.gmra.mxu0 %v4348
        %v4581 = vpop.f32.mrf.mxu0
        %v4582 = vadd.f32 0.0, %v4581
        %v4583 = vpop.f32.mrf.mxu0
        %v4584 = vadd.f32 0.0, %v4583
        %v4585 = vpop.f32.mrf.mxu0
        %v4586 = vadd.f32 0.0, %v4585
        %v4587 = vpop.f32.mrf.mxu0
        %v4588 = vadd.f32 0.0, %v4587
        %4589 = vmatprep.mubr.bf16.mxu0 0
        %4590 = vmatmul.mubr.bf16.gmra.mxu0 %v4349
        %v4591 = vpop.f32.mrf.mxu0
        %v4592 = vadd.f32 0.0, %v4591
        %v4593 = vpop.f32.mrf.mxu0
        %v4594 = vadd.f32 0.0, %v4593
        %v4595 = vpop.f32.mrf.mxu0
        %v4596 = vadd.f32 0.0, %v4595
        %v4597 = vpop.f32.mrf.mxu0
        %v4598 = vadd.f32 0.0, %v4597
        %4599 = vdwg.mxu0
        %v4600 = vadd.f32 %v4209, %v4482
        %v4601 = vadd.f32 %v4210, %v4484
        %v4602 = vadd.f32 %v4211, %v4486
        %v4603 = vadd.f32 %v4212, %v4488
        %v4604 = vadd.f32 %v4213, %v4492
        %v4605 = vadd.f32 %v4214, %v4494
        %v4606 = vadd.f32 %v4215, %v4496
        %v4607 = vadd.f32 %v4216, %v4498
        %v4608 = vadd.f32 %v4217, %v4502
        %v4609 = vadd.f32 %v4218, %v4504
        %v4610 = vadd.f32 %v4219, %v4506
        %v4611 = vadd.f32 %v4220, %v4508
        %v4612 = vadd.f32 %v4221, %v4512
        %v4613 = vadd.f32 %v4222, %v4514
        %v4614 = vadd.f32 %v4223, %v4516
        %v4615 = vadd.f32 %v4224, %v4518
        %v4616 = vadd.f32 %v4225, %v4522
        %v4617 = vadd.f32 %v4226, %v4524
        %v4618 = vadd.f32 %v4227, %v4526
        %v4619 = vadd.f32 %v4228, %v4528
        %v4620 = vadd.f32 %v4229, %v4532
        %v4621 = vadd.f32 %v4230, %v4534
        %v4622 = vadd.f32 %v4231, %v4536
        %v4623 = vadd.f32 %v4232, %v4538
        %v4624 = vadd.f32 %v4233, %v4542
        %v4625 = vadd.f32 %v4234, %v4544
        %v4626 = vadd.f32 %v4235, %v4546
        %v4627 = vadd.f32 %v4236, %v4548
        %v4628 = vadd.f32 %v4237, %v4552
        %v4629 = vadd.f32 %v4238, %v4554
        %v4630 = vadd.f32 %v4239, %v4556
        %v4631 = vadd.f32 %v4240, %v4558
        %v4632 = vadd.f32 %v4241, %v4562
        %v4633 = vadd.f32 %v4242, %v4564
        %v4634 = vadd.f32 %v4243, %v4566
        %v4635 = vadd.f32 %v4244, %v4568
        %v4636 = vadd.f32 %v4245, %v4572
        %v4637 = vadd.f32 %v4246, %v4574
        %v4638 = vadd.f32 %v4247, %v4576
        %v4639 = vadd.f32 %v4248, %v4578
        %v4640 = vadd.f32 %v4249, %v4582
        %v4641 = vadd.f32 %v4250, %v4584
        %v4642 = vadd.f32 %v4251, %v4586
        %v4643 = vadd.f32 %v4252, %v4588
        %v4644 = vadd.f32 %v4253, %v4592
        %v4645 = vadd.f32 %v4254, %v4594
        %v4646 = vadd.f32 %v4255, %v4596
        %v4647 = vadd.f32 %v4256, %v4598
        %v4648 = vpack.c.bf16 %v3201, %v3200
        %v4649 = vpack.c.bf16 %v3204, %v3202
        %v4650 = vpack.c.bf16 %v3206, %v3205
        %v4651 = vpack.c.bf16 %v3209, %v3208
        %v4652 = vpack.c.bf16 %v3212, %v3210
        %v4653 = vpack.c.bf16 %v3214, %v3213
        %v4654 = vpack.c.bf16 %v3217, %v3216
        %v4655 = vpack.c.bf16 %v3220, %v3218
        %v4656 = vpack.c.bf16 %v3222, %v3221
        %v4657 = vpack.c.bf16 %v3225, %v3224
        %v4658 = vpack.c.bf16 %v3228, %v3226
        %v4659 = vpack.c.bf16 %v3230, %v3229
        %s4660 = scalar_lea.vmem %s3, 512
        %v4661 = vld [vmem:[%s4660] sm:$0xff]
        %v4662 = vld [vmem:[%s4660 + $0x8] sm:$0xff]
        %v4663 = vld [vmem:[%s4660 + $0x10] sm:$0xff]
        %v4664 = vld [vmem:[%s4660 + $0x18] sm:$0xff]
        %v4665 = vld [vmem:[%s4660 + $0x20] sm:$0xff]
        %v4666 = vld [vmem:[%s4660 + $0x28] sm:$0xff]
        %v4667 = vld [vmem:[%s4660 + $0x30] sm:$0xff]
        %v4668 = vld [vmem:[%s4660 + $0x38] sm:$0xff]
        %v4669 = vld [vmem:[%s4660 + $0x40] sm:$0xff]
        %v4670 = vld [vmem:[%s4660 + $0x48] sm:$0xff]
        %v4671 = vld [vmem:[%s4660 + $0x50] sm:$0xff]
        %v4672 = vld [vmem:[%s4660 + $0x58] sm:$0xff]
        %v4673 = vld [vmem:[%s4660 + $0x60] sm:$0xff]
        %v4674 = vld [vmem:[%s4660 + $0x68] sm:$0xff]
        %v4675 = vld [vmem:[%s4660 + $0x70] sm:$0xff]
        %v4676 = vld [vmem:[%s4660 + $0x78] sm:$0xff]
        %v4693 = vunpack.c.l.b16 %v4661
        %v4694 = vunpack.c.h.b16 %v4661
        %v4695 = vunpack.c.l.b16 %v4662
        %v4696 = vunpack.c.h.b16 %v4662
        %v4697 = vunpack.c.l.b16 %v4663
        %v4698 = vunpack.c.h.b16 %v4663
        %v4699 = vunpack.c.l.b16 %v4664
        %v4700 = vunpack.c.h.b16 %v4664
        %v4701 = vunpack.c.l.b16 %v4665
        %v4702 = vunpack.c.h.b16 %v4665
        %v4703 = vunpack.c.l.b16 %v4666
        %v4704 = vunpack.c.h.b16 %v4666
        %v4705 = vunpack.c.l.b16 %v4667
        %v4706 = vunpack.c.h.b16 %v4667
        %v4707 = vunpack.c.l.b16 %v4668
        %v4708 = vunpack.c.h.b16 %v4668
        %v4709 = vunpack.c.l.b16 %v4669
        %v4710 = vunpack.c.h.b16 %v4669
        %v4711 = vunpack.c.l.b16 %v4670
        %v4712 = vunpack.c.h.b16 %v4670
        %v4713 = vunpack.c.l.b16 %v4671
        %v4714 = vunpack.c.h.b16 %v4671
        %v4715 = vunpack.c.l.b16 %v4672
        %v4716 = vunpack.c.h.b16 %v4672
        %v4717 = vunpack.c.l.b16 %v4673
        %v4718 = vunpack.c.h.b16 %v4673
        %v4719 = vunpack.c.l.b16 %v4674
        %v4720 = vunpack.c.h.b16 %v4674
        %v4721 = vunpack.c.l.b16 %v4675
        %v4722 = vunpack.c.h.b16 %v4675
        %v4723 = vunpack.c.l.b16 %v4676
        %v4724 = vunpack.c.h.b16 %v4676
        %v4725 = vpack.c.b16 %v4695, %v4693
        %v4726 = vpack.c.b16 %v4696, %v4694
        %v4727 = vpack.c.b16 %v4699, %v4697
        %v4728 = vpack.c.b16 %v4700, %v4698
        %v4729 = vpack.c.b16 %v4703, %v4701
        %v4730 = vpack.c.b16 %v4704, %v4702
        %v4731 = vpack.c.b16 %v4707, %v4705
        %v4732 = vpack.c.b16 %v4708, %v4706
        %v4733 = vpack.c.b16 %v4711, %v4709
        %v4734 = vpack.c.b16 %v4712, %v4710
        %v4735 = vpack.c.b16 %v4715, %v4713
        %v4736 = vpack.c.b16 %v4716, %v4714
        %v4737 = vpack.c.b16 %v4719, %v4717
        %v4738 = vpack.c.b16 %v4720, %v4718
        %v4739 = vpack.c.b16 %v4723, %v4721
        %v4740 = vpack.c.b16 %v4724, %v4722
        %4757 = vmatprep.subr.bf16.mxu0 %v4740
        %4758 = vmatpush1.bf16.msra.mxu0 %v4739
        %4759 = vmatprep.subr.bf16.mxu0 %v4738
        %4760 = vmatpush1.bf16.msra.mxu0 %v4737
        %4761 = vmatprep.subr.bf16.mxu0 %v4736
        %4762 = vmatpush1.bf16.msra.mxu0 %v4735
        %4763 = vmatprep.subr.bf16.mxu0 %v4734
        %4764 = vmatpush1.bf16.msra.mxu0 %v4733
        %4765 = vmatprep.subr.bf16.mxu0 %v4732
        %4766 = vmatpush1.bf16.msra.mxu0 %v4731
        %4767 = vmatprep.subr.bf16.mxu0 %v4730
        %4768 = vmatpush1.bf16.msra.mxu0 %v4729
        %4769 = vmatprep.subr.bf16.mxu0 %v4728
        %4770 = vmatpush1.bf16.msra.mxu0 %v4727
        %4771 = vmatprep.subr.bf16.mxu0 %v4726
        %4772 = vmatpush1.bf16.msra.mxu0 %v4725
        %4773 = vmatprep.subr.bf16.mxu0 0
        %4774 = vmatpush2.bf16.msra.mxu0 0
        %4775 = vmatprep.subr.bf16.mxu0 0
        %4776 = vmatpush2.bf16.msra.mxu0 0
        %4777 = vmatprep.subr.bf16.mxu0 0
        %4778 = vmatpush2.bf16.msra.mxu0 0
        %4779 = vmatprep.subr.bf16.mxu0 0
        %4780 = vmatpush2.bf16.msra.mxu0 0
        %4781 = vmatprep.subr.bf16.mxu0 0
        %4782 = vmatpush2.bf16.msra.mxu0 0
        %4783 = vmatprep.subr.bf16.mxu0 0
        %4784 = vmatpush2.bf16.msra.mxu0 0
        %4785 = vmatprep.subr.bf16.mxu0 0
        %4786 = vmatpush2.bf16.msra.mxu0 0
        %4787 = vmatprep.subr.bf16.mxu0 0
        %4788 = vmatpush2.bf16.msra.mxu0 0
        %4789 = vmatprep.mubr.bf16.mxu0 0
        %4790 = vmatmul.mubr.bf16.gmra.mxu0 %v4648
        %v4791 = vpop.f32.mrf.mxu0
        %v4792 = vadd.f32 0.0, %v4791
        %v4793 = vpop.f32.mrf.mxu0
        %v4794 = vadd.f32 0.0, %v4793
        %v4795 = vpop.f32.mrf.mxu0
        %v4796 = vadd.f32 0.0, %v4795
        %v4797 = vpop.f32.mrf.mxu0
        %v4798 = vadd.f32 0.0, %v4797
        %4799 = vmatprep.mubr.bf16.mxu0 0
        %4800 = vmatmul.mubr.bf16.gmra.mxu0 %v4649
        %v4801 = vpop.f32.mrf.mxu0
        %v4802 = vadd.f32 0.0, %v4801
        %v4803 = vpop.f32.mrf.mxu0
        %v4804 = vadd.f32 0.0, %v4803
        %v4805 = vpop.f32.mrf.mxu0
        %v4806 = vadd.f32 0.0, %v4805
        %v4807 = vpop.f32.mrf.mxu0
        %v4808 = vadd.f32 0.0, %v4807
        %4809 = vmatprep.mubr.bf16.mxu0 0
        %4810 = vmatmul.mubr.bf16.gmra.mxu0 %v4650
        %v4811 = vpop.f32.mrf.mxu0
        %v4812 = vadd.f32 0.0, %v4811
        %v4813 = vpop.f32.mrf.mxu0
        %v4814 = vadd.f32 0.0, %v4813
        %v4815 = vpop.f32.mrf.mxu0
        %v4816 = vadd.f32 0.0, %v4815
        %v4817 = vpop.f32.mrf.mxu0
        %v4818 = vadd.f32 0.0, %v4817
        %4819 = vmatprep.mubr.bf16.mxu0 0
        %4820 = vmatmul.mubr.bf16.gmra.mxu0 %v4651
        %v4821 = vpop.f32.mrf.mxu0
        %v4822 = vadd.f32 0.0, %v4821
        %v4823 = vpop.f32.mrf.mxu0
        %v4824 = vadd.f32 0.0, %v4823
        %v4825 = vpop.f32.mrf.mxu0
        %v4826 = vadd.f32 0.0, %v4825
        %v4827 = vpop.f32.mrf.mxu0
        %v4828 = vadd.f32 0.0, %v4827
        %4829 = vmatprep.mubr.bf16.mxu0 0
        %4830 = vmatmul.mubr.bf16.gmra.mxu0 %v4652
        %v4831 = vpop.f32.mrf.mxu0
        %v4832 = vadd.f32 0.0, %v4831
        %v4833 = vpop.f32.mrf.mxu0
        %v4834 = vadd.f32 0.0, %v4833
        %v4835 = vpop.f32.mrf.mxu0
        %v4836 = vadd.f32 0.0, %v4835
        %v4837 = vpop.f32.mrf.mxu0
        %v4838 = vadd.f32 0.0, %v4837
        %4839 = vmatprep.mubr.bf16.mxu0 0
        %4840 = vmatmul.mubr.bf16.gmra.mxu0 %v4653
        %v4841 = vpop.f32.mrf.mxu0
        %v4842 = vadd.f32 0.0, %v4841
        %v4843 = vpop.f32.mrf.mxu0
        %v4844 = vadd.f32 0.0, %v4843
        %v4845 = vpop.f32.mrf.mxu0
        %v4846 = vadd.f32 0.0, %v4845
        %v4847 = vpop.f32.mrf.mxu0
        %v4848 = vadd.f32 0.0, %v4847
        %4849 = vmatprep.mubr.bf16.mxu0 0
        %4850 = vmatmul.mubr.bf16.gmra.mxu0 %v4654
        %v4851 = vpop.f32.mrf.mxu0
        %v4852 = vadd.f32 0.0, %v4851
        %v4853 = vpop.f32.mrf.mxu0
        %v4854 = vadd.f32 0.0, %v4853
        %v4855 = vpop.f32.mrf.mxu0
        %v4856 = vadd.f32 0.0, %v4855
        %v4857 = vpop.f32.mrf.mxu0
        %v4858 = vadd.f32 0.0, %v4857
        %4859 = vmatprep.mubr.bf16.mxu0 0
        %4860 = vmatmul.mubr.bf16.gmra.mxu0 %v4655
        %v4861 = vpop.f32.mrf.mxu0
        %v4862 = vadd.f32 0.0, %v4861
        %v4863 = vpop.f32.mrf.mxu0
        %v4864 = vadd.f32 0.0, %v4863
        %v4865 = vpop.f32.mrf.mxu0
        %v4866 = vadd.f32 0.0, %v4865
        %v4867 = vpop.f32.mrf.mxu0
        %v4868 = vadd.f32 0.0, %v4867
        %4869 = vmatprep.mubr.bf16.mxu0 0
        %4870 = vmatmul.mubr.bf16.gmra.mxu0 %v4656
        %v4871 = vpop.f32.mrf.mxu0
        %v4872 = vadd.f32 0.0, %v4871
        %v4873 = vpop.f32.mrf.mxu0
        %v4874 = vadd.f32 0.0, %v4873
        %v4875 = vpop.f32.mrf.mxu0
        %v4876 = vadd.f32 0.0, %v4875
        %v4877 = vpop.f32.mrf.mxu0
        %v4878 = vadd.f32 0.0, %v4877
        %4879 = vmatprep.mubr.bf16.mxu0 0
        %4880 = vmatmul.mubr.bf16.gmra.mxu0 %v4657
        %v4881 = vpop.f32.mrf.mxu0
        %v4882 = vadd.f32 0.0, %v4881
        %v4883 = vpop.f32.mrf.mxu0
        %v4884 = vadd.f32 0.0, %v4883
        %v4885 = vpop.f32.mrf.mxu0
        %v4886 = vadd.f32 0.0, %v4885
        %v4887 = vpop.f32.mrf.mxu0
        %v4888 = vadd.f32 0.0, %v4887
        %4889 = vmatprep.mubr.bf16.mxu0 0
        %4890 = vmatmul.mubr.bf16.gmra.mxu0 %v4658
        %v4891 = vpop.f32.mrf.mxu0
        %v4892 = vadd.f32 0.0, %v4891
        %v4893 = vpop.f32.mrf.mxu0
        %v4894 = vadd.f32 0.0, %v4893
        %v4895 = vpop.f32.mrf.mxu0
        %v4896 = vadd.f32 0.0, %v4895
        %v4897 = vpop.f32.mrf.mxu0
        %v4898 = vadd.f32 0.0, %v4897
        %4899 = vmatprep.mubr.bf16.mxu0 0
        %4900 = vmatmul.mubr.bf16.gmra.mxu0 %v4659
        %v4901 = vpop.f32.mrf.mxu0
        %v4902 = vadd.f32 0.0, %v4901
        %v4903 = vpop.f32.mrf.mxu0
        %v4904 = vadd.f32 0.0, %v4903
        %v4905 = vpop.f32.mrf.mxu0
        %v4906 = vadd.f32 0.0, %v4905
        %v4907 = vpop.f32.mrf.mxu0
        %v4908 = vadd.f32 0.0, %v4907
        %4909 = vdwg.mxu0
        %v4910 = vadd.f32 %v4600, %v4792
        %v4911 = vadd.f32 %v4601, %v4794
        %v4912 = vadd.f32 %v4602, %v4796
        %v4913 = vadd.f32 %v4603, %v4798
        %v4914 = vadd.f32 %v4604, %v4802
        %v4915 = vadd.f32 %v4605, %v4804
        %v4916 = vadd.f32 %v4606, %v4806
        %v4917 = vadd.f32 %v4607, %v4808
        %v4918 = vadd.f32 %v4608, %v4812
        %v4919 = vadd.f32 %v4609, %v4814
        %v4920 = vadd.f32 %v4610, %v4816
        %v4921 = vadd.f32 %v4611, %v4818
        %v4922 = vadd.f32 %v4612, %v4822
        %v4923 = vadd.f32 %v4613, %v4824
        %v4924 = vadd.f32 %v4614, %v4826
        %v4925 = vadd.f32 %v4615, %v4828
        %v4926 = vadd.f32 %v4616, %v4832
        %v4927 = vadd.f32 %v4617, %v4834
        %v4928 = vadd.f32 %v4618, %v4836
        %v4929 = vadd.f32 %v4619, %v4838
        %v4930 = vadd.f32 %v4620, %v4842
        %v4931 = vadd.f32 %v4621, %v4844
        %v4932 = vadd.f32 %v4622, %v4846
        %v4933 = vadd.f32 %v4623, %v4848
        %v4934 = vadd.f32 %v4624, %v4852
        %v4935 = vadd.f32 %v4625, %v4854
        %v4936 = vadd.f32 %v4626, %v4856
        %v4937 = vadd.f32 %v4627, %v4858
        %v4938 = vadd.f32 %v4628, %v4862
        %v4939 = vadd.f32 %v4629, %v4864
        %v4940 = vadd.f32 %v4630, %v4866
        %v4941 = vadd.f32 %v4631, %v4868
        %v4942 = vadd.f32 %v4632, %v4872
        %v4943 = vadd.f32 %v4633, %v4874
        %v4944 = vadd.f32 %v4634, %v4876
        %v4945 = vadd.f32 %v4635, %v4878
        %v4946 = vadd.f32 %v4636, %v4882
        %v4947 = vadd.f32 %v4637, %v4884
        %v4948 = vadd.f32 %v4638, %v4886
        %v4949 = vadd.f32 %v4639, %v4888
        %v4950 = vadd.f32 %v4640, %v4892
        %v4951 = vadd.f32 %v4641, %v4894
        %v4952 = vadd.f32 %v4642, %v4896
        %v4953 = vadd.f32 %v4643, %v4898
        %v4954 = vadd.f32 %v4644, %v4902
        %v4955 = vadd.f32 %v4645, %v4904
        %v4956 = vadd.f32 %v4646, %v4906
        %v4957 = vadd.f32 %v4647, %v4908
        %v4958 = vld [vmem:[%s4] sm:$0x3]
        %v4960 = vlaneseq
        %v4961 = vshrl.u32 %v4960, 7
        %v4962 = vsub.s32 0, %v4961
        %v4963 = vrot.slane %v4958, %v4962
        %v4964 = vlaneseq
        %v4965 = vshrl.u32 %v4964, 7
        %v4966 = vsub.s32 1, %v4965
        %v4967 = vrot.slane %v4958, %v4966
        %v4970 = vadd.f32 %v4910, %v4963
        %v4971 = vadd.f32 %v4911, %v4967
        %v4972 = vadd.f32 %v4912, %v4963
        %v4973 = vadd.f32 %v4913, %v4967
        %v4974 = vadd.f32 %v4914, %v4963
        %v4975 = vadd.f32 %v4915, %v4967
        %v4976 = vadd.f32 %v4916, %v4963
        %v4977 = vadd.f32 %v4917, %v4967
        %v4978 = vadd.f32 %v4918, %v4963
        %v4979 = vadd.f32 %v4919, %v4967
        %v4980 = vadd.f32 %v4920, %v4963
        %v4981 = vadd.f32 %v4921, %v4967
        %v4982 = vadd.f32 %v4922, %v4963
        %v4983 = vadd.f32 %v4923, %v4967
        %v4984 = vadd.f32 %v4924, %v4963
        %v4985 = vadd.f32 %v4925, %v4967
        %v4986 = vadd.f32 %v4926, %v4963
        %v4987 = vadd.f32 %v4927, %v4967
        %v4988 = vadd.f32 %v4928, %v4963
        %v4989 = vadd.f32 %v4929, %v4967
        %v4990 = vadd.f32 %v4930, %v4963
        %v4991 = vadd.f32 %v4931, %v4967
        %v4992 = vadd.f32 %v4932, %v4963
        %v4993 = vadd.f32 %v4933, %v4967
        %v4994 = vadd.f32 %v4934, %v4963
        %v4995 = vadd.f32 %v4935, %v4967
        %v4996 = vadd.f32 %v4936, %v4963
        %v4997 = vadd.f32 %v4937, %v4967
        %v4998 = vadd.f32 %v4938, %v4963
        %v4999 = vadd.f32 %v4939, %v4967
        %v5000 = vadd.f32 %v4940, %v4963
        %v5001 = vadd.f32 %v4941, %v4967
        %v5002 = vadd.f32 %v4942, %v4963
        %v5003 = vadd.f32 %v4943, %v4967
        %v5004 = vadd.f32 %v4944, %v4963
        %v5005 = vadd.f32 %v4945, %v4967
        %v5006 = vadd.f32 %v4946, %v4963
        %v5007 = vadd.f32 %v4947, %v4967
        %v5008 = vadd.f32 %v4948, %v4963
        %v5009 = vadd.f32 %v4949, %v4967
        %v5010 = vadd.f32 %v4950, %v4963
        %v5011 = vadd.f32 %v4951, %v4967
        %v5012 = vadd.f32 %v4952, %v4963
        %v5013 = vadd.f32 %v4953, %v4967
        %v5014 = vadd.f32 %v4954, %v4963
        %v5015 = vadd.f32 %v4955, %v4967
        %v5016 = vadd.f32 %v4956, %v4963
        %v5017 = vadd.f32 %v4957, %v4967
        %v5018 = vmax.f32 %v4970, 0.0
        %v5019 = vmax.f32 %v4971, 0.0
        %v5020 = vmax.f32 %v4972, 0.0
        %v5021 = vmax.f32 %v4973, 0.0
        %v5022 = vmax.f32 %v4974, 0.0
        %v5023 = vmax.f32 %v4975, 0.0
        %v5024 = vmax.f32 %v4976, 0.0
        %v5025 = vmax.f32 %v4977, 0.0
        %v5026 = vmax.f32 %v4978, 0.0
        %v5027 = vmax.f32 %v4979, 0.0
        %v5028 = vmax.f32 %v4980, 0.0
        %v5029 = vmax.f32 %v4981, 0.0
        %v5030 = vmax.f32 %v4982, 0.0
        %v5031 = vmax.f32 %v4983, 0.0
        %v5032 = vmax.f32 %v4984, 0.0
        %v5033 = vmax.f32 %v4985, 0.0
        %v5034 = vmax.f32 %v4986, 0.0
        %v5035 = vmax.f32 %v4987, 0.0
        %v5036 = vmax.f32 %v4988, 0.0
        %v5037 = vmax.f32 %v4989, 0.0
        %v5038 = vmax.f32 %v4990, 0.0
        %v5039 = vmax.f32 %v4991, 0.0
        %v5040 = vmax.f32 %v4992, 0.0
        %v5041 = vmax.f32 %v4993, 0.0
        %v5042 = vmax.f32 %v4994, 0.0
        %v5043 = vmax.f32 %v4995, 0.0
        %v5044 = vmax.f32 %v4996, 0.0
        %v5045 = vmax.f32 %v4997, 0.0
        %v5046 = vmax.f32 %v4998, 0.0
        %v5047 = vmax.f32 %v4999, 0.0
        %v5048 = vmax.f32 %v5000, 0.0
        %v5049 = vmax.f32 %v5001, 0.0
        %v5050 = vmax.f32 %v5002, 0.0
        %v5051 = vmax.f32 %v5003, 0.0
        %v5052 = vmax.f32 %v5004, 0.0
        %v5053 = vmax.f32 %v5005, 0.0
        %v5054 = vmax.f32 %v5006, 0.0
        %v5055 = vmax.f32 %v5007, 0.0
        %v5056 = vmax.f32 %v5008, 0.0
        %v5057 = vmax.f32 %v5009, 0.0
        %v5058 = vmax.f32 %v5010, 0.0
        %v5059 = vmax.f32 %v5011, 0.0
        %v5060 = vmax.f32 %v5012, 0.0
        %v5061 = vmax.f32 %v5013, 0.0
        %v5062 = vmax.f32 %v5014, 0.0
        %v5063 = vmax.f32 %v5015, 0.0
        %v5064 = vmax.f32 %v5016, 0.0
        %v5065 = vmax.f32 %v5017, 0.0
        %v5066 = vmax.f32 %v5018, %v5019
        %v5067 = vmax.f32 %v5020, %v5021
        %v5068 = vmax.f32 %v5022, %v5023
        %v5069 = vmax.f32 %v5024, %v5025
        %v5070 = vmax.f32 %v5026, %v5027
        %v5071 = vmax.f32 %v5028, %v5029
        %v5072 = vmax.f32 %v5030, %v5031
        %v5073 = vmax.f32 %v5032, %v5033
        %v5074 = vmax.f32 %v5034, %v5035
        %v5075 = vmax.f32 %v5036, %v5037
        %v5076 = vmax.f32 %v5038, %v5039
        %v5077 = vmax.f32 %v5040, %v5041
        %v5078 = vmax.f32 %v5042, %v5043
        %v5079 = vmax.f32 %v5044, %v5045
        %v5080 = vmax.f32 %v5046, %v5047
        %v5081 = vmax.f32 %v5048, %v5049
        %v5082 = vmax.f32 %v5050, %v5051
        %v5083 = vmax.f32 %v5052, %v5053
        %v5084 = vmax.f32 %v5054, %v5055
        %v5085 = vmax.f32 %v5056, %v5057
        %v5086 = vmax.f32 %v5058, %v5059
        %v5087 = vmax.f32 %v5060, %v5061
        %v5088 = vmax.f32 %v5062, %v5063
        %v5089 = vmax.f32 %v5064, %v5065
        %v5098 = vrot.slane %v5066, 2
        %v5099 = vrot.slane %v5069, 2
        %v5100 = vrot.slane %v5072, 2
        %v5101 = vrot.slane %v5075, 2
        %v5102 = vrot.slane %v5078, 2
        %v5103 = vrot.slane %v5081, 2
        %v5104 = vrot.slane %v5084, 2
        %v5105 = vrot.slane %v5087, 2
        %v5114 = vmax.f32 %v5066, %v5098
        %v5115 = vmax.f32 %v5069, %v5099
        %v5116 = vmax.f32 %v5072, %v5100
        %v5117 = vmax.f32 %v5075, %v5101
        %v5118 = vmax.f32 %v5078, %v5102
        %v5119 = vmax.f32 %v5081, %v5103
        %v5120 = vmax.f32 %v5084, %v5104
        %v5121 = vmax.f32 %v5087, %v5105
        %v5130 = vrot.slane %v5115, 7
        %vm5131 = vcmask 1041409
        %v5132 = vsel %vm5131, %v5130, %v5114
        %v5133 = vrot.slane %v5116, 6
        %vm5134 = vcmask 1042434
        %v5135 = vsel %vm5134, %v5133, %v5132
        %v5136 = vrot.slane %v5117, 5
        %vm5137 = vcmask 1043459
        %v5138 = vsel %vm5137, %v5136, %v5135
        %v5139 = vrot.slane %v5118, 4
        %vm5140 = vcmask 1044484
        %v5141 = vsel %vm5140, %v5139, %v5138
        %v5142 = vrot.slane %v5119, 3
        %vm5143 = vcmask 1045509
        %v5144 = vsel %vm5143, %v5142, %v5141
        %v5145 = vrot.slane %v5120, 2
        %vm5146 = vcmask 1046534
        %v5147 = vsel %vm5146, %v5145, %v5144
        %v5148 = vrot.slane %v5121, 1
        %vm5149 = vcmask 1047559
        %v5150 = vsel %vm5149, %v5148, %v5147
        %5152 = vst [vmem:[#allocation2] sm:$0xff] %v5150
        %v5153 = vrot.slane %v5114, 4
        %v5154 = vrot.slane %v5115, 3
        %v5155 = vsel %vm5131, %v5154, %v5153
        %v5156 = vrot.slane %v5116, 2
        %v5157 = vsel %vm5134, %v5156, %v5155
        %v5158 = vrot.slane %v5117, 1
        %v5159 = vsel %vm5137, %v5158, %v5157
        %v5160 = vsel %vm5140, %v5118, %v5159
        %v5161 = vrot.slane %v5119, 7
        %v5162 = vsel %vm5143, %v5161, %v5160
        %v5163 = vrot.slane %v5120, 6
        %v5164 = vsel %vm5146, %v5163, %v5162
        %v5165 = vrot.slane %v5121, 5
        %v5166 = vsel %vm5149, %v5165, %v5164
        %5168 = vst [vmem:[#allocation2 + $0x8] sm:$0xff] %v5166
        %v5177 = vrot.slane %v5067, 2
        %v5178 = vrot.slane %v5070, 2
        %v5179 = vrot.slane %v5073, 2
        %v5180 = vrot.slane %v5076, 2
        %v5181 = vrot.slane %v5079, 2
        %v5182 = vrot.slane %v5082, 2
        %v5183 = vrot.slane %v5085, 2
        %v5184 = vrot.slane %v5088, 2
        %v5193 = vmax.f32 %v5067, %v5177
        %v5194 = vmax.f32 %v5070, %v5178
        %v5195 = vmax.f32 %v5073, %v5179
        %v5196 = vmax.f32 %v5076, %v5180
        %v5197 = vmax.f32 %v5079, %v5181
        %v5198 = vmax.f32 %v5082, %v5182
        %v5199 = vmax.f32 %v5085, %v5183
        %v5200 = vmax.f32 %v5088, %v5184
        %v5209 = vrot.slane %v5194, 7
        %v5210 = vsel %vm5131, %v5209, %v5193
        %v5211 = vrot.slane %v5195, 6
        %v5212 = vsel %vm5134, %v5211, %v5210
        %v5213 = vrot.slane %v5196, 5
        %v5214 = vsel %vm5137, %v5213, %v5212
        %v5215 = vrot.slane %v5197, 4
        %v5216 = vsel %vm5140, %v5215, %v5214
        %v5217 = vrot.slane %v5198, 3
        %v5218 = vsel %vm5143, %v5217, %v5216
        %v5219 = vrot.slane %v5199, 2
        %v5220 = vsel %vm5146, %v5219, %v5218
        %v5221 = vrot.slane %v5200, 1
        %v5222 = vsel %vm5149, %v5221, %v5220
        %5224 = vst [vmem:[#allocation2 + $0x10] sm:$0xff] %v5222
        %v5225 = vrot.slane %v5193, 4
        %v5226 = vrot.slane %v5194, 3
        %v5227 = vsel %vm5131, %v5226, %v5225
        %v5228 = vrot.slane %v5195, 2
        %v5229 = vsel %vm5134, %v5228, %v5227
        %v5230 = vrot.slane %v5196, 1
        %v5231 = vsel %vm5137, %v5230, %v5229
        %v5232 = vsel %vm5140, %v5197, %v5231
        %v5233 = vrot.slane %v5198, 7
        %v5234 = vsel %vm5143, %v5233, %v5232
        %v5235 = vrot.slane %v5199, 6
        %v5236 = vsel %vm5146, %v5235, %v5234
        %v5237 = vrot.slane %v5200, 5
        %v5238 = vsel %vm5149, %v5237, %v5236
        %5240 = vst [vmem:[#allocation2 + $0x18] sm:$0xff] %v5238
        %v5249 = vrot.slane %v5068, 2
        %v5250 = vrot.slane %v5071, 2
        %v5251 = vrot.slane %v5074, 2
        %v5252 = vrot.slane %v5077, 2
        %v5253 = vrot.slane %v5080, 2
        %v5254 = vrot.slane %v5083, 2
        %v5255 = vrot.slane %v5086, 2
        %v5256 = vrot.slane %v5089, 2
        %v5265 = vmax.f32 %v5068, %v5249
        %v5266 = vmax.f32 %v5071, %v5250
        %v5267 = vmax.f32 %v5074, %v5251
        %v5268 = vmax.f32 %v5077, %v5252
        %v5269 = vmax.f32 %v5080, %v5253
        %v5270 = vmax.f32 %v5083, %v5254
        %v5271 = vmax.f32 %v5086, %v5255
        %v5272 = vmax.f32 %v5089, %v5256
        %v5281 = vrot.slane %v5266, 7
        %v5282 = vsel %vm5131, %v5281, %v5265
        %v5283 = vrot.slane %v5267, 6
        %v5284 = vsel %vm5134, %v5283, %v5282
        %v5285 = vrot.slane %v5268, 5
        %v5286 = vsel %vm5137, %v5285, %v5284
        %v5287 = vrot.slane %v5269, 4
        %v5288 = vsel %vm5140, %v5287, %v5286
        %v5289 = vrot.slane %v5270, 3
        %v5290 = vsel %vm5143, %v5289, %v5288
        %v5291 = vrot.slane %v5271, 2
        %v5292 = vsel %vm5146, %v5291, %v5290
        %v5293 = vrot.slane %v5272, 1
        %v5294 = vsel %vm5149, %v5293, %v5292
        %5296 = vst [vmem:[#allocation2 + $0x20] sm:$0xff] %v5294
        %v5297 = vld [vmem:[#allocation2] sm:$0xff]
        %v5298 = vld [vmem:[#allocation2 + $0x8] sm:$0xff]
        %v5299 = vld [vmem:[#allocation2 + $0x10] sm:$0xff]
        %v5300 = vld [vmem:[#allocation2 + $0x18] sm:$0xff]
        %v5301 = vld [vmem:[#allocation2 + $0x20] sm:$0xff]
        %v5302 = vpack.c.bf16 %v5297, %v5297
        %v5303 = vpack.c.bf16 %v5298, %v5298
        %v5304 = vpack.c.bf16 %v5299, %v5299
        %v5305 = vpack.c.bf16 %v5300, %v5300
        %v5306 = vpack.c.bf16 %v5301, %v5301
        %v5307 = vld [vmem:[%s5] sm:$0xf]
        %v5308 = vld [vmem:[%s5 + $0x4] sm:$0xf]
        %v5309 = vld [vmem:[%s5 + $0x8] sm:$0xf]
        %v5310 = vld [vmem:[%s5 + $0xc] sm:$0xf]
        %v5311 = vld [vmem:[%s5 + $0x10] sm:$0xf]
        %v5312 = vld [vmem:[%s5 + $0x14] sm:$0xf]
        %v5313 = vld [vmem:[%s5 + $0x18] sm:$0xf]
        %v5314 = vld [vmem:[%s5 + $0x1c] sm:$0xf]
        %v5315 = vld [vmem:[%s5 + $0x20] sm:$0xf]
        %v5316 = vld [vmem:[%s5 + $0x24] sm:$0xf]
        %v5317 = vld [vmem:[%s5 + $0x28] sm:$0xf]
        %v5318 = vld [vmem:[%s5 + $0x2c] sm:$0xf]
        %v5319 = vld [vmem:[%s5 + $0x30] sm:$0xf]
        %v5320 = vld [vmem:[%s5 + $0x34] sm:$0xf]
        %v5321 = vld [vmem:[%s5 + $0x38] sm:$0xf]
        %v5322 = vld [vmem:[%s5 + $0x3c] sm:$0xf]
        %v5323 = vld [vmem:[%s5 + $0x40] sm:$0xf]
        %v5324 = vld [vmem:[%s5 + $0x44] sm:$0xf]
        %v5325 = vld [vmem:[%s5 + $0x48] sm:$0xf]
        %v5326 = vld [vmem:[%s5 + $0x4c] sm:$0xf]
        %v5327 = vld [vmem:[%s5 + $0x50] sm:$0xf]
        %v5328 = vld [vmem:[%s5 + $0x54] sm:$0xf]
        %v5329 = vld [vmem:[%s5 + $0x58] sm:$0xf]
        %v5330 = vld [vmem:[%s5 + $0x5c] sm:$0xf]
        %v5331 = vld [vmem:[%s5 + $0x60] sm:$0xf]
        %v5332 = vld [vmem:[%s5 + $0x64] sm:$0xf]
        %v5333 = vld [vmem:[%s5 + $0x68] sm:$0xf]
        %v5334 = vld [vmem:[%s5 + $0x6c] sm:$0xf]
        %v5335 = vld [vmem:[%s5 + $0x70] sm:$0xf]
        %v5336 = vld [vmem:[%s5 + $0x74] sm:$0xf]
        %v5337 = vld [vmem:[%s5 + $0x78] sm:$0xf]
        %v5338 = vld [vmem:[%s5 + $0x7c] sm:$0xf]
        %v5339 = vld [vmem:[%s5 + $0x80] sm:$0xf]
        %v5340 = vld [vmem:[%s5 + $0x84] sm:$0xf]
        %v5341 = vld [vmem:[%s5 + $0x88] sm:$0xf]
        %v5342 = vld [vmem:[%s5 + $0x8c] sm:$0xf]
        %v5343 = vld [vmem:[%s5 + $0x90] sm:$0xf]
        %v5344 = vld [vmem:[%s5 + $0x94] sm:$0xf]
        %v5345 = vld [vmem:[%s5 + $0x98] sm:$0xf]
        %v5346 = vld [vmem:[%s5 + $0x9c] sm:$0xf]
        %v5347 = vld [vmem:[%s5 + $0xa0] sm:$0xf]
        %v5348 = vld [vmem:[%s5 + $0xa4] sm:$0xf]
        %v5349 = vld [vmem:[%s5 + $0xa8] sm:$0xf]
        %v5350 = vld [vmem:[%s5 + $0xac] sm:$0xf]
        %v5351 = vld [vmem:[%s5 + $0xb0] sm:$0xf]
        %v5352 = vld [vmem:[%s5 + $0xb4] sm:$0xf]
        %v5353 = vld [vmem:[%s5 + $0xb8] sm:$0xf]
        %v5354 = vld [vmem:[%s5 + $0xbc] sm:$0xf]
        %v5355 = vld [vmem:[%s5 + $0xc0] sm:$0xf]
        %v5356 = vld [vmem:[%s5 + $0xc4] sm:$0xf]
        %v5357 = vld [vmem:[%s5 + $0xc8] sm:$0xf]
        %v5358 = vld [vmem:[%s5 + $0xcc] sm:$0xf]
        %v5359 = vld [vmem:[%s5 + $0xd0] sm:$0xf]
        %v5360 = vld [vmem:[%s5 + $0xd4] sm:$0xf]
        %v5361 = vld [vmem:[%s5 + $0xd8] sm:$0xf]
        %v5362 = vld [vmem:[%s5 + $0xdc] sm:$0xf]
        %v5363 = vld [vmem:[%s5 + $0xe0] sm:$0xf]
        %v5364 = vld [vmem:[%s5 + $0xe4] sm:$0xf]
        %v5365 = vld [vmem:[%s5 + $0xe8] sm:$0xf]
        %v5366 = vld [vmem:[%s5 + $0xec] sm:$0xf]
        %v5367 = vld [vmem:[%s5 + $0xf0] sm:$0xf]
        %v5368 = vld [vmem:[%s5 + $0xf4] sm:$0xf]
        %v5369 = vld [vmem:[%s5 + $0xf8] sm:$0xf]
        %v5370 = vld [vmem:[%s5 + $0xfc] sm:$0xf]
        %v5371 = vld [vmem:[%s5 + $0x100] sm:$0xf]
        %v5372 = vld [vmem:[%s5 + $0x104] sm:$0xf]
        %v5373 = vld [vmem:[%s5 + $0x108] sm:$0xf]
        %v5374 = vld [vmem:[%s5 + $0x10c] sm:$0xf]
        %v5375 = vld [vmem:[%s5 + $0x110] sm:$0xf]
        %v5376 = vld [vmem:[%s5 + $0x114] sm:$0xf]
        %v5377 = vld [vmem:[%s5 + $0x118] sm:$0xf]
        %v5378 = vld [vmem:[%s5 + $0x11c] sm:$0xf]
        %v5379 = vld [vmem:[%s5 + $0x120] sm:$0xf]
        %v5380 = vld [vmem:[%s5 + $0x124] sm:$0xf]
        %v5381 = vld [vmem:[%s5 + $0x128] sm:$0xf]
        %v5382 = vld [vmem:[%s5 + $0x12c] sm:$0xf]
        %v5383 = vld [vmem:[%s5 + $0x130] sm:$0xf]
        %v5384 = vld [vmem:[%s5 + $0x134] sm:$0xf]
        %v5385 = vld [vmem:[%s5 + $0x138] sm:$0xf]
        %v5386 = vld [vmem:[%s5 + $0x13c] sm:$0xf]
        %v5387 = vld [vmem:[%s6] sm:$0x1]
        %v5389 = vlaneseq
        %v5390 = vshrl.u32 %v5389, 7
        %v5391 = vsub.s32 0, %v5390
        %v5392 = vrot.slane %v5387, %v5391
        %v5474 = vunpack.c.l.b16 %v5307
        %v5475 = vunpack.c.l.b16 %v5308
        %v5476 = vunpack.c.l.b16 %v5309
        %v5477 = vunpack.c.l.b16 %v5310
        %v5478 = vunpack.c.l.b16 %v5311
        %v5479 = vunpack.c.l.b16 %v5312
        %v5480 = vunpack.c.l.b16 %v5313
        %v5481 = vunpack.c.l.b16 %v5314
        %v5482 = vunpack.c.l.b16 %v5315
        %v5483 = vunpack.c.l.b16 %v5316
        %v5484 = vunpack.c.l.b16 %v5317
        %v5485 = vunpack.c.l.b16 %v5318
        %v5486 = vunpack.c.l.b16 %v5319
        %v5487 = vunpack.c.l.b16 %v5320
        %v5488 = vunpack.c.l.b16 %v5321
        %v5489 = vunpack.c.l.b16 %v5322
        %v5490 = vunpack.c.l.b16 %v5323
        %v5491 = vunpack.c.l.b16 %v5324
        %v5492 = vunpack.c.l.b16 %v5325
        %v5493 = vunpack.c.l.b16 %v5326
        %v5494 = vunpack.c.l.b16 %v5327
        %v5495 = vunpack.c.l.b16 %v5328
        %v5496 = vunpack.c.l.b16 %v5329
        %v5497 = vunpack.c.l.b16 %v5330
        %v5498 = vunpack.c.l.b16 %v5331
        %v5499 = vunpack.c.l.b16 %v5332
        %v5500 = vunpack.c.l.b16 %v5333
        %v5501 = vunpack.c.l.b16 %v5334
        %v5502 = vunpack.c.l.b16 %v5335
        %v5503 = vunpack.c.l.b16 %v5336
        %v5504 = vunpack.c.l.b16 %v5337
        %v5505 = vunpack.c.l.b16 %v5338
        %v5506 = vunpack.c.l.b16 %v5339
        %v5507 = vunpack.c.l.b16 %v5340
        %v5508 = vunpack.c.l.b16 %v5341
        %v5509 = vunpack.c.l.b16 %v5342
        %v5510 = vunpack.c.l.b16 %v5343
        %v5511 = vunpack.c.l.b16 %v5344
        %v5512 = vunpack.c.l.b16 %v5345
        %v5513 = vunpack.c.l.b16 %v5346
        %v5514 = vunpack.c.l.b16 %v5347
        %v5515 = vunpack.c.l.b16 %v5348
        %v5516 = vunpack.c.l.b16 %v5349
        %v5517 = vunpack.c.l.b16 %v5350
        %v5518 = vunpack.c.l.b16 %v5351
        %v5519 = vunpack.c.l.b16 %v5352
        %v5520 = vunpack.c.l.b16 %v5353
        %v5521 = vunpack.c.l.b16 %v5354
        %v5522 = vunpack.c.l.b16 %v5355
        %v5523 = vunpack.c.l.b16 %v5356
        %v5524 = vunpack.c.l.b16 %v5357
        %v5525 = vunpack.c.l.b16 %v5358
        %v5526 = vunpack.c.l.b16 %v5359
        %v5527 = vunpack.c.l.b16 %v5360
        %v5528 = vunpack.c.l.b16 %v5361
        %v5529 = vunpack.c.l.b16 %v5362
        %v5530 = vunpack.c.l.b16 %v5363
        %v5531 = vunpack.c.l.b16 %v5364
        %v5532 = vunpack.c.l.b16 %v5365
        %v5533 = vunpack.c.l.b16 %v5366
        %v5534 = vunpack.c.l.b16 %v5367
        %v5535 = vunpack.c.l.b16 %v5368
        %v5536 = vunpack.c.l.b16 %v5369
        %v5537 = vunpack.c.l.b16 %v5370
        %v5538 = vunpack.c.l.b16 %v5371
        %v5539 = vunpack.c.l.b16 %v5372
        %v5540 = vunpack.c.l.b16 %v5373
        %v5541 = vunpack.c.l.b16 %v5374
        %v5542 = vunpack.c.l.b16 %v5375
        %v5543 = vunpack.c.l.b16 %v5376
        %v5544 = vunpack.c.l.b16 %v5377
        %v5545 = vunpack.c.l.b16 %v5378
        %v5546 = vunpack.c.l.b16 %v5379
        %v5547 = vunpack.c.l.b16 %v5380
        %v5548 = vunpack.c.l.b16 %v5381
        %v5549 = vunpack.c.l.b16 %v5382
        %v5550 = vunpack.c.l.b16 %v5383
        %v5551 = vunpack.c.l.b16 %v5384
        %v5552 = vunpack.c.l.b16 %v5385
        %v5553 = vunpack.c.l.b16 %v5386
        %v5554 = vpack.c.b16 %v5475, %v5474
        %v5555 = vpack.c.b16 %v5477, %v5476
        %v5556 = vpack.c.b16 %v5479, %v5478
        %v5557 = vpack.c.b16 %v5481, %v5480
        %v5558 = vpack.c.b16 %v5483, %v5482
        %v5559 = vpack.c.b16 %v5485, %v5484
        %v5560 = vpack.c.b16 %v5487, %v5486
        %v5561 = vpack.c.b16 %v5489, %v5488
        %v5562 = vpack.c.b16 %v5491, %v5490
        %v5563 = vpack.c.b16 %v5493, %v5492
        %v5564 = vpack.c.b16 %v5495, %v5494
        %v5565 = vpack.c.b16 %v5497, %v5496
        %v5566 = vpack.c.b16 %v5499, %v5498
        %v5567 = vpack.c.b16 %v5501, %v5500
        %v5568 = vpack.c.b16 %v5503, %v5502
        %v5569 = vpack.c.b16 %v5505, %v5504
        %v5570 = vpack.c.b16 %v5507, %v5506
        %v5571 = vpack.c.b16 %v5509, %v5508
        %v5572 = vpack.c.b16 %v5511, %v5510
        %v5573 = vpack.c.b16 %v5513, %v5512
        %v5574 = vpack.c.b16 %v5515, %v5514
        %v5575 = vpack.c.b16 %v5517, %v5516
        %v5576 = vpack.c.b16 %v5519, %v5518
        %v5577 = vpack.c.b16 %v5521, %v5520
        %v5578 = vpack.c.b16 %v5523, %v5522
        %v5579 = vpack.c.b16 %v5525, %v5524
        %v5580 = vpack.c.b16 %v5527, %v5526
        %v5581 = vpack.c.b16 %v5529, %v5528
        %v5582 = vpack.c.b16 %v5531, %v5530
        %v5583 = vpack.c.b16 %v5533, %v5532
        %v5584 = vpack.c.b16 %v5535, %v5534
        %v5585 = vpack.c.b16 %v5537, %v5536
        %v5586 = vpack.c.b16 %v5539, %v5538
        %v5587 = vpack.c.b16 %v5541, %v5540
        %v5588 = vpack.c.b16 %v5543, %v5542
        %v5589 = vpack.c.b16 %v5545, %v5544
        %v5590 = vpack.c.b16 %v5547, %v5546
        %v5591 = vpack.c.b16 %v5549, %v5548
        %v5592 = vpack.c.b16 %v5551, %v5550
        %v5593 = vpack.c.b16 %v5553, %v5552
        %5634 = vmatprep.subr.bf16.mxu0 0
        %5635 = vmatpush1.bf16.msra.mxu0 %v5561
        %5636 = vmatprep.subr.bf16.mxu0 0
        %5637 = vmatpush1.bf16.msra.mxu0 %v5560
        %5638 = vmatprep.subr.bf16.mxu0 0
        %5639 = vmatpush1.bf16.msra.mxu0 %v5559
        %5640 = vmatprep.subr.bf16.mxu0 0
        %5641 = vmatpush1.bf16.msra.mxu0 %v5558
        %5642 = vmatprep.subr.bf16.mxu0 0
        %5643 = vmatpush1.bf16.msra.mxu0 %v5557
        %5644 = vmatprep.subr.bf16.mxu0 0
        %5645 = vmatpush1.bf16.msra.mxu0 %v5556
        %5646 = vmatprep.subr.bf16.mxu0 0
        %5647 = vmatpush1.bf16.msra.mxu0 %v5555
        %5648 = vmatprep.subr.bf16.mxu0 0
        %5649 = vmatpush1.bf16.msra.mxu0 %v5554
        %5650 = vmatprep.subr.bf16.mxu0 0
        %5651 = vmatpush2.bf16.msra.mxu0 %v5569
        %5652 = vmatprep.subr.bf16.mxu0 0
        %5653 = vmatpush2.bf16.msra.mxu0 %v5568
        %5654 = vmatprep.subr.bf16.mxu0 0
        %5655 = vmatpush2.bf16.msra.mxu0 %v5567
        %5656 = vmatprep.subr.bf16.mxu0 0
        %5657 = vmatpush2.bf16.msra.mxu0 %v5566
        %5658 = vmatprep.subr.bf16.mxu0 0
        %5659 = vmatpush2.bf16.msra.mxu0 %v5565
        %5660 = vmatprep.subr.bf16.mxu0 0
        %5661 = vmatpush2.bf16.msra.mxu0 %v5564
        %5662 = vmatprep.subr.bf16.mxu0 0
        %5663 = vmatpush2.bf16.msra.mxu0 %v5563
        %5664 = vmatprep.subr.bf16.mxu0 0
        %5665 = vmatpush2.bf16.msra.mxu0 %v5562
        %5666 = vmatprep.mubr.bf16.mxu0 %v5303
        %5667 = vmatmul.mubr.bf16.gmra.mxu0 %v5302
        %v5668 = vpop.f32.mrf.mxu0
        %v5669 = vadd.f32 %v5392, %v5668
        %v5670 = vpop.f32.mrf.mxu0
        %v5671 = vpop.f32.mrf.mxu0
        %v5672 = vpop.f32.mrf.mxu0
        %5673 = vdwg.mxu0
        %5674 = vmatprep.subr.bf16.mxu0 0
        %5675 = vmatpush1.bf16.msra.mxu0 %v5577
        %5676 = vmatprep.subr.bf16.mxu0 0
        %5677 = vmatpush1.bf16.msra.mxu0 %v5576
        %5678 = vmatprep.subr.bf16.mxu0 0
        %5679 = vmatpush1.bf16.msra.mxu0 %v5575
        %5680 = vmatprep.subr.bf16.mxu0 0
        %5681 = vmatpush1.bf16.msra.mxu0 %v5574
        %5682 = vmatprep.subr.bf16.mxu0 0
        %5683 = vmatpush1.bf16.msra.mxu0 %v5573
        %5684 = vmatprep.subr.bf16.mxu0 0
        %5685 = vmatpush1.bf16.msra.mxu0 %v5572
        %5686 = vmatprep.subr.bf16.mxu0 0
        %5687 = vmatpush1.bf16.msra.mxu0 %v5571
        %5688 = vmatprep.subr.bf16.mxu0 0
        %5689 = vmatpush1.bf16.msra.mxu0 %v5570
        %5690 = vmatprep.subr.bf16.mxu0 0
        %5691 = vmatpush2.bf16.msra.mxu0 %v5585
        %5692 = vmatprep.subr.bf16.mxu0 0
        %5693 = vmatpush2.bf16.msra.mxu0 %v5584
        %5694 = vmatprep.subr.bf16.mxu0 0
        %5695 = vmatpush2.bf16.msra.mxu0 %v5583
        %5696 = vmatprep.subr.bf16.mxu0 0
        %5697 = vmatpush2.bf16.msra.mxu0 %v5582
        %5698 = vmatprep.subr.bf16.mxu0 0
        %5699 = vmatpush2.bf16.msra.mxu0 %v5581
        %5700 = vmatprep.subr.bf16.mxu0 0
        %5701 = vmatpush2.bf16.msra.mxu0 %v5580
        %5702 = vmatprep.subr.bf16.mxu0 0
        %5703 = vmatpush2.bf16.msra.mxu0 %v5579
        %5704 = vmatprep.subr.bf16.mxu0 0
        %5705 = vmatpush2.bf16.msra.mxu0 %v5578
        %5706 = vmatprep.mubr.bf16.mxu0 %v5305
        %5707 = vmatmul.mubr.bf16.gmra.mxu0 %v5304
        %v5708 = vpop.f32.mrf.mxu0
        %v5709 = vadd.f32 %v5669, %v5708
        %v5710 = vpop.f32.mrf.mxu0
        %v5711 = vpop.f32.mrf.mxu0
        %v5712 = vpop.f32.mrf.mxu0
        %5713 = vdwg.mxu0
        %5714 = vmatprep.subr.bf16.mxu0 0
        %5715 = vmatpush1.bf16.msra.mxu0 %v5593
        %5716 = vmatprep.subr.bf16.mxu0 0
        %5717 = vmatpush1.bf16.msra.mxu0 %v5592
        %5718 = vmatprep.subr.bf16.mxu0 0
        %5719 = vmatpush1.bf16.msra.mxu0 %v5591
        %5720 = vmatprep.subr.bf16.mxu0 0
        %5721 = vmatpush1.bf16.msra.mxu0 %v5590
        %5722 = vmatprep.subr.bf16.mxu0 0
        %5723 = vmatpush1.bf16.msra.mxu0 %v5589
        %5724 = vmatprep.subr.bf16.mxu0 0
        %5725 = vmatpush1.bf16.msra.mxu0 %v5588
        %5726 = vmatprep.subr.bf16.mxu0 0
        %5727 = vmatpush1.bf16.msra.mxu0 %v5587
        %5728 = vmatprep.subr.bf16.mxu0 0
        %5729 = vmatpush1.bf16.msra.mxu0 %v5586
        %5730 = vmatprep.subr.bf16.mxu0 0
        %5731 = vmatpush2.bf16.msra.mxu0 0
        %5732 = vmatprep.subr.bf16.mxu0 0
        %5733 = vmatpush2.bf16.msra.mxu0 0
        %5734 = vmatprep.subr.bf16.mxu0 0
        %5735 = vmatpush2.bf16.msra.mxu0 0
        %5736 = vmatprep.subr.bf16.mxu0 0
        %5737 = vmatpush2.bf16.msra.mxu0 0
        %5738 = vmatprep.subr.bf16.mxu0 0
        %5739 = vmatpush2.bf16.msra.mxu0 0
        %5740 = vmatprep.subr.bf16.mxu0 0
        %5741 = vmatpush2.bf16.msra.mxu0 0
        %5742 = vmatprep.subr.bf16.mxu0 0
        %5743 = vmatpush2.bf16.msra.mxu0 0
        %5744 = vmatprep.subr.bf16.mxu0 0
        %5745 = vmatpush2.bf16.msra.mxu0 0
        %5746 = vmatprep.mubr.bf16.mxu0 0
        %5747 = vmatmul.mubr.bf16.gmra.mxu0 %v5306
        %v5748 = vpop.f32.mrf.mxu0
        %v5749 = vadd.f32 %v5709, %v5748
        %v5750 = vpop.f32.mrf.mxu0
        %v5751 = vpop.f32.mrf.mxu0
        %v5752 = vpop.f32.mrf.mxu0
        %5753 = vdwg.mxu0
        %v5754 = vmax.f32 %v5749, 0.0
        %v5755 = vpack.c.bf16 %v5754, %v5754
        %v5756 = vld [vmem:[%s7] sm:$0xf]
        %v5757 = vld [vmem:[%s7 + $0x4] sm:$0xf]
        %v5758 = vld [vmem:[%s7 + $0x8] sm:$0xf]
        %v5759 = vld [vmem:[%s7 + $0xc] sm:$0xf]
        %v5760 = vld [vmem:[%s7 + $0x10] sm:$0xf]
        %v5761 = vld [vmem:[%s7 + $0x14] sm:$0xf]
        %v5762 = vld [vmem:[%s7 + $0x18] sm:$0xf]
        %v5763 = vld [vmem:[%s7 + $0x1c] sm:$0xf]
        %v5764 = vld [vmem:[%s7 + $0x20] sm:$0xf]
        %v5765 = vld [vmem:[%s7 + $0x24] sm:$0xf]
        %v5766 = vld [vmem:[%s7 + $0x28] sm:$0xf]
        %v5767 = vld [vmem:[%s7 + $0x2c] sm:$0xf]
        %v5768 = vld [vmem:[%s7 + $0x30] sm:$0xf]
        %v5769 = vld [vmem:[%s7 + $0x34] sm:$0xf]
        %v5770 = vld [vmem:[%s7 + $0x38] sm:$0xf]
        %v5771 = vld [vmem:[%s7 + $0x3c] sm:$0xf]
        %v5772 = vld [vmem:[%s8] sm:$0x1]
        %v5774 = vlaneseq
        %v5775 = vshrl.u32 %v5774, 7
        %v5776 = vsub.s32 0, %v5775
        %v5777 = vrot.slane %v5772, %v5776
        %v5795 = vunpack.c.l.b16 %v5756
        %v5796 = vunpack.c.l.b16 %v5757
        %v5797 = vunpack.c.l.b16 %v5758
        %v5798 = vunpack.c.l.b16 %v5759
        %v5799 = vunpack.c.l.b16 %v5760
        %v5800 = vunpack.c.l.b16 %v5761
        %v5801 = vunpack.c.l.b16 %v5762
        %v5802 = vunpack.c.l.b16 %v5763
        %v5803 = vunpack.c.l.b16 %v5764
        %v5804 = vunpack.c.l.b16 %v5765
        %v5805 = vunpack.c.l.b16 %v5766
        %v5806 = vunpack.c.l.b16 %v5767
        %v5807 = vunpack.c.l.b16 %v5768
        %v5808 = vunpack.c.l.b16 %v5769
        %v5809 = vunpack.c.l.b16 %v5770
        %v5810 = vunpack.c.l.b16 %v5771
        %v5811 = vpack.c.b16 %v5796, %v5795
        %v5812 = vpack.c.b16 %v5798, %v5797
        %v5813 = vpack.c.b16 %v5800, %v5799
        %v5814 = vpack.c.b16 %v5802, %v5801
        %v5815 = vpack.c.b16 %v5804, %v5803
        %v5816 = vpack.c.b16 %v5806, %v5805
        %v5817 = vpack.c.b16 %v5808, %v5807
        %v5818 = vpack.c.b16 %v5810, %v5809
        %5827 = vmatprep.subr.bf16.mxu0 0
        %5828 = vmatpush1.bf16.msra.mxu0 %v5818
        %5829 = vmatprep.subr.bf16.mxu0 0
        %5830 = vmatpush1.bf16.msra.mxu0 %v5817
        %5831 = vmatprep.subr.bf16.mxu0 0
        %5832 = vmatpush1.bf16.msra.mxu0 %v5816
        %5833 = vmatprep.subr.bf16.mxu0 0
        %5834 = vmatpush1.bf16.msra.mxu0 %v5815
        %5835 = vmatprep.subr.bf16.mxu0 0
        %5836 = vmatpush1.bf16.msra.mxu0 %v5814
        %5837 = vmatprep.subr.bf16.mxu0 0
        %5838 = vmatpush1.bf16.msra.mxu0 %v5813
        %5839 = vmatprep.subr.bf16.mxu0 0
        %5840 = vmatpush1.bf16.msra.mxu0 %v5812
        %5841 = vmatprep.subr.bf16.mxu0 0
        %5842 = vmatpush1.bf16.msra.mxu0 %v5811
        %5843 = vmatprep.subr.bf16.mxu0 0
        %5844 = vmatpush2.bf16.msra.mxu0 0
        %5845 = vmatprep.subr.bf16.mxu0 0
        %5846 = vmatpush2.bf16.msra.mxu0 0
        %5847 = vmatprep.subr.bf16.mxu0 0
        %5848 = vmatpush2.bf16.msra.mxu0 0
        %5849 = vmatprep.subr.bf16.mxu0 0
        %5850 = vmatpush2.bf16.msra.mxu0 0
        %5851 = vmatprep.subr.bf16.mxu0 0
        %5852 = vmatpush2.bf16.msra.mxu0 0
        %5853 = vmatprep.subr.bf16.mxu0 0
        %5854 = vmatpush2.bf16.msra.mxu0 0
        %5855 = vmatprep.subr.bf16.mxu0 0
        %5856 = vmatpush2.bf16.msra.mxu0 0
        %5857 = vmatprep.subr.bf16.mxu0 0
        %5858 = vmatpush2.bf16.msra.mxu0 0
        %5859 = vmatprep.mubr.bf16.mxu0 0
        %5860 = vmatmul.mubr.bf16.gmra.mxu0 %v5755
        %v5861 = vpop.f32.mrf.mxu0
        %v5862 = vadd.f32 %v5777, %v5861
        %v5863 = vpop.f32.mrf.mxu0
        %v5864 = vpop.f32.mrf.mxu0
        %v5865 = vpop.f32.mrf.mxu0
        %5866 = vdwg.mxu0
        %v5867 = vmax.f32 %v5862, 0.0
        %v5868 = vpack.c.bf16 %v5867, %v5867
        %v5869 = vld [vmem:[%s9] sm:$0xf]
        %v5870 = vld [vmem:[%s9 + $0x4] sm:$0xf]
        %v5871 = vld [vmem:[%s9 + $0x8] sm:$0xf]
        %v5872 = vld [vmem:[%s9 + $0xc] sm:$0xf]
        %v5873 = vld [vmem:[%s9 + $0x10] sm:$0xf]
        %v5874 = vld [vmem:[%s9 + $0x14] sm:$0xf]
        %v5875 = vld [vmem:[%s9 + $0x18] sm:$0xf]
        %v5876 = vld [vmem:[%s9 + $0x1c] sm:$0xf]
        %v5877 = vld [vmem:[%s9 + $0x20] sm:$0xf]
        %v5878 = vld [vmem:[%s9 + $0x24] sm:$0xf]
        %v5879 = vld [vmem:[%s9 + $0x28] sm:$0xf]
        %v5880 = vld [vmem:[%s9 + $0x2c] sm:$0xf]
        %v5881 = vld [vmem:[%s9 + $0x30] sm:$0xf]
        %v5882 = vld [vmem:[%s9 + $0x34] sm:$0xf]
        %v5883 = vld [vmem:[%s9 + $0x38] sm:$0xf]
        %v5884 = vld [vmem:[%s9 + $0x3c] sm:$0xf]
        %v5885 = vld [vmem:[%s10] sm:$0x1]
        %v5887 = vlaneseq
        %v5888 = vshrl.u32 %v5887, 7
        %v5889 = vsub.s32 0, %v5888
        %v5890 = vrot.slane %v5885, %v5889
        %v5908 = vunpack.c.l.b16 %v5869
        %v5909 = vunpack.c.l.b16 %v5870
        %v5910 = vunpack.c.l.b16 %v5871
        %v5911 = vunpack.c.l.b16 %v5872
        %v5912 = vunpack.c.l.b16 %v5873
        %v5913 = vunpack.c.l.b16 %v5874
        %v5914 = vunpack.c.l.b16 %v5875
        %v5915 = vunpack.c.l.b16 %v5876
        %v5916 = vunpack.c.l.b16 %v5877
        %v5917 = vunpack.c.l.b16 %v5878
        %v5918 = vunpack.c.l.b16 %v5879
        %v5919 = vunpack.c.l.b16 %v5880
        %v5920 = vunpack.c.l.b16 %v5881
        %v5921 = vunpack.c.l.b16 %v5882
        %v5922 = vunpack.c.l.b16 %v5883
        %v5923 = vunpack.c.l.b16 %v5884
        %v5924 = vpack.c.b16 %v5909, %v5908
        %v5925 = vpack.c.b16 %v5911, %v5910
        %v5926 = vpack.c.b16 %v5913, %v5912
        %v5927 = vpack.c.b16 %v5915, %v5914
        %v5928 = vpack.c.b16 %v5917, %v5916
        %v5929 = vpack.c.b16 %v5919, %v5918
        %v5930 = vpack.c.b16 %v5921, %v5920
        %v5931 = vpack.c.b16 %v5923, %v5922
        %5940 = vmatprep.subr.bf16.mxu0 0
        %5941 = vmatpush1.bf16.msra.mxu0 %v5931
        %5942 = vmatprep.subr.bf16.mxu0 0
        %5943 = vmatpush1.bf16.msra.mxu0 %v5930
        %5944 = vmatprep.subr.bf16.mxu0 0
        %5945 = vmatpush1.bf16.msra.mxu0 %v5929
        %5946 = vmatprep.subr.bf16.mxu0 0
        %5947 = vmatpush1.bf16.msra.mxu0 %v5928
        %5948 = vmatprep.subr.bf16.mxu0 0
        %5949 = vmatpush1.bf16.msra.mxu0 %v5927
        %5950 = vmatprep.subr.bf16.mxu0 0
        %5951 = vmatpush1.bf16.msra.mxu0 %v5926
        %5952 = vmatprep.subr.bf16.mxu0 0
        %5953 = vmatpush1.bf16.msra.mxu0 %v5925
        %5954 = vmatprep.subr.bf16.mxu0 0
        %5955 = vmatpush1.bf16.msra.mxu0 %v5924
        %5956 = vmatprep.subr.bf16.mxu0 0
        %5957 = vmatpush2.bf16.msra.mxu0 0
        %5958 = vmatprep.subr.bf16.mxu0 0
        %5959 = vmatpush2.bf16.msra.mxu0 0
        %5960 = vmatprep.subr.bf16.mxu0 0
        %5961 = vmatpush2.bf16.msra.mxu0 0
        %5962 = vmatprep.subr.bf16.mxu0 0
        %5963 = vmatpush2.bf16.msra.mxu0 0
        %5964 = vmatprep.subr.bf16.mxu0 0
        %5965 = vmatpush2.bf16.msra.mxu0 0
        %5966 = vmatprep.subr.bf16.mxu0 0
        %5967 = vmatpush2.bf16.msra.mxu0 0
        %5968 = vmatprep.subr.bf16.mxu0 0
        %5969 = vmatpush2.bf16.msra.mxu0 0
        %5970 = vmatprep.subr.bf16.mxu0 0
        %5971 = vmatpush2.bf16.msra.mxu0 0
        %5972 = vmatprep.mubr.bf16.mxu0 0
        %5973 = vmatmul.mubr.bf16.gmra.mxu0 %v5868
        %v5974 = vpop.f32.mrf.mxu0
        %v5975 = vadd.f32 %v5890, %v5974
        %v5976 = vpop.f32.mrf.mxu0
        %v5977 = vpop.f32.mrf.mxu0
        %v5978 = vpop.f32.mrf.mxu0
        %5979 = vdwg.mxu0
        %5980 = vst [vmem:[%s382] sm:$0xff] %v5975
        %s5981 = sand.u32 %s269, 1
        %s5982 = scalar_lea.sflag [#allocation4], %s5981
        %s5983 = sand.u32 %s269, 1
        %s5984 = smul.addr %s5983, 8
        %s5985 = scalar_lea.vmem [#allocation3], %s5984
        // Predicated region
        $region65: #{cnn_cifar_forward.1} parent=63 // pred_check
          %p5986 = pneg %p279
        $region66: #{cnn_cifar_forward.1} parent=63 // pred_check_branch
          %5988 = sbr.rel (%p5986) target = $region68
        $region67: #{cnn_cifar_forward.1} parent=63 // pred_region
          %s5990 = ssub.s32 128, 128
          %5991 = vsyncadd %s5982, %s5990
          %s5992 = smul.addr %s25, 128
          %s5993 = scalar_lea.hbm %s11, %s5992
          %s5995 = sshll.u32 %s5985, 4
          %s5996 = int_to_ptr.vmem [resolvable:$true] %s5995
          %5998 = dma.vmem_to_hbm [thread:$0]  %s5996, 128, %s5993, %s5982
        $region68: #{cnn_cifar_forward.1} parent=63 // pred_fallthru
          _
      $region64: #{cnn_cifar_forward.1} parent=5 // pred_fallthru
        _
      %p5999 = scmp.le.s32.totalorder 2, %s20
      // Predicated region
      $region69: #{cnn_cifar_forward.1} parent=5 // pred_check
        %p6000 = pneg %p5999
      $region70: #{cnn_cifar_forward.1} parent=5 // pred_check_branch
        %6002 = sbr.rel (%p6000) target = $region72
      $region71: #{cnn_cifar_forward.1} parent=5 // pred_region
        %s6003 = ssub.s32 %s20, 2
        // Predicated region
        $region73: #{cnn_cifar_forward.1} parent=71 // pred_check
          %p6004 = pneg %p285
        $region74: #{cnn_cifar_forward.1} parent=71 // pred_check_branch
          %6006 = sbr.rel (%p6004) target = $region76
        $region75: #{cnn_cifar_forward.1} parent=71 // pred_region
          %s6007 = sand.u32 %s270, 1
          %s6008 = scalar_lea.sflag [#allocation4], %s6007
          %s6009 = sand.u32 %s270, 1
          %s6010 = smul.addr %s6009, 8
          %s6011 = scalar_lea.vmem [#allocation3], %s6010
          %6012 = dma.done %s6008, 128
        $region76: #{cnn_cifar_forward.1} parent=71 // pred_fallthru
          _
      $region72: #{cnn_cifar_forward.1} parent=5 // pred_fallthru
        _
    $region6: #{cnn_cifar_forward.1} parent=1 // loop_footer
      %s24 = sadd.s32 1, %s20
    $region7: #{cnn_cifar_forward.1} parent=1 // loop_footer_branch
      %19 = sbr.rel target = $region3
    $region8: #{cnn_cifar_forward.1} parent=1 // loop_exit
      _
    %6013 = vsyncpa [#allocation4], 1
    %s6014 = scalar_lea.sflag [#allocation4], 1
    %6015 = vsyncpa %s6014, 1

</llo_original>
